<compile_context>
chip_gen: v5e
topology: v5e:2x2
jax: 0.10.0
libtpu: 0.0.40
codegen_flags: <defaults>
</compile_context>

<pallas_src>
import functools

import jax
import jax.numpy as jnp
from jax.experimental import pallas as pl
from jax.experimental.pallas import tpu as pltpu


def _round_up(a, m):
    return (a + m - 1) // m * m


def cvae_kernel(
    x_ref, y_ref, eps_ref,                                   # streamed per batch tile
    w1x_ref, w1y_ref, b1_ref, w2_ref, b2_ref,                # resident weights (encoder)
    w3z_ref, w3y_ref, b3_ref, w4_ref, b4_ref,                # resident weights (decoder)
    recon_ref, mulv_ref,                                     # outputs
    *, latent_dim, num_classes,
):
    tile_b = x_ref.shape[0]

    # in-kernel one-hot from the streamed int32 label column (4 B/row of HBM)
    onehot = (jax.lax.broadcasted_iota(jnp.int32, (tile_b, num_classes), 1)
              == y_ref[...]).astype(jnp.bfloat16)            # (tile_b, num_classes)
    # class-conditional bias contributions (tiny MXU pushes, ride in MXU slack)
    yb1 = jnp.dot(onehot, w1y_ref[...], preferred_element_type=jnp.float32)
    yb3 = jnp.dot(onehot, w3y_ref[...], preferred_element_type=jnp.float32)

    # encode: h1 = relu([x | onehot] @ W1.T + b1)
    h1 = jnp.dot(x_ref[...], w1x_ref[...], preferred_element_type=jnp.float32)
    h1 = jnp.maximum(h1 + b1_ref[...] + yb1, 0.0)

    # fused fc21/fc22 (lane-padded to 128): one dot -> [mu | logvar | zeros]
    ml = jnp.dot(h1.astype(jnp.bfloat16), w2_ref[...],
                 preferred_element_type=jnp.float32) + b2_ref[...]
    mu = ml[:, :latent_dim]
    logvar = ml[:, latent_dim:2 * latent_dim]

    # reparameterize: z = mu + eps * exp(0.5 * logvar)  (f32 elementwise)
    z = mu + eps_ref[...] * jnp.exp(0.5 * logvar)

    # decode: h3 = relu([z | onehot] @ W3.T + b3)
    h3 = jnp.dot(z.astype(jnp.bfloat16), w3z_ref[...],
                 preferred_element_type=jnp.float32)
    h3 = jnp.maximum(h3 + b3_ref[...] + yb3, 0.0)

    logits = jnp.dot(h3.astype(jnp.bfloat16), w4_ref[...],
                     preferred_element_type=jnp.float32) + b4_ref[...]
    # sigmoid via exp (EUP) + approx reciprocal (EUP); store bf16 (halves vst/HBM)
    recon_ref[...] = pl.reciprocal(1.0 + jnp.exp(-logits),
                                   approx=True).astype(recon_ref.dtype)
    mulv_ref[...] = ml


def prepare_params(params, *, input_dim=784, latent_dim=20, num_classes=10):
    """One-time (outside the hot path) transpose/split/fuse/pad + bf16 cast."""
    mulv_lanes = _round_up(2 * latent_dim, 128)              # lane-dense mu|logvar slab

    w1_t = params["w1"].T.astype(jnp.float32)                # (input_dim+nc, 400)
    w3_t = params["w3"].T.astype(jnp.float32)                # (latent_dim+nc, 400)

    w2 = jnp.concatenate([params["w21"].T, params["w22"].T], axis=1)   # (400, 2*lat)
    b2 = jnp.concatenate([params["b21"], params["b22"]])               # (2*lat,)
    pad_c = mulv_lanes - w2.shape[1]
    w2 = jnp.pad(w2, ((0, 0), (0, pad_c)))
    b2 = jnp.pad(b2, (0, pad_c))

    return dict(
        w1x=w1_t[:input_dim].astype(jnp.bfloat16),           # (input_dim, 400) bf16
        w1y=w1_t[input_dim:].astype(jnp.bfloat16),            # (num_classes, 400) bf16
        b1=params["b1"].reshape(1, -1).astype(jnp.float32),
        w2=w2.astype(jnp.bfloat16),                           # (400, 128) bf16
        b2=b2.reshape(1, -1).astype(jnp.float32),             # (1, 128) f32
        w3z=w3_t[:latent_dim].astype(jnp.bfloat16),            # (latent_dim, 400) bf16
        w3y=w3_t[latent_dim:].astype(jnp.bfloat16),            # (num_classes, 400) bf16
        b3=params["b3"].reshape(1, -1).astype(jnp.float32),
        w4=params["w4"].T.astype(jnp.bfloat16),                # (400, input_dim) bf16
        b4=params["b4"].reshape(1, -1).astype(jnp.float32),
    )


@jax.jit
def cvae_forward(x, y, eps, kp):
    """x: (B, input_dim) f32, y: (B,) int32, eps: (B, latent_dim) f32."""
    B = x.shape[0]
    input_dim, hidden = kp["w1x"].shape
    latent = kp["w3z"].shape[0]
    num_classes = kp["w1y"].shape[0]
    mulv_lanes = kp["w2"].shape[1]

    # batch tiling: 256-row cap fills v6e/v7x MXU rows; multiple of 16 for bf16
    # sublane packing.  (For B > 256 this also gives >=2 grid steps for v7x's
    # two TensorCores via dimension_semantics=("parallel",).)
    tile_b = min(_round_up(B, 16), 256)
    B_pad = _round_up(B, tile_b)
    pad = B_pad - B

    def pad_rows(a):
        return jnp.pad(a, ((0, pad), (0, 0))) if pad else a

    x_p = pad_rows(x.astype(jnp.bfloat16))
    eps_p = pad_rows(eps.astype(jnp.float32))
    y_p = pad_rows(y.astype(jnp.int32).reshape(-1, 1))

    grid = (B_pad // tile_b,)
    act = lambda i: (i, 0)       # activation tiles move with the batch grid
    res = lambda i: (0, 0)       # weights stay VMEM-resident across the grid

    weight_keys = ("w1x", "w1y", "b1", "w2", "b2", "w3z", "w3y", "b3", "w4", "b4")
    flops = 2 * B_pad * (input_dim * hidden + hidden * mulv_lanes
                         + latent * hidden + hidden * input_dim
                         + 2 * num_classes * hidden)
    transcendentals = B_pad * (latent + input_dim)
    bytes_accessed = (int(x_p.size) * 2 + int(eps_p.size) * 4 + int(y_p.size) * 4
                      + sum(int(kp[k].size) * int(kp[k].dtype.itemsize)
                            for k in weight_keys)
                      + B_pad * input_dim * 2 + B_pad * mulv_lanes * 4)

    recon_p, mulv_p = pl.pallas_call(
        functools.partial(cvae_kernel, latent_dim=latent, num_classes=num_classes),
        out_shape=(
            jax.ShapeDtypeStruct((B_pad, input_dim), jnp.bfloat16),    # recon (bf16)
            jax.ShapeDtypeStruct((B_pad, mulv_lanes), jnp.float32),    # [mu|logvar|0]
        ),
        grid=grid,
        in_specs=[
            pl.BlockSpec((tile_b, input_dim), act),        # x (bf16)
            pl.BlockSpec((tile_b, 1), act),                # y labels (int32)
            pl.BlockSpec((tile_b, latent), act),           # eps (f32)
            pl.BlockSpec((input_dim, hidden), res),        # w1x
            pl.BlockSpec((num_classes, hidden), res),      # w1y
            pl.BlockSpec((1, hidden), res),                # b1
            pl.BlockSpec((hidden, mulv_lanes), res),       # w2 (fused fc21/fc22, padded)
            pl.BlockSpec((1, mulv_lanes), res),            # b2
            pl.BlockSpec((latent, hidden), res),           # w3z
            pl.BlockSpec((num_classes, hidden), res),      # w3y
            pl.BlockSpec((1, hidden), res),                # b3
            pl.BlockSpec((hidden, input_dim), res),        # w4
            pl.BlockSpec((1, input_dim), res),             # b4
        ],
        out_specs=(
            pl.BlockSpec((tile_b, input_dim), act),
            pl.BlockSpec((tile_b, mulv_lanes), act),
        ),
        compiler_params=pltpu.CompilerParams(
            dimension_semantics=("parallel",)),
        cost_estimate=pl.CostEstimate(flops=flops,
                                      transcendentals=transcendentals,
                                      bytes_accessed=bytes_accessed),
    )(x_p, y_p, eps_p,
      kp["w1x"], kp["w1y"], kp["b1"], kp["w2"], kp["b2"],
      kp["w3z"], kp["w3y"], kp["b3"], kp["w4"], kp["b4"])

    recon = recon_p[:B].astype(jnp.float32)
    mulv = mulv_p[:B]
    return recon, mulv[:, :latent], mulv[:, latent:2 * latent]


def init_params(key, input_dim=784, latent_dim=20, num_classes=10):
    """Deterministic torch.nn.Linear-style init (uniform +/- 1/sqrt(fan_in))."""
    def linear(key, out_f, in_f):
        kw, kb = jax.random.split(key)
        bound = 1.0 / jnp.sqrt(jnp.float32(in_f))
        w = jax.random.uniform(kw, (out_f, in_f), jnp.float32, -bound, bound)
        b = jax.random.uniform(kb, (out_f,), jnp.float32, -bound, bound)
        return w, b

    keys = jax.random.split(key, 5)
    w1, b1 = linear(keys[0], 400, input_dim + num_classes)
    w21, b21 = linear(keys[1], latent_dim, 400)
    w22, b22 = linear(keys[2], latent_dim, 400)
    w3, b3 = linear(keys[3], 400, latent_dim + num_classes)
    w4, b4 = linear(keys[4], input_dim, 400)
    return dict(w1=w1, b1=b1, w21=w21, b21=b21, w22=w22, b22=b22,
                w3=w3, b3=b3, w4=w4, b4=b4)


def cvae_reference(x, y, eps, params, num_classes=10):
    """Pure-JAX f32 reference mirroring the PyTorch forward (same eps)."""
    oh = jax.nn.one_hot(y, num_classes, dtype=jnp.float32)
    xin = jnp.concatenate([x, oh], axis=1)
    h1 = jax.nn.relu(xin @ params["w1"].T + params["b1"])
    mu = h1 @ params["w21"].T + params["b21"]
    logvar = h1 @ params["w22"].T + params["b22"]
    z = mu + eps * jnp.exp(0.5 * logvar)
    zin = jnp.concatenate([z, oh], axis=1)
    h3 = jax.nn.relu(zin @ params["w3"].T + params["b3"])
    recon = jax.nn.sigmoid(h3 @ params["w4"].T + params["b4"])
    return recon, mu, logvar


if __name__ == "__main__":
    input_dim, latent_dim, num_classes = 784, 20, 10
    B = 8

    key = jax.random.PRNGKey(0)
    k_params, k_x, k_y, k_eps = jax.random.split(key, 4)

    params = init_params(k_params, input_dim, latent_dim, num_classes)
    kernel_params = prepare_params(params, input_dim=input_dim,
                                   latent_dim=latent_dim, num_classes=num_classes)

    x = jax.random.uniform(k_x, (B, input_dim), jnp.float32)       # "image" batch
    y = jax.random.randint(k_y, (B,), 0, num_classes, jnp.int32)   # class labels
    # TODO(synk): torch.randn_like RNG happens outside the kernel; eps is passed in.
    eps = jax.random.normal(k_eps, (B, latent_dim), jnp.float32)   # reparam noise

    recon, mu, logvar = cvae_forward(x, y, eps, kernel_params)
    jax.block_until_ready((recon, mu, logvar))

    # sanity check vs pure-JAX f32 reference (kernel uses bf16 matmul operands
    # and a bf16 recon store, so tolerance is loosened accordingly)
    r_ref, mu_ref, lv_ref = cvae_reference(x, y, eps, params, num_classes)
    assert jnp.allclose(recon, r_ref, atol=2e-2, rtol=2e-2)
    assert jnp.allclose(mu, mu_ref, atol=2e-2, rtol=2e-2)
    assert jnp.allclose(logvar, lv_ref, atol=2e-2, rtol=2e-2)

    print("KERNEL_OK")
</pallas_src>

<mosaic_0001>
module attributes {stable_mosaic.version = 11 : i64} {
  func.func @cvae_kernel(%arg0: i32, %arg1: memref<16x784xbf16, #tpu.memory_space<vmem>>, %arg2: memref<16x1xi32, #tpu.memory_space<vmem>>, %arg3: memref<16x20xf32, #tpu.memory_space<vmem>>, %arg4: memref<784x400xbf16, #tpu.memory_space<vmem>>, %arg5: memref<10x400xbf16, #tpu.memory_space<vmem>>, %arg6: memref<1x400xf32, #tpu.memory_space<vmem>>, %arg7: memref<400x128xbf16, #tpu.memory_space<vmem>>, %arg8: memref<1x128xf32, #tpu.memory_space<vmem>>, %arg9: memref<20x400xbf16, #tpu.memory_space<vmem>>, %arg10: memref<10x400xbf16, #tpu.memory_space<vmem>>, %arg11: memref<1x400xf32, #tpu.memory_space<vmem>>, %arg12: memref<400x784xbf16, #tpu.memory_space<vmem>>, %arg13: memref<1x784xf32, #tpu.memory_space<vmem>>, %arg14: memref<16x784xbf16, #tpu.memory_space<vmem>>, %arg15: memref<16x128xf32, #tpu.memory_space<vmem>>) attributes {dimension_semantics = [#tpu.dimension_semantics<parallel>], iteration_bounds = array<i64: 1>, scalar_prefetch = 0 : i64, scratch_operands = 0 : i64, tpu.core_type = #tpu.core_type<tc>, window_params = [{transform_indices = @transform_0, window_bounds = array<i64: 16, 784>}, {transform_indices = @transform_1, window_bounds = array<i64: 16, 1>}, {transform_indices = @transform_2, window_bounds = array<i64: 16, 20>}, {pipeline_mode = #tpu.pipeline_mode<synchronous>, transform_indices = @transform_3, window_bounds = array<i64: 784, 400>}, {pipeline_mode = #tpu.pipeline_mode<synchronous>, transform_indices = @transform_4, window_bounds = array<i64: 10, 400>}, {pipeline_mode = #tpu.pipeline_mode<synchronous>, transform_indices = @transform_5, window_bounds = array<i64: 1, 400>}, {pipeline_mode = #tpu.pipeline_mode<synchronous>, transform_indices = @transform_6, window_bounds = array<i64: 400, 128>}, {pipeline_mode = #tpu.pipeline_mode<synchronous>, transform_indices = @transform_7, window_bounds = array<i64: 1, 128>}, {pipeline_mode = #tpu.pipeline_mode<synchronous>, transform_indices = @transform_8, window_bounds = array<i64: 20, 400>}, {pipeline_mode = #tpu.pipeline_mode<synchronous>, transform_indices = @transform_9, window_bounds = array<i64: 10, 400>}, {pipeline_mode = #tpu.pipeline_mode<synchronous>, transform_indices = @transform_10, window_bounds = array<i64: 1, 400>}, {pipeline_mode = #tpu.pipeline_mode<synchronous>, transform_indices = @transform_11, window_bounds = array<i64: 400, 784>}, {pipeline_mode = #tpu.pipeline_mode<synchronous>, transform_indices = @transform_12, window_bounds = array<i64: 1, 784>}, {transform_indices = @transform_13, window_bounds = array<i64: 16, 784>}, {transform_indices = @transform_14, window_bounds = array<i64: 16, 128>}]} {
    %0 = tpu.iota {dimensions = array<i32: 1>} : vector<16x10xi32>
    %c0 = arith.constant 0 : index
    %c0_0 = arith.constant 0 : index
    %1 = vector.load %arg2[%c0, %c0_0] : memref<16x1xi32, #tpu.memory_space<vmem>>, vector<16x1xi32>
    %2 = vector.broadcast %1 : vector<16x1xi32> to vector<16x10xi32>
    %3 = arith.cmpi eq, %0, %2 : vector<16x10xi32>
    %4 = arith.extui %3 : vector<16x10xi1> to vector<16x10xi32>
    %5 = arith.sitofp %4 : vector<16x10xi32> to vector<16x10xf32>
    %6 = arith.truncf %5 : vector<16x10xf32> to vector<16x10xbf16>
    %c0_1 = arith.constant 0 : index
    %c0_2 = arith.constant 0 : index
    %7 = vector.load %arg5[%c0_1, %c0_2] : memref<10x400xbf16, #tpu.memory_space<vmem>>, vector<10x400xbf16>
    %cst = arith.constant dense<0.000000e+00> : vector<16x400xf32>
    %8 = tpu.matmul %6, %7, %cst {dimension_numbers = #tpu.dot_dimension_numbers<[1], [0], [0], [1], [0, 0, 1, 1], [], []>} : vector<16x10xbf16>, vector<10x400xbf16>, vector<16x400xf32> -> vector<16x400xf32>
    %c0_3 = arith.constant 0 : index
    %c0_4 = arith.constant 0 : index
    %9 = vector.load %arg10[%c0_3, %c0_4] : memref<10x400xbf16, #tpu.memory_space<vmem>>, vector<10x400xbf16>
    %cst_5 = arith.constant dense<0.000000e+00> : vector<16x400xf32>
    %10 = tpu.matmul %6, %9, %cst_5 {dimension_numbers = #tpu.dot_dimension_numbers<[1], [0], [0], [1], [0, 0, 1, 1], [], []>} : vector<16x10xbf16>, vector<10x400xbf16>, vector<16x400xf32> -> vector<16x400xf32>
    %c0_6 = arith.constant 0 : index
    %c0_7 = arith.constant 0 : index
    %11 = vector.load %arg1[%c0_6, %c0_7] : memref<16x784xbf16, #tpu.memory_space<vmem>>, vector<16x784xbf16>
    %c0_8 = arith.constant 0 : index
    %c0_9 = arith.constant 0 : index
    %12 = vector.load %arg4[%c0_8, %c0_9] : memref<784x400xbf16, #tpu.memory_space<vmem>>, vector<784x400xbf16>
    %cst_10 = arith.constant dense<0.000000e+00> : vector<16x400xf32>
    %13 = tpu.matmul %11, %12, %cst_10 {dimension_numbers = #tpu.dot_dimension_numbers<[1], [0], [0], [1], [0, 0, 1, 1], [], []>} : vector<16x784xbf16>, vector<784x400xbf16>, vector<16x400xf32> -> vector<16x400xf32>
    %c0_11 = arith.constant 0 : index
    %c0_12 = arith.constant 0 : index
    %14 = vector.load %arg6[%c0_11, %c0_12] : memref<1x400xf32, #tpu.memory_space<vmem>>, vector<1x400xf32>
    %15 = vector.broadcast %14 : vector<1x400xf32> to vector<16x400xf32>
    %16 = arith.addf %13, %15 : vector<16x400xf32>
    %17 = arith.addf %16, %8 : vector<16x400xf32>
    %cst_13 = arith.constant 0.000000e+00 : f32
    %18 = vector.broadcast %cst_13 : f32 to vector<16x400xf32>
    %19 = arith.maximumf %17, %18 : vector<16x400xf32>
    %20 = arith.truncf %19 : vector<16x400xf32> to vector<16x400xbf16>
    %c0_14 = arith.constant 0 : index
    %c0_15 = arith.constant 0 : index
    %21 = vector.load %arg7[%c0_14, %c0_15] : memref<400x128xbf16, #tpu.memory_space<vmem>>, vector<400x128xbf16>
    %cst_16 = arith.constant dense<0.000000e+00> : vector<16x128xf32>
    %22 = tpu.matmul %20, %21, %cst_16 {dimension_numbers = #tpu.dot_dimension_numbers<[1], [0], [0], [1], [0, 0, 1, 1], [], []>} : vector<16x400xbf16>, vector<400x128xbf16>, vector<16x128xf32> -> vector<16x128xf32>
    %c0_17 = arith.constant 0 : index
    %c0_18 = arith.constant 0 : index
    %23 = vector.load %arg8[%c0_17, %c0_18] : memref<1x128xf32, #tpu.memory_space<vmem>>, vector<1x128xf32>
    %24 = vector.broadcast %23 : vector<1x128xf32> to vector<16x128xf32>
    %25 = arith.addf %22, %24 : vector<16x128xf32>
    %26 = vector.extract_strided_slice %25 {offsets = [0, 0], sizes = [16, 20], strides = [1, 1]} : vector<16x128xf32> to vector<16x20xf32>
    %27 = vector.extract_strided_slice %25 {offsets = [0, 20], sizes = [16, 20], strides = [1, 1]} : vector<16x128xf32> to vector<16x20xf32>
    %c0_19 = arith.constant 0 : index
    %c0_20 = arith.constant 0 : index
    %28 = vector.load %arg3[%c0_19, %c0_20] : memref<16x20xf32, #tpu.memory_space<vmem>>, vector<16x20xf32>
    %cst_21 = arith.constant 5.000000e-01 : f32
    %29 = vector.broadcast %cst_21 : f32 to vector<16x20xf32>
    %30 = arith.mulf %29, %27 : vector<16x20xf32>
    %31 = math.exp %30 : vector<16x20xf32>
    %32 = arith.mulf %28, %31 : vector<16x20xf32>
    %33 = arith.addf %26, %32 : vector<16x20xf32>
    %34 = arith.truncf %33 : vector<16x20xf32> to vector<16x20xbf16>
    %c0_22 = arith.constant 0 : index
    %c0_23 = arith.constant 0 : index
    %35 = vector.load %arg9[%c0_22, %c0_23] : memref<20x400xbf16, #tpu.memory_space<vmem>>, vector<20x400xbf16>
    %cst_24 = arith.constant dense<0.000000e+00> : vector<16x400xf32>
    %36 = tpu.matmul %34, %35, %cst_24 {dimension_numbers = #tpu.dot_dimension_numbers<[1], [0], [0], [1], [0, 0, 1, 1], [], []>} : vector<16x20xbf16>, vector<20x400xbf16>, vector<16x400xf32> -> vector<16x400xf32>
    %c0_25 = arith.constant 0 : index
    %c0_26 = arith.constant 0 : index
    %37 = vector.load %arg11[%c0_25, %c0_26] : memref<1x400xf32, #tpu.memory_space<vmem>>, vector<1x400xf32>
    %38 = vector.broadcast %37 : vector<1x400xf32> to vector<16x400xf32>
    %39 = arith.addf %36, %38 : vector<16x400xf32>
    %40 = arith.addf %39, %10 : vector<16x400xf32>
    %cst_27 = arith.constant 0.000000e+00 : f32
    %41 = vector.broadcast %cst_27 : f32 to vector<16x400xf32>
    %42 = arith.maximumf %40, %41 : vector<16x400xf32>
    %43 = arith.truncf %42 : vector<16x400xf32> to vector<16x400xbf16>
    %c0_28 = arith.constant 0 : index
    %c0_29 = arith.constant 0 : index
    %44 = vector.load %arg12[%c0_28, %c0_29] : memref<400x784xbf16, #tpu.memory_space<vmem>>, vector<400x784xbf16>
    %cst_30 = arith.constant dense<0.000000e+00> : vector<16x784xf32>
    %45 = tpu.matmul %43, %44, %cst_30 {dimension_numbers = #tpu.dot_dimension_numbers<[1], [0], [0], [1], [0, 0, 1, 1], [], []>} : vector<16x400xbf16>, vector<400x784xbf16>, vector<16x784xf32> -> vector<16x784xf32>
    %c0_31 = arith.constant 0 : index
    %c0_32 = arith.constant 0 : index
    %46 = vector.load %arg13[%c0_31, %c0_32] : memref<1x784xf32, #tpu.memory_space<vmem>>, vector<1x784xf32>
    %47 = vector.broadcast %46 : vector<1x784xf32> to vector<16x784xf32>
    %48 = arith.addf %45, %47 : vector<16x784xf32>
    %cst_33 = arith.constant 0.000000e+00 : f32
    %49 = vector.broadcast %cst_33 : f32 to vector<16x784xf32>
    %50 = arith.subf %49, %48 : vector<16x784xf32>
    %51 = math.exp %50 : vector<16x784xf32>
    %cst_34 = arith.constant 1.000000e+00 : f32
    %52 = vector.broadcast %cst_34 : f32 to vector<16x784xf32>
    %53 = arith.addf %52, %51 : vector<16x784xf32>
    %54 = tpu.reciprocal %53 {approx = true} : vector<16x784xf32> -> vector<16x784xf32>
    %55 = arith.truncf %54 : vector<16x784xf32> to vector<16x784xbf16>
    %c0_35 = arith.constant 0 : index
    %c0_36 = arith.constant 0 : index
    %56 = vector.load %arg14[%c0_35, %c0_36] : memref<16x784xbf16, #tpu.memory_space<vmem>>, vector<16x784xbf16>
    tpu.vector_store %arg14[%c0_35, %c0_36], %55 {strides = array<i32>} : memref<16x784xbf16, #tpu.memory_space<vmem>>, vector<16x784xbf16>,
    %c0_37 = arith.constant 0 : index
    %c0_38 = arith.constant 0 : index
    %57 = vector.load %arg15[%c0_37, %c0_38] : memref<16x128xf32, #tpu.memory_space<vmem>>, vector<16x128xf32>
    tpu.vector_store %arg15[%c0_37, %c0_38], %25 {strides = array<i32>} : memref<16x128xf32, #tpu.memory_space<vmem>>, vector<16x128xf32>,
    return
  }
  func.func @transform_0(%arg0: i32) -> (i32, i32) {
    %c0_i32 = arith.constant 0 : i32
    %c0_i32_0 = arith.constant 0 : i32
    return %arg0, %c0_i32 : i32, i32
  }
  func.func @transform_1(%arg0: i32) -> (i32, i32) {
    %c0_i32 = arith.constant 0 : i32
    %c0_i32_0 = arith.constant 0 : i32
    return %arg0, %c0_i32 : i32, i32
  }
  func.func @transform_2(%arg0: i32) -> (i32, i32) {
    %c0_i32 = arith.constant 0 : i32
    %c0_i32_0 = arith.constant 0 : i32
    return %arg0, %c0_i32 : i32, i32
  }
  func.func @transform_3(%arg0: i32) -> (i32, i32) {
    %c0_i32 = arith.constant 0 : i32
    %c0_i32_0 = arith.constant 0 : i32
    %c0_i32_1 = arith.constant 0 : i32
    return %c0_i32, %c0_i32_0 : i32, i32
  }
  func.func @transform_4(%arg0: i32) -> (i32, i32) {
    %c0_i32 = arith.constant 0 : i32
    %c0_i32_0 = arith.constant 0 : i32
    %c0_i32_1 = arith.constant 0 : i32
    return %c0_i32, %c0_i32_0 : i32, i32
  }
  func.func @transform_5(%arg0: i32) -> (i32, i32) {
    %c0_i32 = arith.constant 0 : i32
    %c0_i32_0 = arith.constant 0 : i32
    %c0_i32_1 = arith.constant 0 : i32
    return %c0_i32, %c0_i32_0 : i32, i32
  }
  func.func @transform_6(%arg0: i32) -> (i32, i32) {
    %c0_i32 = arith.constant 0 : i32
    %c0_i32_0 = arith.constant 0 : i32
    %c0_i32_1 = arith.constant 0 : i32
    return %c0_i32, %c0_i32_0 : i32, i32
  }
  func.func @transform_7(%arg0: i32) -> (i32, i32) {
    %c0_i32 = arith.constant 0 : i32
    %c0_i32_0 = arith.constant 0 : i32
    %c0_i32_1 = arith.constant 0 : i32
    return %c0_i32, %c0_i32_0 : i32, i32
  }
  func.func @transform_8(%arg0: i32) -> (i32, i32) {
    %c0_i32 = arith.constant 0 : i32
    %c0_i32_0 = arith.constant 0 : i32
    %c0_i32_1 = arith.constant 0 : i32
    return %c0_i32, %c0_i32_0 : i32, i32
  }
  func.func @transform_9(%arg0: i32) -> (i32, i32) {
    %c0_i32 = arith.constant 0 : i32
    %c0_i32_0 = arith.constant 0 : i32
    %c0_i32_1 = arith.constant 0 : i32
    return %c0_i32, %c0_i32_0 : i32, i32
  }
  func.func @transform_10(%arg0: i32) -> (i32, i32) {
    %c0_i32 = arith.constant 0 : i32
    %c0_i32_0 = arith.constant 0 : i32
    %c0_i32_1 = arith.constant 0 : i32
    return %c0_i32, %c0_i32_0 : i32, i32
  }
  func.func @transform_11(%arg0: i32) -> (i32, i32) {
    %c0_i32 = arith.constant 0 : i32
    %c0_i32_0 = arith.constant 0 : i32
    %c0_i32_1 = arith.constant 0 : i32
    return %c0_i32, %c0_i32_0 : i32, i32
  }
  func.func @transform_12(%arg0: i32) -> (i32, i32) {
    %c0_i32 = arith.constant 0 : i32
    %c0_i32_0 = arith.constant 0 : i32
    %c0_i32_1 = arith.constant 0 : i32
    return %c0_i32, %c0_i32_0 : i32, i32
  }
  func.func @transform_13(%arg0: i32) -> (i32, i32) {
    %c0_i32 = arith.constant 0 : i32
    %c0_i32_0 = arith.constant 0 : i32
    return %arg0, %c0_i32 : i32, i32
  }
  func.func @transform_14(%arg0: i32) -> (i32, i32) {
    %c0_i32 = arith.constant 0 : i32
    %c0_i32_0 = arith.constant 0 : i32
    return %arg0, %c0_i32 : i32, i32
  }
}

</mosaic_0001>

<llo_original>
// kernel: cvae_forward.1
$region0: #{cvae_forward.1}
  #allocation0 [shape = 'u32[]', space=smem, size = 0x4, offset = 0x4, fixed_abs, tag = 'smem constant byte address 0x4 - core index']
  #allocation1 [shape = 'u32[72,128]{1,0:T(1,128)}', space=vmem, size = 0x9000, scoped, tag = 'internal scratch']
  %s0 = inlined_call_operand.vmem [shape: bf16[16,784], index: 0, kind: input, shape index: {}]
  %s1 = inlined_call_operand.vmem [shape: s32[16,1], index: 1, kind: input, shape index: {}]
  %s2 = inlined_call_operand.vmem [shape: f32[16,20], index: 2, kind: input, shape index: {}]
  %s3 = inlined_call_operand.vmem [shape: bf16[784,400], index: 3, kind: input, shape index: {}]
  %s4 = inlined_call_operand.vmem [shape: bf16[10,400], index: 4, kind: input, shape index: {}]
  %s5 = inlined_call_operand.vmem [shape: f32[1,400], index: 5, kind: input, shape index: {}]
  %s6 = inlined_call_operand.vmem [shape: bf16[400,128], index: 6, kind: input, shape index: {}]
  %s7 = inlined_call_operand.vmem [shape: f32[1,128], index: 7, kind: input, shape index: {}]
  %s8 = inlined_call_operand.vmem [shape: bf16[20,400], index: 8, kind: input, shape index: {}]
  %s9 = inlined_call_operand.vmem [shape: bf16[10,400], index: 9, kind: input, shape index: {}]
  %s10 = inlined_call_operand.vmem [shape: f32[1,400], index: 10, kind: input, shape index: {}]
  %s11 = inlined_call_operand.vmem [shape: bf16[400,784], index: 11, kind: input, shape index: {}]
  %s12 = inlined_call_operand.vmem [shape: f32[1,784], index: 12, kind: input, shape index: {}]
  %s13 = inlined_call_operand.vmem [shape: bf16[16,784], index: 13, kind: output, shape index: {0}]
  %s14 = inlined_call_operand.vmem [shape: f32[16,128], index: 14, kind: output, shape index: {1}]
  %15 = xla_tuple %s13, %s14
  %s16 = sld [smem:[#allocation0]]
  $region70: #{cvae_forward.1} parent=0
    _
  %s18 = ssub.s32 1, %s16
  %s19 = scalar_select 0, %s18, %s16
  // Predicated region
  $region2: #{cvae_forward.1} parent=0 // pred_check
    _
  $region3: #{cvae_forward.1} parent=0 // pred_check_branch
    %21 = sbr.rel (0) target = $region5
  $region4: #{cvae_forward.1} parent=0 // pred_region
    _
  $region5: #{cvae_forward.1} parent=0 // pred_fallthru
    _
  // Predicated region
  $region6: #{cvae_forward.1} parent=0 // pred_check
    _
  $region7: #{cvae_forward.1} parent=0 // pred_check_branch
    %23 = sbr.rel (0) target = $region9
  $region8: #{cvae_forward.1} parent=0 // pred_region
    _
  $region9: #{cvae_forward.1} parent=0 // pred_fallthru
    _
  // Predicated region
  $region10: #{cvae_forward.1} parent=0 // pred_check
    _
  $region11: #{cvae_forward.1} parent=0 // pred_check_branch
    %25 = sbr.rel (0) target = $region13
  $region12: #{cvae_forward.1} parent=0 // pred_region
    _
  $region13: #{cvae_forward.1} parent=0 // pred_fallthru
    _
  // Predicated region
  $region14: #{cvae_forward.1} parent=0 // pred_check
    _
  $region15: #{cvae_forward.1} parent=0 // pred_check_branch
    %27 = sbr.rel (0) target = $region17
  $region16: #{cvae_forward.1} parent=0 // pred_region
    _
  $region17: #{cvae_forward.1} parent=0 // pred_fallthru
    _
  // Predicated region
  $region18: #{cvae_forward.1} parent=0 // pred_check
    _
  $region19: #{cvae_forward.1} parent=0 // pred_check_branch
    %29 = sbr.rel (0) target = $region21
  $region20: #{cvae_forward.1} parent=0 // pred_region
    _
  $region21: #{cvae_forward.1} parent=0 // pred_fallthru
    _
  // Predicated region
  $region22: #{cvae_forward.1} parent=0 // pred_check
    _
  $region23: #{cvae_forward.1} parent=0 // pred_check_branch
    %31 = sbr.rel (0) target = $region25
  $region24: #{cvae_forward.1} parent=0 // pred_region
    _
  $region25: #{cvae_forward.1} parent=0 // pred_fallthru
    _
  // Predicated region
  $region26: #{cvae_forward.1} parent=0 // pred_check
    _
  $region27: #{cvae_forward.1} parent=0 // pred_check_branch
    %33 = sbr.rel (0) target = $region29
  $region28: #{cvae_forward.1} parent=0 // pred_region
    _
  $region29: #{cvae_forward.1} parent=0 // pred_fallthru
    _
  // Predicated region
  $region30: #{cvae_forward.1} parent=0 // pred_check
    _
  $region31: #{cvae_forward.1} parent=0 // pred_check_branch
    %35 = sbr.rel (0) target = $region33
  $region32: #{cvae_forward.1} parent=0 // pred_region
    _
  $region33: #{cvae_forward.1} parent=0 // pred_fallthru
    _
  // Predicated region
  $region34: #{cvae_forward.1} parent=0 // pred_check
    _
  $region35: #{cvae_forward.1} parent=0 // pred_check_branch
    %37 = sbr.rel (0) target = $region37
  $region36: #{cvae_forward.1} parent=0 // pred_region
    _
  $region37: #{cvae_forward.1} parent=0 // pred_fallthru
    _
  // Predicated region
  $region38: #{cvae_forward.1} parent=0 // pred_check
    _
  $region39: #{cvae_forward.1} parent=0 // pred_check_branch
    %39 = sbr.rel (0) target = $region41
  $region40: #{cvae_forward.1} parent=0 // pred_region
    _
  $region41: #{cvae_forward.1} parent=0 // pred_fallthru
    _
  // Predicated region
  $region42: #{cvae_forward.1} parent=0 // pred_check
    _
  $region43: #{cvae_forward.1} parent=0 // pred_check_branch
    %41 = sbr.rel (0) target = $region45
  $region44: #{cvae_forward.1} parent=0 // pred_region
    _
  $region45: #{cvae_forward.1} parent=0 // pred_fallthru
    _
  // Predicated region
  $region46: #{cvae_forward.1} parent=0 // pred_check
    _
  $region47: #{cvae_forward.1} parent=0 // pred_check_branch
    %43 = sbr.rel (0) target = $region49
  $region48: #{cvae_forward.1} parent=0 // pred_region
    _
  $region49: #{cvae_forward.1} parent=0 // pred_fallthru
    _
  // Predicated region
  $region50: #{cvae_forward.1} parent=0 // pred_check
    _
  $region51: #{cvae_forward.1} parent=0 // pred_check_branch
    %45 = sbr.rel (0) target = $region53
  $region52: #{cvae_forward.1} parent=0 // pred_region
    _
  $region53: #{cvae_forward.1} parent=0 // pred_fallthru
    _
  %v47 = vlaneseq
  %v48 = vand.u32 %v47, 127
  %v49 = vld [vmem:[%s1] sm:$0xff]
  %v50 = vld [vmem:[%s1 + $0x8] sm:$0xff]
  %51 = vset.pattern.permute.xlu0 0
  %52 = vperm.xlu0 %51, %v49
  %v53 = vpop.permute.xlu0 %52
  %54 = vset.pattern.permute.xlu0 0
  %55 = vperm.xlu0 %54, %v50
  %v56 = vpop.permute.xlu0 %55
  %vm57 = vcmp.eq.s32.totalorder %v48, %v53
  %vm58 = vcmp.eq.s32.totalorder %v48, %v56
  %v59 = vsel %vm57, 1, 0
  %v60 = vsel %vm58, 1, 0
  %v61 = vcvt.s32.f32 %v59
  %v62 = vcvt.s32.f32 %v60
  %v63 = vpack.c.bf16 %v62, %v61
  %v64 = vld [vmem:[%s4] sm:$0xff]
  %v65 = vld [vmem:[%s4 + $0x8] sm:$0xff]
  %v66 = vld [vmem:[%s4 + $0x10] sm:$0x11]
  %v67 = vld [vmem:[%s4 + $0x18] sm:$0x11]
  %v72 = vunpack.c.l.b16 %v64
  %v73 = vunpack.c.h.b16 %v64
  %v74 = vunpack.c.l.b16 %v65
  %v75 = vunpack.c.h.b16 %v65
  %v76 = vunpack.c.l.b16 %v66
  %v77 = vunpack.c.h.b16 %v66
  %v78 = vunpack.c.l.b16 %v67
  %v79 = vunpack.c.h.b16 %v67
  %v80 = vpack.c.b16 %v76, %v72
  %v81 = vpack.c.b16 %v77, %v73
  %v82 = vpack.c.b16 %v78, %v74
  %v83 = vpack.c.b16 %v79, %v75
  %vm84 = vcmask 80896
  %v86 = vsel %vm84, %v63, 0
  %vm88 = vcmask 1044480
  %v90 = vsel %vm88, %v80, 0
  %v93 = vsel %vm88, %v81, 0
  %v96 = vsel %vm88, %v82, 0
  %v99 = vsel %vm88, %v83, 0
  %101 = vmatpush.bf16.msra.mxu0 0
  %102 = vmatpush.bf16.msra.mxu0 0
  %103 = vmatpush.bf16.msra.mxu0 0
  %104 = vmatpush.bf16.msra.mxu0 0
  %105 = vmatpush.bf16.msra.mxu0 0
  %106 = vmatpush.bf16.msra.mxu0 0
  %107 = vmatpush.bf16.msra.mxu0 0
  %108 = vmatpush.bf16.msra.mxu0 %v90
  %109 = vmatmul.bf16.gmra.mxu0 %v86
  %v110 = vpop.f32.mrf.mxu0
  %v111 = vadd.f32 0.0, %v110
  %v112 = vpop.f32.mrf.mxu0
  %v113 = vadd.f32 0.0, %v112
  %114 = vdwg.mxu0
  %115 = vmatpush.bf16.msra.mxu0 0
  %116 = vmatpush.bf16.msra.mxu0 0
  %117 = vmatpush.bf16.msra.mxu0 0
  %118 = vmatpush.bf16.msra.mxu0 0
  %119 = vmatpush.bf16.msra.mxu0 0
  %120 = vmatpush.bf16.msra.mxu0 0
  %121 = vmatpush.bf16.msra.mxu0 0
  %122 = vmatpush.bf16.msra.mxu0 %v93
  %123 = vmatmul.bf16.gmra.mxu0 %v86
  %v124 = vpop.f32.mrf.mxu0
  %v125 = vadd.f32 0.0, %v124
  %v126 = vpop.f32.mrf.mxu0
  %v127 = vadd.f32 0.0, %v126
  %128 = vdwg.mxu0
  %129 = vmatpush.bf16.msra.mxu0 0
  %130 = vmatpush.bf16.msra.mxu0 0
  %131 = vmatpush.bf16.msra.mxu0 0
  %132 = vmatpush.bf16.msra.mxu0 0
  %133 = vmatpush.bf16.msra.mxu0 0
  %134 = vmatpush.bf16.msra.mxu0 0
  %135 = vmatpush.bf16.msra.mxu0 0
  %136 = vmatpush.bf16.msra.mxu0 %v96
  %137 = vmatmul.bf16.gmra.mxu0 %v86
  %v138 = vpop.f32.mrf.mxu0
  %v139 = vadd.f32 0.0, %v138
  %v140 = vpop.f32.mrf.mxu0
  %v141 = vadd.f32 0.0, %v140
  %142 = vdwg.mxu0
  %143 = vmatpush.bf16.msra.mxu0 0
  %144 = vmatpush.bf16.msra.mxu0 0
  %145 = vmatpush.bf16.msra.mxu0 0
  %146 = vmatpush.bf16.msra.mxu0 0
  %147 = vmatpush.bf16.msra.mxu0 0
  %148 = vmatpush.bf16.msra.mxu0 0
  %149 = vmatpush.bf16.msra.mxu0 0
  %150 = vmatpush.bf16.msra.mxu0 %v99
  %151 = vmatmul.bf16.gmra.mxu0 %v86
  %v152 = vpop.f32.mrf.mxu0
  %v153 = vadd.f32 0.0, %v152
  %v154 = vpop.f32.mrf.mxu0
  %v155 = vadd.f32 0.0, %v154
  %156 = vdwg.mxu0
  %v157 = vld [vmem:[%s9] sm:$0xff]
  %v158 = vld [vmem:[%s9 + $0x8] sm:$0xff]
  %v159 = vld [vmem:[%s9 + $0x10] sm:$0x11]
  %v160 = vld [vmem:[%s9 + $0x18] sm:$0x11]
  %v165 = vunpack.c.l.b16 %v157
  %v166 = vunpack.c.h.b16 %v157
  %v167 = vunpack.c.l.b16 %v158
  %v168 = vunpack.c.h.b16 %v158
  %v169 = vunpack.c.l.b16 %v159
  %v170 = vunpack.c.h.b16 %v159
  %v171 = vunpack.c.l.b16 %v160
  %v172 = vunpack.c.h.b16 %v160
  %v173 = vpack.c.b16 %v169, %v165
  %v174 = vpack.c.b16 %v170, %v166
  %v175 = vpack.c.b16 %v171, %v167
  %v176 = vpack.c.b16 %v172, %v168
  %v178 = vsel %vm88, %v173, 0
  %v181 = vsel %vm88, %v174, 0
  %v184 = vsel %vm88, %v175, 0
  %v187 = vsel %vm88, %v176, 0
  %189 = vmatpush.bf16.msra.mxu0 0
  %190 = vmatpush.bf16.msra.mxu0 0
  %191 = vmatpush.bf16.msra.mxu0 0
  %192 = vmatpush.bf16.msra.mxu0 0
  %193 = vmatpush.bf16.msra.mxu0 0
  %194 = vmatpush.bf16.msra.mxu0 0
  %195 = vmatpush.bf16.msra.mxu0 0
  %196 = vmatpush.bf16.msra.mxu0 %v178
  %197 = vmatmul.bf16.gmra.mxu0 %v86
  %v198 = vpop.f32.mrf.mxu0
  %v199 = vadd.f32 0.0, %v198
  %v200 = vpop.f32.mrf.mxu0
  %v201 = vadd.f32 0.0, %v200
  %202 = vdwg.mxu0
  %203 = vmatpush.bf16.msra.mxu0 0
  %204 = vmatpush.bf16.msra.mxu0 0
  %205 = vmatpush.bf16.msra.mxu0 0
  %206 = vmatpush.bf16.msra.mxu0 0
  %207 = vmatpush.bf16.msra.mxu0 0
  %208 = vmatpush.bf16.msra.mxu0 0
  %209 = vmatpush.bf16.msra.mxu0 0
  %210 = vmatpush.bf16.msra.mxu0 %v181
  %211 = vmatmul.bf16.gmra.mxu0 %v86
  %v212 = vpop.f32.mrf.mxu0
  %v213 = vadd.f32 0.0, %v212
  %v214 = vpop.f32.mrf.mxu0
  %v215 = vadd.f32 0.0, %v214
  %216 = vdwg.mxu0
  %217 = vmatpush.bf16.msra.mxu0 0
  %218 = vmatpush.bf16.msra.mxu0 0
  %219 = vmatpush.bf16.msra.mxu0 0
  %220 = vmatpush.bf16.msra.mxu0 0
  %221 = vmatpush.bf16.msra.mxu0 0
  %222 = vmatpush.bf16.msra.mxu0 0
  %223 = vmatpush.bf16.msra.mxu0 0
  %224 = vmatpush.bf16.msra.mxu0 %v184
  %225 = vmatmul.bf16.gmra.mxu0 %v86
  %v226 = vpop.f32.mrf.mxu0
  %v227 = vadd.f32 0.0, %v226
  %v228 = vpop.f32.mrf.mxu0
  %v229 = vadd.f32 0.0, %v228
  %230 = vdwg.mxu0
  %231 = vmatpush.bf16.msra.mxu0 0
  %232 = vmatpush.bf16.msra.mxu0 0
  %233 = vmatpush.bf16.msra.mxu0 0
  %234 = vmatpush.bf16.msra.mxu0 0
  %235 = vmatpush.bf16.msra.mxu0 0
  %236 = vmatpush.bf16.msra.mxu0 0
  %237 = vmatpush.bf16.msra.mxu0 0
  %238 = vmatpush.bf16.msra.mxu0 %v187
  %239 = vmatmul.bf16.gmra.mxu0 %v86
  %v240 = vpop.f32.mrf.mxu0
  %v241 = vadd.f32 0.0, %v240
  %v242 = vpop.f32.mrf.mxu0
  %v243 = vadd.f32 0.0, %v242
  %244 = vdwg.mxu0
  %v245 = vld [vmem:[%s0] sm:$0xff]
  %v246 = vld [vmem:[%s0 + $0x8] sm:$0xff]
  %v247 = vld [vmem:[%s0 + $0x10] sm:$0xff]
  %v248 = vld [vmem:[%s0 + $0x18] sm:$0xf]
  %v249 = vld [vmem:[%s0 + $0x1c] sm:$0xff]
  %v250 = vld [vmem:[%s0 + $0x24] sm:$0xff]
  %v251 = vld [vmem:[%s0 + $0x2c] sm:$0xff]
  %v252 = vld [vmem:[%s0 + $0x34] sm:$0xf]
  %v253 = vld [vmem:[%s3] sm:$0xff]
  %v254 = vld [vmem:[%s3 + $0x8] sm:$0xff]
  %v255 = vld [vmem:[%s3 + $0x10] sm:$0xff]
  %v256 = vld [vmem:[%s3 + $0x18] sm:$0xff]
  %v257 = vld [vmem:[%s3 + $0x20] sm:$0xff]
  %v258 = vld [vmem:[%s3 + $0x28] sm:$0xff]
  %v259 = vld [vmem:[%s3 + $0x30] sm:$0xff]
  %v260 = vld [vmem:[%s3 + $0x38] sm:$0xff]
  %v261 = vld [vmem:[%s3 + $0x40] sm:$0xff]
  %v262 = vld [vmem:[%s3 + $0x48] sm:$0xff]
  %v263 = vld [vmem:[%s3 + $0x50] sm:$0xff]
  %v264 = vld [vmem:[%s3 + $0x58] sm:$0xff]
  %v265 = vld [vmem:[%s3 + $0x60] sm:$0xff]
  %v266 = vld [vmem:[%s3 + $0x68] sm:$0xff]
  %v267 = vld [vmem:[%s3 + $0x70] sm:$0xff]
  %v268 = vld [vmem:[%s3 + $0x78] sm:$0xff]
  %v269 = vld [vmem:[%s3 + $0x80] sm:$0xff]
  %v270 = vld [vmem:[%s3 + $0x88] sm:$0xff]
  %v271 = vld [vmem:[%s3 + $0x90] sm:$0xff]
  %v272 = vld [vmem:[%s3 + $0x98] sm:$0xff]
  %v273 = vld [vmem:[%s3 + $0xa0] sm:$0xff]
  %v274 = vld [vmem:[%s3 + $0xa8] sm:$0xff]
  %v275 = vld [vmem:[%s3 + $0xb0] sm:$0xff]
  %v276 = vld [vmem:[%s3 + $0xb8] sm:$0xff]
  %v277 = vld [vmem:[%s3 + $0xc0] sm:$0xff]
  %v278 = vld [vmem:[%s3 + $0xc8] sm:$0xff]
  %v279 = vld [vmem:[%s3 + $0xd0] sm:$0xff]
  %v280 = vld [vmem:[%s3 + $0xd8] sm:$0xff]
  %v281 = vld [vmem:[%s3 + $0xe0] sm:$0xff]
  %v282 = vld [vmem:[%s3 + $0xe8] sm:$0xff]
  %v283 = vld [vmem:[%s3 + $0xf0] sm:$0xff]
  %v284 = vld [vmem:[%s3 + $0xf8] sm:$0xff]
  %v285 = vld [vmem:[%s3 + $0x100] sm:$0xff]
  %v286 = vld [vmem:[%s3 + $0x108] sm:$0xff]
  %v287 = vld [vmem:[%s3 + $0x110] sm:$0xff]
  %v288 = vld [vmem:[%s3 + $0x118] sm:$0xff]
  %v289 = vld [vmem:[%s3 + $0x120] sm:$0xff]
  %v290 = vld [vmem:[%s3 + $0x128] sm:$0xff]
  %v291 = vld [vmem:[%s3 + $0x130] sm:$0xff]
  %v292 = vld [vmem:[%s3 + $0x138] sm:$0xff]
  %v293 = vld [vmem:[%s3 + $0x140] sm:$0xff]
  %v294 = vld [vmem:[%s3 + $0x148] sm:$0xff]
  %v295 = vld [vmem:[%s3 + $0x150] sm:$0xff]
  %v296 = vld [vmem:[%s3 + $0x158] sm:$0xff]
  %v297 = vld [vmem:[%s3 + $0x160] sm:$0xff]
  %v298 = vld [vmem:[%s3 + $0x168] sm:$0xff]
  %v299 = vld [vmem:[%s3 + $0x170] sm:$0xff]
  %v300 = vld [vmem:[%s3 + $0x178] sm:$0xff]
  %v301 = vld [vmem:[%s3 + $0x180] sm:$0xff]
  %v302 = vld [vmem:[%s3 + $0x188] sm:$0xff]
  %v303 = vld [vmem:[%s3 + $0x190] sm:$0xff]
  %v304 = vld [vmem:[%s3 + $0x198] sm:$0xff]
  %v305 = vld [vmem:[%s3 + $0x1a0] sm:$0xff]
  %v306 = vld [vmem:[%s3 + $0x1a8] sm:$0xff]
  %v307 = vld [vmem:[%s3 + $0x1b0] sm:$0xff]
  %v308 = vld [vmem:[%s3 + $0x1b8] sm:$0xff]
  %v309 = vld [vmem:[%s3 + $0x1c0] sm:$0xff]
  %v310 = vld [vmem:[%s3 + $0x1c8] sm:$0xff]
  %v311 = vld [vmem:[%s3 + $0x1d0] sm:$0xff]
  %v312 = vld [vmem:[%s3 + $0x1d8] sm:$0xff]
  %v313 = vld [vmem:[%s3 + $0x1e0] sm:$0xff]
  %v314 = vld [vmem:[%s3 + $0x1e8] sm:$0xff]
  %v315 = vld [vmem:[%s3 + $0x1f0] sm:$0xff]
  %v316 = vld [vmem:[%s3 + $0x1f8] sm:$0xff]
  %v317 = vld [vmem:[%s3 + $0x200] sm:$0xff]
  %v318 = vld [vmem:[%s3 + $0x208] sm:$0xff]
  %v319 = vld [vmem:[%s3 + $0x210] sm:$0xff]
  %v320 = vld [vmem:[%s3 + $0x218] sm:$0xff]
  %v321 = vld [vmem:[%s3 + $0x220] sm:$0xff]
  %v322 = vld [vmem:[%s3 + $0x228] sm:$0xff]
  %v323 = vld [vmem:[%s3 + $0x230] sm:$0xff]
  %v324 = vld [vmem:[%s3 + $0x238] sm:$0xff]
  %v325 = vld [vmem:[%s3 + $0x240] sm:$0xff]
  %v326 = vld [vmem:[%s3 + $0x248] sm:$0xff]
  %v327 = vld [vmem:[%s3 + $0x250] sm:$0xff]
  %v328 = vld [vmem:[%s3 + $0x258] sm:$0xff]
  %v329 = vld [vmem:[%s3 + $0x260] sm:$0xff]
  %v330 = vld [vmem:[%s3 + $0x268] sm:$0xff]
  %v331 = vld [vmem:[%s3 + $0x270] sm:$0xff]
  %v332 = vld [vmem:[%s3 + $0x278] sm:$0xff]
  %v333 = vld [vmem:[%s3 + $0x280] sm:$0xff]
  %v334 = vld [vmem:[%s3 + $0x288] sm:$0xff]
  %v335 = vld [vmem:[%s3 + $0x290] sm:$0xff]
  %v336 = vld [vmem:[%s3 + $0x298] sm:$0xff]
  %v337 = vld [vmem:[%s3 + $0x2a0] sm:$0xff]
  %v338 = vld [vmem:[%s3 + $0x2a8] sm:$0xff]
  %v339 = vld [vmem:[%s3 + $0x2b0] sm:$0xff]
  %v340 = vld [vmem:[%s3 + $0x2b8] sm:$0xff]
  %v341 = vld [vmem:[%s3 + $0x2c0] sm:$0xff]
  %v342 = vld [vmem:[%s3 + $0x2c8] sm:$0xff]
  %v343 = vld [vmem:[%s3 + $0x2d0] sm:$0xff]
  %v344 = vld [vmem:[%s3 + $0x2d8] sm:$0xff]
  %v345 = vld [vmem:[%s3 + $0x2e0] sm:$0xff]
  %v346 = vld [vmem:[%s3 + $0x2e8] sm:$0xff]
  %v347 = vld [vmem:[%s3 + $0x2f0] sm:$0xff]
  %v348 = vld [vmem:[%s3 + $0x2f8] sm:$0xff]
  %v349 = vld [vmem:[%s3 + $0x300] sm:$0xff]
  %v350 = vld [vmem:[%s3 + $0x308] sm:$0xff]
  %v351 = vld [vmem:[%s3 + $0x310] sm:$0xff]
  %v352 = vld [vmem:[%s3 + $0x318] sm:$0xff]
  %v353 = vld [vmem:[%s3 + $0x320] sm:$0xff]
  %v354 = vld [vmem:[%s3 + $0x328] sm:$0xff]
  %v355 = vld [vmem:[%s3 + $0x330] sm:$0xff]
  %v356 = vld [vmem:[%s3 + $0x338] sm:$0xff]
  %v357 = vld [vmem:[%s3 + $0x340] sm:$0xff]
  %v358 = vld [vmem:[%s3 + $0x348] sm:$0xff]
  %v359 = vld [vmem:[%s3 + $0x350] sm:$0xff]
  %v360 = vld [vmem:[%s3 + $0x358] sm:$0xff]
  %v361 = vld [vmem:[%s3 + $0x360] sm:$0xff]
  %v362 = vld [vmem:[%s3 + $0x368] sm:$0xff]
  %v363 = vld [vmem:[%s3 + $0x370] sm:$0xff]
  %v364 = vld [vmem:[%s3 + $0x378] sm:$0xff]
  %v365 = vld [vmem:[%s3 + $0x380] sm:$0xff]
  %v366 = vld [vmem:[%s3 + $0x388] sm:$0xff]
  %v367 = vld [vmem:[%s3 + $0x390] sm:$0xff]
  %v368 = vld [vmem:[%s3 + $0x398] sm:$0xff]
  %v369 = vld [vmem:[%s3 + $0x3a0] sm:$0xff]
  %v370 = vld [vmem:[%s3 + $0x3a8] sm:$0xff]
  %v371 = vld [vmem:[%s3 + $0x3b0] sm:$0xff]
  %v372 = vld [vmem:[%s3 + $0x3b8] sm:$0xff]
  %v373 = vld [vmem:[%s3 + $0x3c0] sm:$0xff]
  %v374 = vld [vmem:[%s3 + $0x3c8] sm:$0xff]
  %v375 = vld [vmem:[%s3 + $0x3d0] sm:$0xff]
  %v376 = vld [vmem:[%s3 + $0x3d8] sm:$0xff]
  %v377 = vld [vmem:[%s3 + $0x3e0] sm:$0xff]
  %v378 = vld [vmem:[%s3 + $0x3e8] sm:$0xff]
  %v379 = vld [vmem:[%s3 + $0x3f0] sm:$0xff]
  %v380 = vld [vmem:[%s3 + $0x3f8] sm:$0xff]
  %v381 = vld [vmem:[%s3 + $0x400] sm:$0xff]
  %v382 = vld [vmem:[%s3 + $0x408] sm:$0xff]
  %v383 = vld [vmem:[%s3 + $0x410] sm:$0xff]
  %v384 = vld [vmem:[%s3 + $0x418] sm:$0xff]
  %v385 = vld [vmem:[%s3 + $0x420] sm:$0xff]
  %v386 = vld [vmem:[%s3 + $0x428] sm:$0xff]
  %v387 = vld [vmem:[%s3 + $0x430] sm:$0xff]
  %v388 = vld [vmem:[%s3 + $0x438] sm:$0xff]
  %v389 = vld [vmem:[%s3 + $0x440] sm:$0xff]
  %v390 = vld [vmem:[%s3 + $0x448] sm:$0xff]
  %v391 = vld [vmem:[%s3 + $0x450] sm:$0xff]
  %v392 = vld [vmem:[%s3 + $0x458] sm:$0xff]
  %v393 = vld [vmem:[%s3 + $0x460] sm:$0xff]
  %v394 = vld [vmem:[%s3 + $0x468] sm:$0xff]
  %v395 = vld [vmem:[%s3 + $0x470] sm:$0xff]
  %v396 = vld [vmem:[%s3 + $0x478] sm:$0xff]
  %v397 = vld [vmem:[%s3 + $0x480] sm:$0xff]
  %v398 = vld [vmem:[%s3 + $0x488] sm:$0xff]
  %v399 = vld [vmem:[%s3 + $0x490] sm:$0xff]
  %v400 = vld [vmem:[%s3 + $0x498] sm:$0xff]
  %v401 = vld [vmem:[%s3 + $0x4a0] sm:$0xff]
  %v402 = vld [vmem:[%s3 + $0x4a8] sm:$0xff]
  %v403 = vld [vmem:[%s3 + $0x4b0] sm:$0xff]
  %v404 = vld [vmem:[%s3 + $0x4b8] sm:$0xff]
  %v405 = vld [vmem:[%s3 + $0x4c0] sm:$0xff]
  %v406 = vld [vmem:[%s3 + $0x4c8] sm:$0xff]
  %v407 = vld [vmem:[%s3 + $0x4d0] sm:$0xff]
  %v408 = vld [vmem:[%s3 + $0x4d8] sm:$0xff]
  %v409 = vld [vmem:[%s3 + $0x4e0] sm:$0xff]
  %v410 = vld [vmem:[%s3 + $0x4e8] sm:$0xff]
  %v411 = vld [vmem:[%s3 + $0x4f0] sm:$0xff]
  %v412 = vld [vmem:[%s3 + $0x4f8] sm:$0xff]
  %v413 = vld [vmem:[%s3 + $0x500] sm:$0xff]
  %v414 = vld [vmem:[%s3 + $0x508] sm:$0xff]
  %v415 = vld [vmem:[%s3 + $0x510] sm:$0xff]
  %v416 = vld [vmem:[%s3 + $0x518] sm:$0xff]
  %v417 = vld [vmem:[%s3 + $0x520] sm:$0xff]
  %v418 = vld [vmem:[%s3 + $0x528] sm:$0xff]
  %v419 = vld [vmem:[%s3 + $0x530] sm:$0xff]
  %v420 = vld [vmem:[%s3 + $0x538] sm:$0xff]
  %v421 = vld [vmem:[%s3 + $0x540] sm:$0xff]
  %v422 = vld [vmem:[%s3 + $0x548] sm:$0xff]
  %v423 = vld [vmem:[%s3 + $0x550] sm:$0xff]
  %v424 = vld [vmem:[%s3 + $0x558] sm:$0xff]
  %v425 = vld [vmem:[%s3 + $0x560] sm:$0xff]
  %v426 = vld [vmem:[%s3 + $0x568] sm:$0xff]
  %v427 = vld [vmem:[%s3 + $0x570] sm:$0xff]
  %v428 = vld [vmem:[%s3 + $0x578] sm:$0xff]
  %v429 = vld [vmem:[%s3 + $0x580] sm:$0xff]
  %v430 = vld [vmem:[%s3 + $0x588] sm:$0xff]
  %v431 = vld [vmem:[%s3 + $0x590] sm:$0xff]
  %v432 = vld [vmem:[%s3 + $0x598] sm:$0xff]
  %v433 = vld [vmem:[%s3 + $0x5a0] sm:$0xff]
  %v434 = vld [vmem:[%s3 + $0x5a8] sm:$0xff]
  %v435 = vld [vmem:[%s3 + $0x5b0] sm:$0xff]
  %v436 = vld [vmem:[%s3 + $0x5b8] sm:$0xff]
  %v437 = vld [vmem:[%s3 + $0x5c0] sm:$0xff]
  %v438 = vld [vmem:[%s3 + $0x5c8] sm:$0xff]
  %v439 = vld [vmem:[%s3 + $0x5d0] sm:$0xff]
  %v440 = vld [vmem:[%s3 + $0x5d8] sm:$0xff]
  %v441 = vld [vmem:[%s3 + $0x5e0] sm:$0xff]
  %v442 = vld [vmem:[%s3 + $0x5e8] sm:$0xff]
  %v443 = vld [vmem:[%s3 + $0x5f0] sm:$0xff]
  %v444 = vld [vmem:[%s3 + $0x5f8] sm:$0xff]
  %v445 = vld [vmem:[%s3 + $0x600] sm:$0xff]
  %v446 = vld [vmem:[%s3 + $0x608] sm:$0xff]
  %v447 = vld [vmem:[%s3 + $0x610] sm:$0xff]
  %v448 = vld [vmem:[%s3 + $0x618] sm:$0xff]
  %v449 = vld [vmem:[%s5] sm:$0xf]
  %v451 = vperm.slane %v449, 0
  %v452 = vperm.slane %v449, 1
  %v453 = vperm.slane %v449, 2
  %v454 = vperm.slane %v449, 3
  %v467 = vunpack.c.l.b16 %v245
  %v468 = vunpack.c.h.b16 %v245
  %v469 = vunpack.c.l.b16 %v246
  %v470 = vunpack.c.h.b16 %v246
  %v471 = vunpack.c.l.b16 %v247
  %v472 = vunpack.c.h.b16 %v247
  %v473 = vunpack.c.l.b16 %v248
  %v474 = vunpack.c.l.b16 %v249
  %v475 = vunpack.c.h.b16 %v249
  %v476 = vunpack.c.l.b16 %v250
  %v477 = vunpack.c.h.b16 %v250
  %v478 = vunpack.c.l.b16 %v251
  %v479 = vunpack.c.h.b16 %v251
  %v480 = vunpack.c.l.b16 %v252
  %v481 = vpack.c.b16 %v474, %v467
  %v482 = vpack.c.b16 %v475, %v468
  %v483 = vpack.c.b16 %v476, %v469
  %v484 = vpack.c.b16 %v477, %v470
  %v485 = vpack.c.b16 %v478, %v471
  %v486 = vpack.c.b16 %v479, %v472
  %v487 = vpack.c.b16 %v480, %v473
  %v690 = vunpack.c.l.b16 %v253
  %v691 = vunpack.c.h.b16 %v253
  %v692 = vunpack.c.l.b16 %v254
  %v693 = vunpack.c.h.b16 %v254
  %v694 = vunpack.c.l.b16 %v255
  %v695 = vunpack.c.h.b16 %v255
  %v696 = vunpack.c.l.b16 %v256
  %v697 = vunpack.c.h.b16 %v256
  %v698 = vunpack.c.l.b16 %v257
  %v699 = vunpack.c.h.b16 %v257
  %v700 = vunpack.c.l.b16 %v258
  %v701 = vunpack.c.h.b16 %v258
  %v702 = vunpack.c.l.b16 %v259
  %v703 = vunpack.c.h.b16 %v259
  %v704 = vunpack.c.l.b16 %v260
  %v705 = vunpack.c.h.b16 %v260
  %v706 = vunpack.c.l.b16 %v261
  %v707 = vunpack.c.h.b16 %v261
  %v708 = vunpack.c.l.b16 %v262
  %v709 = vunpack.c.h.b16 %v262
  %v710 = vunpack.c.l.b16 %v263
  %v711 = vunpack.c.h.b16 %v263
  %v712 = vunpack.c.l.b16 %v264
  %v713 = vunpack.c.h.b16 %v264
  %v714 = vunpack.c.l.b16 %v265
  %v715 = vunpack.c.h.b16 %v265
  %v716 = vunpack.c.l.b16 %v266
  %v717 = vunpack.c.h.b16 %v266
  %v718 = vunpack.c.l.b16 %v267
  %v719 = vunpack.c.h.b16 %v267
  %v720 = vunpack.c.l.b16 %v268
  %v721 = vunpack.c.h.b16 %v268
  %v722 = vunpack.c.l.b16 %v269
  %v723 = vunpack.c.h.b16 %v269
  %v724 = vunpack.c.l.b16 %v270
  %v725 = vunpack.c.h.b16 %v270
  %v726 = vunpack.c.l.b16 %v271
  %v727 = vunpack.c.h.b16 %v271
  %v728 = vunpack.c.l.b16 %v272
  %v729 = vunpack.c.h.b16 %v272
  %v730 = vunpack.c.l.b16 %v273
  %v731 = vunpack.c.h.b16 %v273
  %v732 = vunpack.c.l.b16 %v274
  %v733 = vunpack.c.h.b16 %v274
  %v734 = vunpack.c.l.b16 %v275
  %v735 = vunpack.c.h.b16 %v275
  %v736 = vunpack.c.l.b16 %v276
  %v737 = vunpack.c.h.b16 %v276
  %v738 = vunpack.c.l.b16 %v277
  %v739 = vunpack.c.h.b16 %v277
  %v740 = vunpack.c.l.b16 %v278
  %v741 = vunpack.c.h.b16 %v278
  %v742 = vunpack.c.l.b16 %v279
  %v743 = vunpack.c.h.b16 %v279
  %v744 = vunpack.c.l.b16 %v280
  %v745 = vunpack.c.h.b16 %v280
  %v746 = vunpack.c.l.b16 %v281
  %v747 = vunpack.c.h.b16 %v281
  %v748 = vunpack.c.l.b16 %v282
  %v749 = vunpack.c.h.b16 %v282
  %v750 = vunpack.c.l.b16 %v283
  %v751 = vunpack.c.h.b16 %v283
  %v752 = vunpack.c.l.b16 %v284
  %v753 = vunpack.c.h.b16 %v284
  %v754 = vunpack.c.l.b16 %v285
  %v755 = vunpack.c.h.b16 %v285
  %v756 = vunpack.c.l.b16 %v286
  %v757 = vunpack.c.h.b16 %v286
  %v758 = vunpack.c.l.b16 %v287
  %v759 = vunpack.c.h.b16 %v287
  %v760 = vunpack.c.l.b16 %v288
  %v761 = vunpack.c.h.b16 %v288
  %v762 = vunpack.c.l.b16 %v289
  %v763 = vunpack.c.h.b16 %v289
  %v764 = vunpack.c.l.b16 %v290
  %v765 = vunpack.c.h.b16 %v290
  %v766 = vunpack.c.l.b16 %v291
  %v767 = vunpack.c.h.b16 %v291
  %v768 = vunpack.c.l.b16 %v292
  %v769 = vunpack.c.h.b16 %v292
  %v770 = vunpack.c.l.b16 %v293
  %v771 = vunpack.c.h.b16 %v293
  %v772 = vunpack.c.l.b16 %v294
  %v773 = vunpack.c.h.b16 %v294
  %v774 = vunpack.c.l.b16 %v295
  %v775 = vunpack.c.h.b16 %v295
  %v776 = vunpack.c.l.b16 %v296
  %v777 = vunpack.c.h.b16 %v296
  %v778 = vunpack.c.l.b16 %v297
  %v779 = vunpack.c.h.b16 %v297
  %v780 = vunpack.c.l.b16 %v298
  %v781 = vunpack.c.h.b16 %v298
  %v782 = vunpack.c.l.b16 %v299
  %v783 = vunpack.c.h.b16 %v299
  %v784 = vunpack.c.l.b16 %v300
  %v785 = vunpack.c.h.b16 %v300
  %v786 = vunpack.c.l.b16 %v301
  %v787 = vunpack.c.h.b16 %v301
  %v788 = vunpack.c.l.b16 %v302
  %v789 = vunpack.c.h.b16 %v302
  %v790 = vunpack.c.l.b16 %v303
  %v791 = vunpack.c.h.b16 %v303
  %v792 = vunpack.c.l.b16 %v304
  %v793 = vunpack.c.h.b16 %v304
  %v794 = vunpack.c.l.b16 %v305
  %v795 = vunpack.c.h.b16 %v305
  %v796 = vunpack.c.l.b16 %v306
  %v797 = vunpack.c.h.b16 %v306
  %v798 = vunpack.c.l.b16 %v307
  %v799 = vunpack.c.h.b16 %v307
  %v800 = vunpack.c.l.b16 %v308
  %v801 = vunpack.c.h.b16 %v308
  %v802 = vunpack.c.l.b16 %v309
  %v803 = vunpack.c.h.b16 %v309
  %v804 = vunpack.c.l.b16 %v310
  %v805 = vunpack.c.h.b16 %v310
  %v806 = vunpack.c.l.b16 %v311
  %v807 = vunpack.c.h.b16 %v311
  %v808 = vunpack.c.l.b16 %v312
  %v809 = vunpack.c.h.b16 %v312
  %v810 = vunpack.c.l.b16 %v313
  %v811 = vunpack.c.h.b16 %v313
  %v812 = vunpack.c.l.b16 %v314
  %v813 = vunpack.c.h.b16 %v314
  %v814 = vunpack.c.l.b16 %v315
  %v815 = vunpack.c.h.b16 %v315
  %v816 = vunpack.c.l.b16 %v316
  %v817 = vunpack.c.h.b16 %v316
  %v818 = vunpack.c.l.b16 %v317
  %v819 = vunpack.c.h.b16 %v317
  %v820 = vunpack.c.l.b16 %v318
  %v821 = vunpack.c.h.b16 %v318
  %v822 = vunpack.c.l.b16 %v319
  %v823 = vunpack.c.h.b16 %v319
  %v824 = vunpack.c.l.b16 %v320
  %v825 = vunpack.c.h.b16 %v320
  %v826 = vunpack.c.l.b16 %v321
  %v827 = vunpack.c.h.b16 %v321
  %v828 = vunpack.c.l.b16 %v322
  %v829 = vunpack.c.h.b16 %v322
  %v830 = vunpack.c.l.b16 %v323
  %v831 = vunpack.c.h.b16 %v323
  %v832 = vunpack.c.l.b16 %v324
  %v833 = vunpack.c.h.b16 %v324
  %v834 = vunpack.c.l.b16 %v325
  %v835 = vunpack.c.h.b16 %v325
  %v836 = vunpack.c.l.b16 %v326
  %v837 = vunpack.c.h.b16 %v326
  %v838 = vunpack.c.l.b16 %v327
  %v839 = vunpack.c.h.b16 %v327
  %v840 = vunpack.c.l.b16 %v328
  %v841 = vunpack.c.h.b16 %v328
  %v842 = vunpack.c.l.b16 %v329
  %v843 = vunpack.c.h.b16 %v329
  %v844 = vunpack.c.l.b16 %v330
  %v845 = vunpack.c.h.b16 %v330
  %v846 = vunpack.c.l.b16 %v331
  %v847 = vunpack.c.h.b16 %v331
  %v848 = vunpack.c.l.b16 %v332
  %v849 = vunpack.c.h.b16 %v332
  %v850 = vunpack.c.l.b16 %v333
  %v851 = vunpack.c.h.b16 %v333
  %v852 = vunpack.c.l.b16 %v334
  %v853 = vunpack.c.h.b16 %v334
  %v854 = vunpack.c.l.b16 %v335
  %v855 = vunpack.c.h.b16 %v335
  %v856 = vunpack.c.l.b16 %v336
  %v857 = vunpack.c.h.b16 %v336
  %v858 = vunpack.c.l.b16 %v337
  %v859 = vunpack.c.h.b16 %v337
  %v860 = vunpack.c.l.b16 %v338
  %v861 = vunpack.c.h.b16 %v338
  %v862 = vunpack.c.l.b16 %v339
  %v863 = vunpack.c.h.b16 %v339
  %v864 = vunpack.c.l.b16 %v340
  %v865 = vunpack.c.h.b16 %v340
  %v866 = vunpack.c.l.b16 %v341
  %v867 = vunpack.c.h.b16 %v341
  %v868 = vunpack.c.l.b16 %v342
  %v869 = vunpack.c.h.b16 %v342
  %v870 = vunpack.c.l.b16 %v343
  %v871 = vunpack.c.h.b16 %v343
  %v872 = vunpack.c.l.b16 %v344
  %v873 = vunpack.c.h.b16 %v344
  %v874 = vunpack.c.l.b16 %v345
  %v875 = vunpack.c.h.b16 %v345
  %v876 = vunpack.c.l.b16 %v346
  %v877 = vunpack.c.h.b16 %v346
  %v878 = vunpack.c.l.b16 %v347
  %v879 = vunpack.c.h.b16 %v347
  %v880 = vunpack.c.l.b16 %v348
  %v881 = vunpack.c.h.b16 %v348
  %v882 = vunpack.c.l.b16 %v349
  %v883 = vunpack.c.h.b16 %v349
  %v884 = vunpack.c.l.b16 %v350
  %v885 = vunpack.c.h.b16 %v350
  %v886 = vunpack.c.l.b16 %v351
  %v887 = vunpack.c.h.b16 %v351
  %v888 = vunpack.c.l.b16 %v352
  %v889 = vunpack.c.h.b16 %v352
  %v890 = vunpack.c.l.b16 %v353
  %v891 = vunpack.c.h.b16 %v353
  %v892 = vunpack.c.l.b16 %v354
  %v893 = vunpack.c.h.b16 %v354
  %v894 = vunpack.c.l.b16 %v355
  %v895 = vunpack.c.h.b16 %v355
  %v896 = vunpack.c.l.b16 %v356
  %v897 = vunpack.c.h.b16 %v356
  %v898 = vunpack.c.l.b16 %v357
  %v899 = vunpack.c.h.b16 %v357
  %v900 = vunpack.c.l.b16 %v358
  %v901 = vunpack.c.h.b16 %v358
  %v902 = vunpack.c.l.b16 %v359
  %v903 = vunpack.c.h.b16 %v359
  %v904 = vunpack.c.l.b16 %v360
  %v905 = vunpack.c.h.b16 %v360
  %v906 = vunpack.c.l.b16 %v361
  %v907 = vunpack.c.h.b16 %v361
  %v908 = vunpack.c.l.b16 %v362
  %v909 = vunpack.c.h.b16 %v362
  %v910 = vunpack.c.l.b16 %v363
  %v911 = vunpack.c.h.b16 %v363
  %v912 = vunpack.c.l.b16 %v364
  %v913 = vunpack.c.h.b16 %v364
  %v914 = vunpack.c.l.b16 %v365
  %v915 = vunpack.c.h.b16 %v365
  %v916 = vunpack.c.l.b16 %v366
  %v917 = vunpack.c.h.b16 %v366
  %v918 = vunpack.c.l.b16 %v367
  %v919 = vunpack.c.h.b16 %v367
  %v920 = vunpack.c.l.b16 %v368
  %v921 = vunpack.c.h.b16 %v368
  %v922 = vunpack.c.l.b16 %v369
  %v923 = vunpack.c.h.b16 %v369
  %v924 = vunpack.c.l.b16 %v370
  %v925 = vunpack.c.h.b16 %v370
  %v926 = vunpack.c.l.b16 %v371
  %v927 = vunpack.c.h.b16 %v371
  %v928 = vunpack.c.l.b16 %v372
  %v929 = vunpack.c.h.b16 %v372
  %v930 = vunpack.c.l.b16 %v373
  %v931 = vunpack.c.h.b16 %v373
  %v932 = vunpack.c.l.b16 %v374
  %v933 = vunpack.c.h.b16 %v374
  %v934 = vunpack.c.l.b16 %v375
  %v935 = vunpack.c.h.b16 %v375
  %v936 = vunpack.c.l.b16 %v376
  %v937 = vunpack.c.h.b16 %v376
  %v938 = vunpack.c.l.b16 %v377
  %v939 = vunpack.c.h.b16 %v377
  %v940 = vunpack.c.l.b16 %v378
  %v941 = vunpack.c.h.b16 %v378
  %v942 = vunpack.c.l.b16 %v379
  %v943 = vunpack.c.h.b16 %v379
  %v944 = vunpack.c.l.b16 %v380
  %v945 = vunpack.c.h.b16 %v380
  %v946 = vunpack.c.l.b16 %v381
  %v947 = vunpack.c.h.b16 %v381
  %v948 = vunpack.c.l.b16 %v382
  %v949 = vunpack.c.h.b16 %v382
  %v950 = vunpack.c.l.b16 %v383
  %v951 = vunpack.c.h.b16 %v383
  %v952 = vunpack.c.l.b16 %v384
  %v953 = vunpack.c.h.b16 %v384
  %v954 = vunpack.c.l.b16 %v385
  %v955 = vunpack.c.h.b16 %v385
  %v956 = vunpack.c.l.b16 %v386
  %v957 = vunpack.c.h.b16 %v386
  %v958 = vunpack.c.l.b16 %v387
  %v959 = vunpack.c.h.b16 %v387
  %v960 = vunpack.c.l.b16 %v388
  %v961 = vunpack.c.h.b16 %v388
  %v962 = vunpack.c.l.b16 %v389
  %v963 = vunpack.c.h.b16 %v389
  %v964 = vunpack.c.l.b16 %v390
  %v965 = vunpack.c.h.b16 %v390
  %v966 = vunpack.c.l.b16 %v391
  %v967 = vunpack.c.h.b16 %v391
  %v968 = vunpack.c.l.b16 %v392
  %v969 = vunpack.c.h.b16 %v392
  %v970 = vunpack.c.l.b16 %v393
  %v971 = vunpack.c.h.b16 %v393
  %v972 = vunpack.c.l.b16 %v394
  %v973 = vunpack.c.h.b16 %v394
  %v974 = vunpack.c.l.b16 %v395
  %v975 = vunpack.c.h.b16 %v395
  %v976 = vunpack.c.l.b16 %v396
  %v977 = vunpack.c.h.b16 %v396
  %v978 = vunpack.c.l.b16 %v397
  %v979 = vunpack.c.h.b16 %v397
  %v980 = vunpack.c.l.b16 %v398
  %v981 = vunpack.c.h.b16 %v398
  %v982 = vunpack.c.l.b16 %v399
  %v983 = vunpack.c.h.b16 %v399
  %v984 = vunpack.c.l.b16 %v400
  %v985 = vunpack.c.h.b16 %v400
  %v986 = vunpack.c.l.b16 %v401
  %v987 = vunpack.c.h.b16 %v401
  %v988 = vunpack.c.l.b16 %v402
  %v989 = vunpack.c.h.b16 %v402
  %v990 = vunpack.c.l.b16 %v403
  %v991 = vunpack.c.h.b16 %v403
  %v992 = vunpack.c.l.b16 %v404
  %v993 = vunpack.c.h.b16 %v404
  %v994 = vunpack.c.l.b16 %v405
  %v995 = vunpack.c.h.b16 %v405
  %v996 = vunpack.c.l.b16 %v406
  %v997 = vunpack.c.h.b16 %v406
  %v998 = vunpack.c.l.b16 %v407
  %v999 = vunpack.c.h.b16 %v407
  %v1000 = vunpack.c.l.b16 %v408
  %v1001 = vunpack.c.h.b16 %v408
  %v1002 = vunpack.c.l.b16 %v409
  %v1003 = vunpack.c.h.b16 %v409
  %v1004 = vunpack.c.l.b16 %v410
  %v1005 = vunpack.c.h.b16 %v410
  %v1006 = vunpack.c.l.b16 %v411
  %v1007 = vunpack.c.h.b16 %v411
  %v1008 = vunpack.c.l.b16 %v412
  %v1009 = vunpack.c.h.b16 %v412
  %v1010 = vunpack.c.l.b16 %v413
  %v1011 = vunpack.c.h.b16 %v413
  %v1012 = vunpack.c.l.b16 %v414
  %v1013 = vunpack.c.h.b16 %v414
  %v1014 = vunpack.c.l.b16 %v415
  %v1015 = vunpack.c.h.b16 %v415
  %v1016 = vunpack.c.l.b16 %v416
  %v1017 = vunpack.c.h.b16 %v416
  %v1018 = vunpack.c.l.b16 %v417
  %v1019 = vunpack.c.h.b16 %v417
  %v1020 = vunpack.c.l.b16 %v418
  %v1021 = vunpack.c.h.b16 %v418
  %v1022 = vunpack.c.l.b16 %v419
  %v1023 = vunpack.c.h.b16 %v419
  %v1024 = vunpack.c.l.b16 %v420
  %v1025 = vunpack.c.h.b16 %v420
  %v1026 = vunpack.c.l.b16 %v421
  %v1027 = vunpack.c.h.b16 %v421
  %v1028 = vunpack.c.l.b16 %v422
  %v1029 = vunpack.c.h.b16 %v422
  %v1030 = vunpack.c.l.b16 %v423
  %v1031 = vunpack.c.h.b16 %v423
  %v1032 = vunpack.c.l.b16 %v424
  %v1033 = vunpack.c.h.b16 %v424
  %v1034 = vunpack.c.l.b16 %v425
  %v1035 = vunpack.c.h.b16 %v425
  %v1036 = vunpack.c.l.b16 %v426
  %v1037 = vunpack.c.h.b16 %v426
  %v1038 = vunpack.c.l.b16 %v427
  %v1039 = vunpack.c.h.b16 %v427
  %v1040 = vunpack.c.l.b16 %v428
  %v1041 = vunpack.c.h.b16 %v428
  %v1042 = vunpack.c.l.b16 %v429
  %v1043 = vunpack.c.h.b16 %v429
  %v1044 = vunpack.c.l.b16 %v430
  %v1045 = vunpack.c.h.b16 %v430
  %v1046 = vunpack.c.l.b16 %v431
  %v1047 = vunpack.c.h.b16 %v431
  %v1048 = vunpack.c.l.b16 %v432
  %v1049 = vunpack.c.h.b16 %v432
  %v1050 = vunpack.c.l.b16 %v433
  %v1051 = vunpack.c.h.b16 %v433
  %v1052 = vunpack.c.l.b16 %v434
  %v1053 = vunpack.c.h.b16 %v434
  %v1054 = vunpack.c.l.b16 %v435
  %v1055 = vunpack.c.h.b16 %v435
  %v1056 = vunpack.c.l.b16 %v436
  %v1057 = vunpack.c.h.b16 %v436
  %v1058 = vunpack.c.l.b16 %v437
  %v1059 = vunpack.c.h.b16 %v437
  %v1060 = vunpack.c.l.b16 %v438
  %v1061 = vunpack.c.h.b16 %v438
  %v1062 = vunpack.c.l.b16 %v439
  %v1063 = vunpack.c.h.b16 %v439
  %v1064 = vunpack.c.l.b16 %v440
  %v1065 = vunpack.c.h.b16 %v440
  %v1066 = vunpack.c.l.b16 %v441
  %v1067 = vunpack.c.h.b16 %v441
  %v1068 = vunpack.c.l.b16 %v442
  %v1069 = vunpack.c.h.b16 %v442
  %v1070 = vunpack.c.l.b16 %v443
  %v1071 = vunpack.c.h.b16 %v443
  %v1072 = vunpack.c.l.b16 %v444
  %v1073 = vunpack.c.h.b16 %v444
  %v1074 = vunpack.c.l.b16 %v445
  %v1075 = vunpack.c.h.b16 %v445
  %v1076 = vunpack.c.l.b16 %v446
  %v1077 = vunpack.c.h.b16 %v446
  %v1078 = vunpack.c.l.b16 %v447
  %v1079 = vunpack.c.h.b16 %v447
  %v1080 = vunpack.c.l.b16 %v448
  %v1081 = vunpack.c.h.b16 %v448
  %v1082 = vpack.c.b16 %v694, %v690
  %v1083 = vpack.c.b16 %v695, %v691
  %v1084 = vpack.c.b16 %v696, %v692
  %v1085 = vpack.c.b16 %v697, %v693
  %v1086 = vpack.c.b16 %v702, %v698
  %v1087 = vpack.c.b16 %v703, %v699
  %v1088 = vpack.c.b16 %v704, %v700
  %v1089 = vpack.c.b16 %v705, %v701
  %v1090 = vpack.c.b16 %v710, %v706
  %v1091 = vpack.c.b16 %v711, %v707
  %v1092 = vpack.c.b16 %v712, %v708
  %v1093 = vpack.c.b16 %v713, %v709
  %v1094 = vpack.c.b16 %v718, %v714
  %v1095 = vpack.c.b16 %v719, %v715
  %v1096 = vpack.c.b16 %v720, %v716
  %v1097 = vpack.c.b16 %v721, %v717
  %v1098 = vpack.c.b16 %v726, %v722
  %v1099 = vpack.c.b16 %v727, %v723
  %v1100 = vpack.c.b16 %v728, %v724
  %v1101 = vpack.c.b16 %v729, %v725
  %v1102 = vpack.c.b16 %v734, %v730
  %v1103 = vpack.c.b16 %v735, %v731
  %v1104 = vpack.c.b16 %v736, %v732
  %v1105 = vpack.c.b16 %v737, %v733
  %v1106 = vpack.c.b16 %v742, %v738
  %v1107 = vpack.c.b16 %v743, %v739
  %v1108 = vpack.c.b16 %v744, %v740
  %v1109 = vpack.c.b16 %v745, %v741
  %v1110 = vpack.c.b16 %v750, %v746
  %v1111 = vpack.c.b16 %v751, %v747
  %v1112 = vpack.c.b16 %v752, %v748
  %v1113 = vpack.c.b16 %v753, %v749
  %v1114 = vpack.c.b16 %v758, %v754
  %v1115 = vpack.c.b16 %v759, %v755
  %v1116 = vpack.c.b16 %v760, %v756
  %v1117 = vpack.c.b16 %v761, %v757
  %v1118 = vpack.c.b16 %v766, %v762
  %v1119 = vpack.c.b16 %v767, %v763
  %v1120 = vpack.c.b16 %v768, %v764
  %v1121 = vpack.c.b16 %v769, %v765
  %v1122 = vpack.c.b16 %v774, %v770
  %v1123 = vpack.c.b16 %v775, %v771
  %v1124 = vpack.c.b16 %v776, %v772
  %v1125 = vpack.c.b16 %v777, %v773
  %v1126 = vpack.c.b16 %v782, %v778
  %v1127 = vpack.c.b16 %v783, %v779
  %v1128 = vpack.c.b16 %v784, %v780
  %v1129 = vpack.c.b16 %v785, %v781
  %v1130 = vpack.c.b16 %v790, %v786
  %v1131 = vpack.c.b16 %v791, %v787
  %v1132 = vpack.c.b16 %v792, %v788
  %v1133 = vpack.c.b16 %v793, %v789
  %v1134 = vpack.c.b16 %v798, %v794
  %v1135 = vpack.c.b16 %v799, %v795
  %v1136 = vpack.c.b16 %v800, %v796
  %v1137 = vpack.c.b16 %v801, %v797
  %v1138 = vpack.c.b16 %v806, %v802
  %v1139 = vpack.c.b16 %v807, %v803
  %v1140 = vpack.c.b16 %v808, %v804
  %v1141 = vpack.c.b16 %v809, %v805
  %v1142 = vpack.c.b16 %v814, %v810
  %v1143 = vpack.c.b16 %v815, %v811
  %v1144 = vpack.c.b16 %v816, %v812
  %v1145 = vpack.c.b16 %v817, %v813
  %v1146 = vpack.c.b16 %v822, %v818
  %v1147 = vpack.c.b16 %v823, %v819
  %v1148 = vpack.c.b16 %v824, %v820
  %v1149 = vpack.c.b16 %v825, %v821
  %v1150 = vpack.c.b16 %v830, %v826
  %v1151 = vpack.c.b16 %v831, %v827
  %v1152 = vpack.c.b16 %v832, %v828
  %v1153 = vpack.c.b16 %v833, %v829
  %v1154 = vpack.c.b16 %v838, %v834
  %v1155 = vpack.c.b16 %v839, %v835
  %v1156 = vpack.c.b16 %v840, %v836
  %v1157 = vpack.c.b16 %v841, %v837
  %v1158 = vpack.c.b16 %v846, %v842
  %v1159 = vpack.c.b16 %v847, %v843
  %v1160 = vpack.c.b16 %v848, %v844
  %v1161 = vpack.c.b16 %v849, %v845
  %v1162 = vpack.c.b16 %v854, %v850
  %v1163 = vpack.c.b16 %v855, %v851
  %v1164 = vpack.c.b16 %v856, %v852
  %v1165 = vpack.c.b16 %v857, %v853
  %v1166 = vpack.c.b16 %v862, %v858
  %v1167 = vpack.c.b16 %v863, %v859
  %v1168 = vpack.c.b16 %v864, %v860
  %v1169 = vpack.c.b16 %v865, %v861
  %v1170 = vpack.c.b16 %v870, %v866
  %v1171 = vpack.c.b16 %v871, %v867
  %v1172 = vpack.c.b16 %v872, %v868
  %v1173 = vpack.c.b16 %v873, %v869
  %v1174 = vpack.c.b16 %v878, %v874
  %v1175 = vpack.c.b16 %v879, %v875
  %v1176 = vpack.c.b16 %v880, %v876
  %v1177 = vpack.c.b16 %v881, %v877
  %v1178 = vpack.c.b16 %v886, %v882
  %v1179 = vpack.c.b16 %v887, %v883
  %v1180 = vpack.c.b16 %v888, %v884
  %v1181 = vpack.c.b16 %v889, %v885
  %v1182 = vpack.c.b16 %v894, %v890
  %v1183 = vpack.c.b16 %v895, %v891
  %v1184 = vpack.c.b16 %v896, %v892
  %v1185 = vpack.c.b16 %v897, %v893
  %v1186 = vpack.c.b16 %v902, %v898
  %v1187 = vpack.c.b16 %v903, %v899
  %v1188 = vpack.c.b16 %v904, %v900
  %v1189 = vpack.c.b16 %v905, %v901
  %v1190 = vpack.c.b16 %v910, %v906
  %v1191 = vpack.c.b16 %v911, %v907
  %v1192 = vpack.c.b16 %v912, %v908
  %v1193 = vpack.c.b16 %v913, %v909
  %v1194 = vpack.c.b16 %v918, %v914
  %v1195 = vpack.c.b16 %v919, %v915
  %v1196 = vpack.c.b16 %v920, %v916
  %v1197 = vpack.c.b16 %v921, %v917
  %v1198 = vpack.c.b16 %v926, %v922
  %v1199 = vpack.c.b16 %v927, %v923
  %v1200 = vpack.c.b16 %v928, %v924
  %v1201 = vpack.c.b16 %v929, %v925
  %v1202 = vpack.c.b16 %v934, %v930
  %v1203 = vpack.c.b16 %v935, %v931
  %v1204 = vpack.c.b16 %v936, %v932
  %v1205 = vpack.c.b16 %v937, %v933
  %v1206 = vpack.c.b16 %v942, %v938
  %v1207 = vpack.c.b16 %v943, %v939
  %v1208 = vpack.c.b16 %v944, %v940
  %v1209 = vpack.c.b16 %v945, %v941
  %v1210 = vpack.c.b16 %v950, %v946
  %v1211 = vpack.c.b16 %v951, %v947
  %v1212 = vpack.c.b16 %v952, %v948
  %v1213 = vpack.c.b16 %v953, %v949
  %v1214 = vpack.c.b16 %v958, %v954
  %v1215 = vpack.c.b16 %v959, %v955
  %v1216 = vpack.c.b16 %v960, %v956
  %v1217 = vpack.c.b16 %v961, %v957
  %v1218 = vpack.c.b16 %v966, %v962
  %v1219 = vpack.c.b16 %v967, %v963
  %v1220 = vpack.c.b16 %v968, %v964
  %v1221 = vpack.c.b16 %v969, %v965
  %v1222 = vpack.c.b16 %v974, %v970
  %v1223 = vpack.c.b16 %v975, %v971
  %v1224 = vpack.c.b16 %v976, %v972
  %v1225 = vpack.c.b16 %v977, %v973
  %v1226 = vpack.c.b16 %v982, %v978
  %v1227 = vpack.c.b16 %v983, %v979
  %v1228 = vpack.c.b16 %v984, %v980
  %v1229 = vpack.c.b16 %v985, %v981
  %v1230 = vpack.c.b16 %v990, %v986
  %v1231 = vpack.c.b16 %v991, %v987
  %v1232 = vpack.c.b16 %v992, %v988
  %v1233 = vpack.c.b16 %v993, %v989
  %v1234 = vpack.c.b16 %v998, %v994
  %v1235 = vpack.c.b16 %v999, %v995
  %v1236 = vpack.c.b16 %v1000, %v996
  %v1237 = vpack.c.b16 %v1001, %v997
  %v1238 = vpack.c.b16 %v1006, %v1002
  %v1239 = vpack.c.b16 %v1007, %v1003
  %v1240 = vpack.c.b16 %v1008, %v1004
  %v1241 = vpack.c.b16 %v1009, %v1005
  %v1242 = vpack.c.b16 %v1014, %v1010
  %v1243 = vpack.c.b16 %v1015, %v1011
  %v1244 = vpack.c.b16 %v1016, %v1012
  %v1245 = vpack.c.b16 %v1017, %v1013
  %v1246 = vpack.c.b16 %v1022, %v1018
  %v1247 = vpack.c.b16 %v1023, %v1019
  %v1248 = vpack.c.b16 %v1024, %v1020
  %v1249 = vpack.c.b16 %v1025, %v1021
  %v1250 = vpack.c.b16 %v1030, %v1026
  %v1251 = vpack.c.b16 %v1031, %v1027
  %v1252 = vpack.c.b16 %v1032, %v1028
  %v1253 = vpack.c.b16 %v1033, %v1029
  %v1254 = vpack.c.b16 %v1038, %v1034
  %v1255 = vpack.c.b16 %v1039, %v1035
  %v1256 = vpack.c.b16 %v1040, %v1036
  %v1257 = vpack.c.b16 %v1041, %v1037
  %v1258 = vpack.c.b16 %v1046, %v1042
  %v1259 = vpack.c.b16 %v1047, %v1043
  %v1260 = vpack.c.b16 %v1048, %v1044
  %v1261 = vpack.c.b16 %v1049, %v1045
  %v1262 = vpack.c.b16 %v1054, %v1050
  %v1263 = vpack.c.b16 %v1055, %v1051
  %v1264 = vpack.c.b16 %v1056, %v1052
  %v1265 = vpack.c.b16 %v1057, %v1053
  %v1266 = vpack.c.b16 %v1062, %v1058
  %v1267 = vpack.c.b16 %v1063, %v1059
  %v1268 = vpack.c.b16 %v1064, %v1060
  %v1269 = vpack.c.b16 %v1065, %v1061
  %v1270 = vpack.c.b16 %v1070, %v1066
  %v1271 = vpack.c.b16 %v1071, %v1067
  %v1272 = vpack.c.b16 %v1072, %v1068
  %v1273 = vpack.c.b16 %v1073, %v1069
  %v1274 = vpack.c.b16 %v1078, %v1074
  %v1275 = vpack.c.b16 %v1079, %v1075
  %v1276 = vpack.c.b16 %v1080, %v1076
  %v1277 = vpack.c.b16 %v1081, %v1077
  %vm1474 = vcmask 130048
  %v1476 = vsel %vm1474, %v487, 0
  %1478 = vmatpush.bf16.msra.mxu0 %v1110
  %1479 = vmatpush.bf16.msra.mxu0 %v1106
  %1480 = vmatpush.bf16.msra.mxu0 %v1102
  %1481 = vmatpush.bf16.msra.mxu0 %v1098
  %1482 = vmatpush.bf16.msra.mxu0 %v1094
  %1483 = vmatpush.bf16.msra.mxu0 %v1090
  %1484 = vmatpush.bf16.msra.mxu0 %v1086
  %1485 = vmatpush.bf16.msra.mxu0 %v1082
  %1486 = vmatmul.bf16.gmra.mxu0 %v481
  %v1487 = vpop.f32.mrf.mxu0
  %v1488 = vadd.f32 %v451, %v1487
  %v1489 = vpop.f32.mrf.mxu0
  %v1490 = vadd.f32 %v451, %v1489
  %1491 = vdwg.mxu0
  %1492 = vmatpush.bf16.msra.mxu0 %v1142
  %1493 = vmatpush.bf16.msra.mxu0 %v1138
  %1494 = vmatpush.bf16.msra.mxu0 %v1134
  %1495 = vmatpush.bf16.msra.mxu0 %v1130
  %1496 = vmatpush.bf16.msra.mxu0 %v1126
  %1497 = vmatpush.bf16.msra.mxu0 %v1122
  %1498 = vmatpush.bf16.msra.mxu0 %v1118
  %1499 = vmatpush.bf16.msra.mxu0 %v1114
  %1500 = vmatmul.bf16.gmra.mxu0 %v482
  %v1501 = vpop.f32.mrf.mxu0
  %v1502 = vadd.f32 %v1488, %v1501
  %v1503 = vpop.f32.mrf.mxu0
  %v1504 = vadd.f32 %v1490, %v1503
  %1505 = vdwg.mxu0
  %1506 = vmatpush.bf16.msra.mxu0 %v1174
  %1507 = vmatpush.bf16.msra.mxu0 %v1170
  %1508 = vmatpush.bf16.msra.mxu0 %v1166
  %1509 = vmatpush.bf16.msra.mxu0 %v1162
  %1510 = vmatpush.bf16.msra.mxu0 %v1158
  %1511 = vmatpush.bf16.msra.mxu0 %v1154
  %1512 = vmatpush.bf16.msra.mxu0 %v1150
  %1513 = vmatpush.bf16.msra.mxu0 %v1146
  %1514 = vmatmul.bf16.gmra.mxu0 %v483
  %v1515 = vpop.f32.mrf.mxu0
  %v1516 = vadd.f32 %v1502, %v1515
  %v1517 = vpop.f32.mrf.mxu0
  %v1518 = vadd.f32 %v1504, %v1517
  %1519 = vdwg.mxu0
  %1520 = vmatpush.bf16.msra.mxu0 %v1206
  %1521 = vmatpush.bf16.msra.mxu0 %v1202
  %1522 = vmatpush.bf16.msra.mxu0 %v1198
  %1523 = vmatpush.bf16.msra.mxu0 %v1194
  %1524 = vmatpush.bf16.msra.mxu0 %v1190
  %1525 = vmatpush.bf16.msra.mxu0 %v1186
  %1526 = vmatpush.bf16.msra.mxu0 %v1182
  %1527 = vmatpush.bf16.msra.mxu0 %v1178
  %1528 = vmatmul.bf16.gmra.mxu0 %v484
  %v1529 = vpop.f32.mrf.mxu0
  %v1530 = vadd.f32 %v1516, %v1529
  %v1531 = vpop.f32.mrf.mxu0
  %v1532 = vadd.f32 %v1518, %v1531
  %1533 = vdwg.mxu0
  %1534 = vmatpush.bf16.msra.mxu0 %v1238
  %1535 = vmatpush.bf16.msra.mxu0 %v1234
  %1536 = vmatpush.bf16.msra.mxu0 %v1230
  %1537 = vmatpush.bf16.msra.mxu0 %v1226
  %1538 = vmatpush.bf16.msra.mxu0 %v1222
  %1539 = vmatpush.bf16.msra.mxu0 %v1218
  %1540 = vmatpush.bf16.msra.mxu0 %v1214
  %1541 = vmatpush.bf16.msra.mxu0 %v1210
  %1542 = vmatmul.bf16.gmra.mxu0 %v485
  %v1543 = vpop.f32.mrf.mxu0
  %v1544 = vadd.f32 %v1530, %v1543
  %v1545 = vpop.f32.mrf.mxu0
  %v1546 = vadd.f32 %v1532, %v1545
  %1547 = vdwg.mxu0
  %1548 = vmatpush.bf16.msra.mxu0 %v1270
  %1549 = vmatpush.bf16.msra.mxu0 %v1266
  %1550 = vmatpush.bf16.msra.mxu0 %v1262
  %1551 = vmatpush.bf16.msra.mxu0 %v1258
  %1552 = vmatpush.bf16.msra.mxu0 %v1254
  %1553 = vmatpush.bf16.msra.mxu0 %v1250
  %1554 = vmatpush.bf16.msra.mxu0 %v1246
  %1555 = vmatpush.bf16.msra.mxu0 %v1242
  %1556 = vmatmul.bf16.gmra.mxu0 %v486
  %v1557 = vpop.f32.mrf.mxu0
  %v1558 = vadd.f32 %v1544, %v1557
  %v1559 = vpop.f32.mrf.mxu0
  %v1560 = vadd.f32 %v1546, %v1559
  %1561 = vdwg.mxu0
  %1562 = vmatpush.bf16.msra.mxu0 0
  %1563 = vmatpush.bf16.msra.mxu0 0
  %1564 = vmatpush.bf16.msra.mxu0 0
  %1565 = vmatpush.bf16.msra.mxu0 0
  %1566 = vmatpush.bf16.msra.mxu0 0
  %1567 = vmatpush.bf16.msra.mxu0 0
  %1568 = vmatpush.bf16.msra.mxu0 0
  %1569 = vmatpush.bf16.msra.mxu0 %v1274
  %1570 = vmatmul.bf16.gmra.mxu0 %v1476
  %v1571 = vpop.f32.mrf.mxu0
  %v1572 = vadd.f32 %v1558, %v1571
  %v1573 = vpop.f32.mrf.mxu0
  %v1574 = vadd.f32 %v1560, %v1573
  %1575 = vdwg.mxu0
  %1576 = vmatpush.bf16.msra.mxu0 %v1111
  %1577 = vmatpush.bf16.msra.mxu0 %v1107
  %1578 = vmatpush.bf16.msra.mxu0 %v1103
  %1579 = vmatpush.bf16.msra.mxu0 %v1099
  %1580 = vmatpush.bf16.msra.mxu0 %v1095
  %1581 = vmatpush.bf16.msra.mxu0 %v1091
  %1582 = vmatpush.bf16.msra.mxu0 %v1087
  %1583 = vmatpush.bf16.msra.mxu0 %v1083
  %1584 = vmatmul.bf16.gmra.mxu0 %v481
  %v1585 = vpop.f32.mrf.mxu0
  %v1586 = vadd.f32 %v452, %v1585
  %v1587 = vpop.f32.mrf.mxu0
  %v1588 = vadd.f32 %v452, %v1587
  %1589 = vdwg.mxu0
  %1590 = vmatpush.bf16.msra.mxu0 %v1143
  %1591 = vmatpush.bf16.msra.mxu0 %v1139
  %1592 = vmatpush.bf16.msra.mxu0 %v1135
  %1593 = vmatpush.bf16.msra.mxu0 %v1131
  %1594 = vmatpush.bf16.msra.mxu0 %v1127
  %1595 = vmatpush.bf16.msra.mxu0 %v1123
  %1596 = vmatpush.bf16.msra.mxu0 %v1119
  %1597 = vmatpush.bf16.msra.mxu0 %v1115
  %1598 = vmatmul.bf16.gmra.mxu0 %v482
  %v1599 = vpop.f32.mrf.mxu0
  %v1600 = vadd.f32 %v1586, %v1599
  %v1601 = vpop.f32.mrf.mxu0
  %v1602 = vadd.f32 %v1588, %v1601
  %1603 = vdwg.mxu0
  %1604 = vmatpush.bf16.msra.mxu0 %v1175
  %1605 = vmatpush.bf16.msra.mxu0 %v1171
  %1606 = vmatpush.bf16.msra.mxu0 %v1167
  %1607 = vmatpush.bf16.msra.mxu0 %v1163
  %1608 = vmatpush.bf16.msra.mxu0 %v1159
  %1609 = vmatpush.bf16.msra.mxu0 %v1155
  %1610 = vmatpush.bf16.msra.mxu0 %v1151
  %1611 = vmatpush.bf16.msra.mxu0 %v1147
  %1612 = vmatmul.bf16.gmra.mxu0 %v483
  %v1613 = vpop.f32.mrf.mxu0
  %v1614 = vadd.f32 %v1600, %v1613
  %v1615 = vpop.f32.mrf.mxu0
  %v1616 = vadd.f32 %v1602, %v1615
  %1617 = vdwg.mxu0
  %1618 = vmatpush.bf16.msra.mxu0 %v1207
  %1619 = vmatpush.bf16.msra.mxu0 %v1203
  %1620 = vmatpush.bf16.msra.mxu0 %v1199
  %1621 = vmatpush.bf16.msra.mxu0 %v1195
  %1622 = vmatpush.bf16.msra.mxu0 %v1191
  %1623 = vmatpush.bf16.msra.mxu0 %v1187
  %1624 = vmatpush.bf16.msra.mxu0 %v1183
  %1625 = vmatpush.bf16.msra.mxu0 %v1179
  %1626 = vmatmul.bf16.gmra.mxu0 %v484
  %v1627 = vpop.f32.mrf.mxu0
  %v1628 = vadd.f32 %v1614, %v1627
  %v1629 = vpop.f32.mrf.mxu0
  %v1630 = vadd.f32 %v1616, %v1629
  %1631 = vdwg.mxu0
  %1632 = vmatpush.bf16.msra.mxu0 %v1239
  %1633 = vmatpush.bf16.msra.mxu0 %v1235
  %1634 = vmatpush.bf16.msra.mxu0 %v1231
  %1635 = vmatpush.bf16.msra.mxu0 %v1227
  %1636 = vmatpush.bf16.msra.mxu0 %v1223
  %1637 = vmatpush.bf16.msra.mxu0 %v1219
  %1638 = vmatpush.bf16.msra.mxu0 %v1215
  %1639 = vmatpush.bf16.msra.mxu0 %v1211
  %1640 = vmatmul.bf16.gmra.mxu0 %v485
  %v1641 = vpop.f32.mrf.mxu0
  %v1642 = vadd.f32 %v1628, %v1641
  %v1643 = vpop.f32.mrf.mxu0
  %v1644 = vadd.f32 %v1630, %v1643
  %1645 = vdwg.mxu0
  %1646 = vmatpush.bf16.msra.mxu0 %v1271
  %1647 = vmatpush.bf16.msra.mxu0 %v1267
  %1648 = vmatpush.bf16.msra.mxu0 %v1263
  %1649 = vmatpush.bf16.msra.mxu0 %v1259
  %1650 = vmatpush.bf16.msra.mxu0 %v1255
  %1651 = vmatpush.bf16.msra.mxu0 %v1251
  %1652 = vmatpush.bf16.msra.mxu0 %v1247
  %1653 = vmatpush.bf16.msra.mxu0 %v1243
  %1654 = vmatmul.bf16.gmra.mxu0 %v486
  %v1655 = vpop.f32.mrf.mxu0
  %v1656 = vadd.f32 %v1642, %v1655
  %v1657 = vpop.f32.mrf.mxu0
  %v1658 = vadd.f32 %v1644, %v1657
  %1659 = vdwg.mxu0
  %1660 = vmatpush.bf16.msra.mxu0 0
  %1661 = vmatpush.bf16.msra.mxu0 0
  %1662 = vmatpush.bf16.msra.mxu0 0
  %1663 = vmatpush.bf16.msra.mxu0 0
  %1664 = vmatpush.bf16.msra.mxu0 0
  %1665 = vmatpush.bf16.msra.mxu0 0
  %1666 = vmatpush.bf16.msra.mxu0 0
  %1667 = vmatpush.bf16.msra.mxu0 %v1275
  %1668 = vmatmul.bf16.gmra.mxu0 %v1476
  %v1669 = vpop.f32.mrf.mxu0
  %v1670 = vadd.f32 %v1656, %v1669
  %v1671 = vpop.f32.mrf.mxu0
  %v1672 = vadd.f32 %v1658, %v1671
  %1673 = vdwg.mxu0
  %1674 = vmatpush.bf16.msra.mxu0 %v1112
  %1675 = vmatpush.bf16.msra.mxu0 %v1108
  %1676 = vmatpush.bf16.msra.mxu0 %v1104
  %1677 = vmatpush.bf16.msra.mxu0 %v1100
  %1678 = vmatpush.bf16.msra.mxu0 %v1096
  %1679 = vmatpush.bf16.msra.mxu0 %v1092
  %1680 = vmatpush.bf16.msra.mxu0 %v1088
  %1681 = vmatpush.bf16.msra.mxu0 %v1084
  %1682 = vmatmul.bf16.gmra.mxu0 %v481
  %v1683 = vpop.f32.mrf.mxu0
  %v1684 = vadd.f32 %v453, %v1683
  %v1685 = vpop.f32.mrf.mxu0
  %v1686 = vadd.f32 %v453, %v1685
  %1687 = vdwg.mxu0
  %1688 = vmatpush.bf16.msra.mxu0 %v1144
  %1689 = vmatpush.bf16.msra.mxu0 %v1140
  %1690 = vmatpush.bf16.msra.mxu0 %v1136
  %1691 = vmatpush.bf16.msra.mxu0 %v1132
  %1692 = vmatpush.bf16.msra.mxu0 %v1128
  %1693 = vmatpush.bf16.msra.mxu0 %v1124
  %1694 = vmatpush.bf16.msra.mxu0 %v1120
  %1695 = vmatpush.bf16.msra.mxu0 %v1116
  %1696 = vmatmul.bf16.gmra.mxu0 %v482
  %v1697 = vpop.f32.mrf.mxu0
  %v1698 = vadd.f32 %v1684, %v1697
  %v1699 = vpop.f32.mrf.mxu0
  %v1700 = vadd.f32 %v1686, %v1699
  %1701 = vdwg.mxu0
  %1702 = vmatpush.bf16.msra.mxu0 %v1176
  %1703 = vmatpush.bf16.msra.mxu0 %v1172
  %1704 = vmatpush.bf16.msra.mxu0 %v1168
  %1705 = vmatpush.bf16.msra.mxu0 %v1164
  %1706 = vmatpush.bf16.msra.mxu0 %v1160
  %1707 = vmatpush.bf16.msra.mxu0 %v1156
  %1708 = vmatpush.bf16.msra.mxu0 %v1152
  %1709 = vmatpush.bf16.msra.mxu0 %v1148
  %1710 = vmatmul.bf16.gmra.mxu0 %v483
  %v1711 = vpop.f32.mrf.mxu0
  %v1712 = vadd.f32 %v1698, %v1711
  %v1713 = vpop.f32.mrf.mxu0
  %v1714 = vadd.f32 %v1700, %v1713
  %1715 = vdwg.mxu0
  %1716 = vmatpush.bf16.msra.mxu0 %v1208
  %1717 = vmatpush.bf16.msra.mxu0 %v1204
  %1718 = vmatpush.bf16.msra.mxu0 %v1200
  %1719 = vmatpush.bf16.msra.mxu0 %v1196
  %1720 = vmatpush.bf16.msra.mxu0 %v1192
  %1721 = vmatpush.bf16.msra.mxu0 %v1188
  %1722 = vmatpush.bf16.msra.mxu0 %v1184
  %1723 = vmatpush.bf16.msra.mxu0 %v1180
  %1724 = vmatmul.bf16.gmra.mxu0 %v484
  %v1725 = vpop.f32.mrf.mxu0
  %v1726 = vadd.f32 %v1712, %v1725
  %v1727 = vpop.f32.mrf.mxu0
  %v1728 = vadd.f32 %v1714, %v1727
  %1729 = vdwg.mxu0
  %1730 = vmatpush.bf16.msra.mxu0 %v1240
  %1731 = vmatpush.bf16.msra.mxu0 %v1236
  %1732 = vmatpush.bf16.msra.mxu0 %v1232
  %1733 = vmatpush.bf16.msra.mxu0 %v1228
  %1734 = vmatpush.bf16.msra.mxu0 %v1224
  %1735 = vmatpush.bf16.msra.mxu0 %v1220
  %1736 = vmatpush.bf16.msra.mxu0 %v1216
  %1737 = vmatpush.bf16.msra.mxu0 %v1212
  %1738 = vmatmul.bf16.gmra.mxu0 %v485
  %v1739 = vpop.f32.mrf.mxu0
  %v1740 = vadd.f32 %v1726, %v1739
  %v1741 = vpop.f32.mrf.mxu0
  %v1742 = vadd.f32 %v1728, %v1741
  %1743 = vdwg.mxu0
  %1744 = vmatpush.bf16.msra.mxu0 %v1272
  %1745 = vmatpush.bf16.msra.mxu0 %v1268
  %1746 = vmatpush.bf16.msra.mxu0 %v1264
  %1747 = vmatpush.bf16.msra.mxu0 %v1260
  %1748 = vmatpush.bf16.msra.mxu0 %v1256
  %1749 = vmatpush.bf16.msra.mxu0 %v1252
  %1750 = vmatpush.bf16.msra.mxu0 %v1248
  %1751 = vmatpush.bf16.msra.mxu0 %v1244
  %1752 = vmatmul.bf16.gmra.mxu0 %v486
  %v1753 = vpop.f32.mrf.mxu0
  %v1754 = vadd.f32 %v1740, %v1753
  %v1755 = vpop.f32.mrf.mxu0
  %v1756 = vadd.f32 %v1742, %v1755
  %1757 = vdwg.mxu0
  %1758 = vmatpush.bf16.msra.mxu0 0
  %1759 = vmatpush.bf16.msra.mxu0 0
  %1760 = vmatpush.bf16.msra.mxu0 0
  %1761 = vmatpush.bf16.msra.mxu0 0
  %1762 = vmatpush.bf16.msra.mxu0 0
  %1763 = vmatpush.bf16.msra.mxu0 0
  %1764 = vmatpush.bf16.msra.mxu0 0
  %1765 = vmatpush.bf16.msra.mxu0 %v1276
  %1766 = vmatmul.bf16.gmra.mxu0 %v1476
  %v1767 = vpop.f32.mrf.mxu0
  %v1768 = vadd.f32 %v1754, %v1767
  %v1769 = vpop.f32.mrf.mxu0
  %v1770 = vadd.f32 %v1756, %v1769
  %1771 = vdwg.mxu0
  %1772 = vmatpush.bf16.msra.mxu0 %v1113
  %1773 = vmatpush.bf16.msra.mxu0 %v1109
  %1774 = vmatpush.bf16.msra.mxu0 %v1105
  %1775 = vmatpush.bf16.msra.mxu0 %v1101
  %1776 = vmatpush.bf16.msra.mxu0 %v1097
  %1777 = vmatpush.bf16.msra.mxu0 %v1093
  %1778 = vmatpush.bf16.msra.mxu0 %v1089
  %1779 = vmatpush.bf16.msra.mxu0 %v1085
  %1780 = vmatmul.bf16.gmra.mxu0 %v481
  %v1781 = vpop.f32.mrf.mxu0
  %v1782 = vadd.f32 %v454, %v1781
  %v1783 = vpop.f32.mrf.mxu0
  %v1784 = vadd.f32 %v454, %v1783
  %1785 = vdwg.mxu0
  %1786 = vmatpush.bf16.msra.mxu0 %v1145
  %1787 = vmatpush.bf16.msra.mxu0 %v1141
  %1788 = vmatpush.bf16.msra.mxu0 %v1137
  %1789 = vmatpush.bf16.msra.mxu0 %v1133
  %1790 = vmatpush.bf16.msra.mxu0 %v1129
  %1791 = vmatpush.bf16.msra.mxu0 %v1125
  %1792 = vmatpush.bf16.msra.mxu0 %v1121
  %1793 = vmatpush.bf16.msra.mxu0 %v1117
  %1794 = vmatmul.bf16.gmra.mxu0 %v482
  %v1795 = vpop.f32.mrf.mxu0
  %v1796 = vadd.f32 %v1782, %v1795
  %v1797 = vpop.f32.mrf.mxu0
  %v1798 = vadd.f32 %v1784, %v1797
  %1799 = vdwg.mxu0
  %1800 = vmatpush.bf16.msra.mxu0 %v1177
  %1801 = vmatpush.bf16.msra.mxu0 %v1173
  %1802 = vmatpush.bf16.msra.mxu0 %v1169
  %1803 = vmatpush.bf16.msra.mxu0 %v1165
  %1804 = vmatpush.bf16.msra.mxu0 %v1161
  %1805 = vmatpush.bf16.msra.mxu0 %v1157
  %1806 = vmatpush.bf16.msra.mxu0 %v1153
  %1807 = vmatpush.bf16.msra.mxu0 %v1149
  %1808 = vmatmul.bf16.gmra.mxu0 %v483
  %v1809 = vpop.f32.mrf.mxu0
  %v1810 = vadd.f32 %v1796, %v1809
  %v1811 = vpop.f32.mrf.mxu0
  %v1812 = vadd.f32 %v1798, %v1811
  %1813 = vdwg.mxu0
  %1814 = vmatpush.bf16.msra.mxu0 %v1209
  %1815 = vmatpush.bf16.msra.mxu0 %v1205
  %1816 = vmatpush.bf16.msra.mxu0 %v1201
  %1817 = vmatpush.bf16.msra.mxu0 %v1197
  %1818 = vmatpush.bf16.msra.mxu0 %v1193
  %1819 = vmatpush.bf16.msra.mxu0 %v1189
  %1820 = vmatpush.bf16.msra.mxu0 %v1185
  %1821 = vmatpush.bf16.msra.mxu0 %v1181
  %1822 = vmatmul.bf16.gmra.mxu0 %v484
  %v1823 = vpop.f32.mrf.mxu0
  %v1824 = vadd.f32 %v1810, %v1823
  %v1825 = vpop.f32.mrf.mxu0
  %v1826 = vadd.f32 %v1812, %v1825
  %1827 = vdwg.mxu0
  %1828 = vmatpush.bf16.msra.mxu0 %v1241
  %1829 = vmatpush.bf16.msra.mxu0 %v1237
  %1830 = vmatpush.bf16.msra.mxu0 %v1233
  %1831 = vmatpush.bf16.msra.mxu0 %v1229
  %1832 = vmatpush.bf16.msra.mxu0 %v1225
  %1833 = vmatpush.bf16.msra.mxu0 %v1221
  %1834 = vmatpush.bf16.msra.mxu0 %v1217
  %1835 = vmatpush.bf16.msra.mxu0 %v1213
  %1836 = vmatmul.bf16.gmra.mxu0 %v485
  %v1837 = vpop.f32.mrf.mxu0
  %v1838 = vadd.f32 %v1824, %v1837
  %v1839 = vpop.f32.mrf.mxu0
  %v1840 = vadd.f32 %v1826, %v1839
  %1841 = vdwg.mxu0
  %1842 = vmatpush.bf16.msra.mxu0 %v1273
  %1843 = vmatpush.bf16.msra.mxu0 %v1269
  %1844 = vmatpush.bf16.msra.mxu0 %v1265
  %1845 = vmatpush.bf16.msra.mxu0 %v1261
  %1846 = vmatpush.bf16.msra.mxu0 %v1257
  %1847 = vmatpush.bf16.msra.mxu0 %v1253
  %1848 = vmatpush.bf16.msra.mxu0 %v1249
  %1849 = vmatpush.bf16.msra.mxu0 %v1245
  %1850 = vmatmul.bf16.gmra.mxu0 %v486
  %v1851 = vpop.f32.mrf.mxu0
  %v1852 = vadd.f32 %v1838, %v1851
  %v1853 = vpop.f32.mrf.mxu0
  %v1854 = vadd.f32 %v1840, %v1853
  %1855 = vdwg.mxu0
  %1856 = vmatpush.bf16.msra.mxu0 0
  %1857 = vmatpush.bf16.msra.mxu0 0
  %1858 = vmatpush.bf16.msra.mxu0 0
  %1859 = vmatpush.bf16.msra.mxu0 0
  %1860 = vmatpush.bf16.msra.mxu0 0
  %1861 = vmatpush.bf16.msra.mxu0 0
  %1862 = vmatpush.bf16.msra.mxu0 0
  %1863 = vmatpush.bf16.msra.mxu0 %v1277
  %1864 = vmatmul.bf16.gmra.mxu0 %v1476
  %v1865 = vpop.f32.mrf.mxu0
  %v1866 = vadd.f32 %v1852, %v1865
  %v1867 = vpop.f32.mrf.mxu0
  %v1868 = vadd.f32 %v1854, %v1867
  %1869 = vdwg.mxu0
  %v1870 = vadd.f32 %v1572, %v111
  %v1871 = vadd.f32 %v1670, %v125
  %v1872 = vadd.f32 %v1768, %v139
  %v1873 = vadd.f32 %v1866, %v153
  %v1874 = vadd.f32 %v1574, %v113
  %v1875 = vadd.f32 %v1672, %v127
  %v1876 = vadd.f32 %v1770, %v141
  %v1877 = vadd.f32 %v1868, %v155
  %v1878 = vmax.f32 %v1870, 0.0
  %v1879 = vmax.f32 %v1871, 0.0
  %v1880 = vmax.f32 %v1872, 0.0
  %v1881 = vmax.f32 %v1873, 0.0
  %v1882 = vmax.f32 %v1874, 0.0
  %v1883 = vmax.f32 %v1875, 0.0
  %v1884 = vmax.f32 %v1876, 0.0
  %v1885 = vmax.f32 %v1877, 0.0
  %v1886 = vpack.c.bf16 %v1882, %v1878
  %v1887 = vpack.c.bf16 %v1883, %v1879
  %v1888 = vpack.c.bf16 %v1884, %v1880
  %v1889 = vpack.c.bf16 %v1885, %v1881
  %v1890 = vld [vmem:[%s6] sm:$0xf]
  %v1891 = vld [vmem:[%s6 + $0x4] sm:$0xf]
  %v1892 = vld [vmem:[%s6 + $0x8] sm:$0xf]
  %v1893 = vld [vmem:[%s6 + $0xc] sm:$0xf]
  %v1894 = vld [vmem:[%s6 + $0x10] sm:$0xf]
  %v1895 = vld [vmem:[%s6 + $0x14] sm:$0xf]
  %v1896 = vld [vmem:[%s6 + $0x18] sm:$0xf]
  %v1897 = vld [vmem:[%s6 + $0x1c] sm:$0xf]
  %v1898 = vld [vmem:[%s6 + $0x20] sm:$0xf]
  %v1899 = vld [vmem:[%s6 + $0x24] sm:$0xf]
  %v1900 = vld [vmem:[%s6 + $0x28] sm:$0xf]
  %v1901 = vld [vmem:[%s6 + $0x2c] sm:$0xf]
  %v1902 = vld [vmem:[%s6 + $0x30] sm:$0xf]
  %v1903 = vld [vmem:[%s6 + $0x34] sm:$0xf]
  %v1904 = vld [vmem:[%s6 + $0x38] sm:$0xf]
  %v1905 = vld [vmem:[%s6 + $0x3c] sm:$0xf]
  %v1906 = vld [vmem:[%s6 + $0x40] sm:$0xf]
  %v1907 = vld [vmem:[%s6 + $0x44] sm:$0xf]
  %v1908 = vld [vmem:[%s6 + $0x48] sm:$0xf]
  %v1909 = vld [vmem:[%s6 + $0x4c] sm:$0xf]
  %v1910 = vld [vmem:[%s6 + $0x50] sm:$0xf]
  %v1911 = vld [vmem:[%s6 + $0x54] sm:$0xf]
  %v1912 = vld [vmem:[%s6 + $0x58] sm:$0xf]
  %v1913 = vld [vmem:[%s6 + $0x5c] sm:$0xf]
  %v1914 = vld [vmem:[%s6 + $0x60] sm:$0xf]
  %v1915 = vld [vmem:[%s6 + $0x64] sm:$0xf]
  %v1916 = vld [vmem:[%s6 + $0x68] sm:$0xf]
  %v1917 = vld [vmem:[%s6 + $0x6c] sm:$0xf]
  %v1918 = vld [vmem:[%s6 + $0x70] sm:$0xf]
  %v1919 = vld [vmem:[%s6 + $0x74] sm:$0xf]
  %v1920 = vld [vmem:[%s6 + $0x78] sm:$0xf]
  %v1921 = vld [vmem:[%s6 + $0x7c] sm:$0xf]
  %v1922 = vld [vmem:[%s6 + $0x80] sm:$0xf]
  %v1923 = vld [vmem:[%s6 + $0x84] sm:$0xf]
  %v1924 = vld [vmem:[%s6 + $0x88] sm:$0xf]
  %v1925 = vld [vmem:[%s6 + $0x8c] sm:$0xf]
  %v1926 = vld [vmem:[%s6 + $0x90] sm:$0xf]
  %v1927 = vld [vmem:[%s6 + $0x94] sm:$0xf]
  %v1928 = vld [vmem:[%s6 + $0x98] sm:$0xf]
  %v1929 = vld [vmem:[%s6 + $0x9c] sm:$0xf]
  %v1930 = vld [vmem:[%s6 + $0xa0] sm:$0xf]
  %v1931 = vld [vmem:[%s6 + $0xa4] sm:$0xf]
  %v1932 = vld [vmem:[%s6 + $0xa8] sm:$0xf]
  %v1933 = vld [vmem:[%s6 + $0xac] sm:$0xf]
  %v1934 = vld [vmem:[%s6 + $0xb0] sm:$0xf]
  %v1935 = vld [vmem:[%s6 + $0xb4] sm:$0xf]
  %v1936 = vld [vmem:[%s6 + $0xb8] sm:$0xf]
  %v1937 = vld [vmem:[%s6 + $0xbc] sm:$0xf]
  %v1938 = vld [vmem:[%s6 + $0xc0] sm:$0xf]
  %v1939 = vld [vmem:[%s6 + $0xc4] sm:$0xf]
  %v1940 = vld [vmem:[%s7] sm:$0x1]
  %v1942 = vperm.slane %v1940, 0
  %v1994 = vunpack.c.l.b16 %v1890
  %v1995 = vunpack.c.l.b16 %v1891
  %v1996 = vunpack.c.l.b16 %v1892
  %v1997 = vunpack.c.l.b16 %v1893
  %v1998 = vunpack.c.l.b16 %v1894
  %v1999 = vunpack.c.l.b16 %v1895
  %v2000 = vunpack.c.l.b16 %v1896
  %v2001 = vunpack.c.l.b16 %v1897
  %v2002 = vunpack.c.l.b16 %v1898
  %v2003 = vunpack.c.l.b16 %v1899
  %v2004 = vunpack.c.l.b16 %v1900
  %v2005 = vunpack.c.l.b16 %v1901
  %v2006 = vunpack.c.l.b16 %v1902
  %v2007 = vunpack.c.l.b16 %v1903
  %v2008 = vunpack.c.l.b16 %v1904
  %v2009 = vunpack.c.l.b16 %v1905
  %v2010 = vunpack.c.l.b16 %v1906
  %v2011 = vunpack.c.l.b16 %v1907
  %v2012 = vunpack.c.l.b16 %v1908
  %v2013 = vunpack.c.l.b16 %v1909
  %v2014 = vunpack.c.l.b16 %v1910
  %v2015 = vunpack.c.l.b16 %v1911
  %v2016 = vunpack.c.l.b16 %v1912
  %v2017 = vunpack.c.l.b16 %v1913
  %v2018 = vunpack.c.l.b16 %v1914
  %v2019 = vunpack.c.l.b16 %v1915
  %v2020 = vunpack.c.l.b16 %v1916
  %v2021 = vunpack.c.l.b16 %v1917
  %v2022 = vunpack.c.l.b16 %v1918
  %v2023 = vunpack.c.l.b16 %v1919
  %v2024 = vunpack.c.l.b16 %v1920
  %v2025 = vunpack.c.l.b16 %v1921
  %v2026 = vunpack.c.l.b16 %v1922
  %v2027 = vunpack.c.l.b16 %v1923
  %v2028 = vunpack.c.l.b16 %v1924
  %v2029 = vunpack.c.l.b16 %v1925
  %v2030 = vunpack.c.l.b16 %v1926
  %v2031 = vunpack.c.l.b16 %v1927
  %v2032 = vunpack.c.l.b16 %v1928
  %v2033 = vunpack.c.l.b16 %v1929
  %v2034 = vunpack.c.l.b16 %v1930
  %v2035 = vunpack.c.l.b16 %v1931
  %v2036 = vunpack.c.l.b16 %v1932
  %v2037 = vunpack.c.l.b16 %v1933
  %v2038 = vunpack.c.l.b16 %v1934
  %v2039 = vunpack.c.l.b16 %v1935
  %v2040 = vunpack.c.l.b16 %v1936
  %v2041 = vunpack.c.l.b16 %v1937
  %v2042 = vunpack.c.l.b16 %v1938
  %v2043 = vunpack.c.l.b16 %v1939
  %v2044 = vpack.c.b16 %v1995, %v1994
  %v2045 = vpack.c.b16 %v1997, %v1996
  %v2046 = vpack.c.b16 %v1999, %v1998
  %v2047 = vpack.c.b16 %v2001, %v2000
  %v2048 = vpack.c.b16 %v2003, %v2002
  %v2049 = vpack.c.b16 %v2005, %v2004
  %v2050 = vpack.c.b16 %v2007, %v2006
  %v2051 = vpack.c.b16 %v2009, %v2008
  %v2052 = vpack.c.b16 %v2011, %v2010
  %v2053 = vpack.c.b16 %v2013, %v2012
  %v2054 = vpack.c.b16 %v2015, %v2014
  %v2055 = vpack.c.b16 %v2017, %v2016
  %v2056 = vpack.c.b16 %v2019, %v2018
  %v2057 = vpack.c.b16 %v2021, %v2020
  %v2058 = vpack.c.b16 %v2023, %v2022
  %v2059 = vpack.c.b16 %v2025, %v2024
  %v2060 = vpack.c.b16 %v2027, %v2026
  %v2061 = vpack.c.b16 %v2029, %v2028
  %v2062 = vpack.c.b16 %v2031, %v2030
  %v2063 = vpack.c.b16 %v2033, %v2032
  %v2064 = vpack.c.b16 %v2035, %v2034
  %v2065 = vpack.c.b16 %v2037, %v2036
  %v2066 = vpack.c.b16 %v2039, %v2038
  %v2067 = vpack.c.b16 %v2041, %v2040
  %v2068 = vpack.c.b16 %v2043, %v2042
  %v2095 = vsel %vm1474, %v1889, 0
  %2097 = vmatpush.bf16.msra.mxu0 %v2051
  %2098 = vmatpush.bf16.msra.mxu0 %v2050
  %2099 = vmatpush.bf16.msra.mxu0 %v2049
  %2100 = vmatpush.bf16.msra.mxu0 %v2048
  %2101 = vmatpush.bf16.msra.mxu0 %v2047
  %2102 = vmatpush.bf16.msra.mxu0 %v2046
  %2103 = vmatpush.bf16.msra.mxu0 %v2045
  %2104 = vmatpush.bf16.msra.mxu0 %v2044
  %2105 = vmatmul.bf16.gmra.mxu0 %v1886
  %v2106 = vpop.f32.mrf.mxu0
  %v2107 = vadd.f32 %v1942, %v2106
  %v2108 = vpop.f32.mrf.mxu0
  %v2109 = vadd.f32 %v1942, %v2108
  %2110 = vdwg.mxu0
  %2111 = vmatpush.bf16.msra.mxu0 %v2059
  %2112 = vmatpush.bf16.msra.mxu0 %v2058
  %2113 = vmatpush.bf16.msra.mxu0 %v2057
  %2114 = vmatpush.bf16.msra.mxu0 %v2056
  %2115 = vmatpush.bf16.msra.mxu0 %v2055
  %2116 = vmatpush.bf16.msra.mxu0 %v2054
  %2117 = vmatpush.bf16.msra.mxu0 %v2053
  %2118 = vmatpush.bf16.msra.mxu0 %v2052
  %2119 = vmatmul.bf16.gmra.mxu0 %v1887
  %v2120 = vpop.f32.mrf.mxu0
  %v2121 = vadd.f32 %v2107, %v2120
  %v2122 = vpop.f32.mrf.mxu0
  %v2123 = vadd.f32 %v2109, %v2122
  %2124 = vdwg.mxu0
  %2125 = vmatpush.bf16.msra.mxu0 %v2067
  %2126 = vmatpush.bf16.msra.mxu0 %v2066
  %2127 = vmatpush.bf16.msra.mxu0 %v2065
  %2128 = vmatpush.bf16.msra.mxu0 %v2064
  %2129 = vmatpush.bf16.msra.mxu0 %v2063
  %2130 = vmatpush.bf16.msra.mxu0 %v2062
  %2131 = vmatpush.bf16.msra.mxu0 %v2061
  %2132 = vmatpush.bf16.msra.mxu0 %v2060
  %2133 = vmatmul.bf16.gmra.mxu0 %v1888
  %v2134 = vpop.f32.mrf.mxu0
  %v2135 = vadd.f32 %v2121, %v2134
  %v2136 = vpop.f32.mrf.mxu0
  %v2137 = vadd.f32 %v2123, %v2136
  %2138 = vdwg.mxu0
  %2139 = vmatpush.bf16.msra.mxu0 0
  %2140 = vmatpush.bf16.msra.mxu0 0
  %2141 = vmatpush.bf16.msra.mxu0 0
  %2142 = vmatpush.bf16.msra.mxu0 0
  %2143 = vmatpush.bf16.msra.mxu0 0
  %2144 = vmatpush.bf16.msra.mxu0 0
  %2145 = vmatpush.bf16.msra.mxu0 0
  %2146 = vmatpush.bf16.msra.mxu0 %v2068
  %2147 = vmatmul.bf16.gmra.mxu0 %v2095
  %v2148 = vpop.f32.mrf.mxu0
  %v2149 = vadd.f32 %v2135, %v2148
  %v2150 = vpop.f32.mrf.mxu0
  %v2151 = vadd.f32 %v2137, %v2150
  %2152 = vdwg.mxu0
  %v2153 = vld [vmem:[%s2] sm:$0xff]
  %v2154 = vld [vmem:[%s2 + $0x8] sm:$0xff]
  %v2155 = vmul.f32 %v2149, 0.5
  %v2156 = vmul.f32 %v2151, 0.5
  %v2157 = vmul.f32 %v2155, 1.442695
  %v2158 = vpow.pop %v2157
  %v2159 = vmul.f32 %v2156, 1.442695
  %v2160 = vpow.pop %v2159
  %2163 = vrot.lane.b32.xlu0 %v2158, 108
  %v2164 = vpop.permute.xlu0 %2163
  %2165 = vrot.lane.b32.xlu0 %v2160, 108
  %v2166 = vpop.permute.xlu0 %2165
  %v2169 = vmul.f32 %v2153, %v2164
  %v2170 = vmul.f32 %v2154, %v2166
  %v2171 = vadd.f32 %v2149, %v2169
  %v2172 = vadd.f32 %v2151, %v2170
  %v2173 = vpack.c.bf16 %v2172, %v2171
  %v2174 = vld [vmem:[%s8] sm:$0xff]
  %v2175 = vld [vmem:[%s8 + $0x8] sm:$0xff]
  %v2176 = vld [vmem:[%s8 + $0x10] sm:$0xff]
  %v2177 = vld [vmem:[%s8 + $0x18] sm:$0xff]
  %v2178 = vld [vmem:[%s8 + $0x20] sm:$0x33]
  %v2179 = vld [vmem:[%s8 + $0x28] sm:$0x33]
  %v2180 = vld [vmem:[%s10] sm:$0xf]
  %v2182 = vperm.slane %v2180, 0
  %v2183 = vperm.slane %v2180, 1
  %v2184 = vperm.slane %v2180, 2
  %v2185 = vperm.slane %v2180, 3
  %v2196 = vunpack.c.l.b16 %v2174
  %v2197 = vunpack.c.h.b16 %v2174
  %v2198 = vunpack.c.l.b16 %v2175
  %v2199 = vunpack.c.h.b16 %v2175
  %v2200 = vunpack.c.l.b16 %v2176
  %v2201 = vunpack.c.h.b16 %v2176
  %v2202 = vunpack.c.l.b16 %v2177
  %v2203 = vunpack.c.h.b16 %v2177
  %v2204 = vunpack.c.l.b16 %v2178
  %v2205 = vunpack.c.h.b16 %v2178
  %v2206 = vunpack.c.l.b16 %v2179
  %v2207 = vunpack.c.h.b16 %v2179
  %v2208 = vpack.c.b16 %v2200, %v2196
  %v2209 = vpack.c.b16 %v2201, %v2197
  %v2210 = vpack.c.b16 %v2202, %v2198
  %v2211 = vpack.c.b16 %v2203, %v2199
  %v2212 = vpack.c.b16 %v2204, %v2204
  %v2213 = vpack.c.b16 %v2205, %v2205
  %v2214 = vpack.c.b16 %v2206, %v2206
  %v2215 = vpack.c.b16 %v2207, %v2207
  %vm2220 = vcmask 162816
  %v2222 = vsel %vm2220, %v2173, 0
  %vm2224 = vcmask 1041408
  %v2226 = vsel %vm2224, %v2212, 0
  %v2229 = vsel %vm2224, %v2213, 0
  %v2232 = vsel %vm2224, %v2214, 0
  %v2235 = vsel %vm2224, %v2215, 0
  %2237 = vmatpush.bf16.msra.mxu0 0
  %2238 = vmatpush.bf16.msra.mxu0 0
  %2239 = vmatpush.bf16.msra.mxu0 0
  %2240 = vmatpush.bf16.msra.mxu0 0
  %2241 = vmatpush.bf16.msra.mxu0 0
  %2242 = vmatpush.bf16.msra.mxu0 0
  %2243 = vmatpush.bf16.msra.mxu0 %v2226
  %2244 = vmatpush.bf16.msra.mxu0 %v2208
  %2245 = vmatmul.bf16.gmra.mxu0 %v2222
  %v2246 = vpop.f32.mrf.mxu0
  %v2247 = vadd.f32 %v2182, %v2246
  %v2248 = vpop.f32.mrf.mxu0
  %v2249 = vadd.f32 %v2182, %v2248
  %2250 = vdwg.mxu0
  %2251 = vmatpush.bf16.msra.mxu0 0
  %2252 = vmatpush.bf16.msra.mxu0 0
  %2253 = vmatpush.bf16.msra.mxu0 0
  %2254 = vmatpush.bf16.msra.mxu0 0
  %2255 = vmatpush.bf16.msra.mxu0 0
  %2256 = vmatpush.bf16.msra.mxu0 0
  %2257 = vmatpush.bf16.msra.mxu0 %v2229
  %2258 = vmatpush.bf16.msra.mxu0 %v2209
  %2259 = vmatmul.bf16.gmra.mxu0 %v2222
  %v2260 = vpop.f32.mrf.mxu0
  %v2261 = vadd.f32 %v2183, %v2260
  %v2262 = vpop.f32.mrf.mxu0
  %v2263 = vadd.f32 %v2183, %v2262
  %2264 = vdwg.mxu0
  %2265 = vmatpush.bf16.msra.mxu0 0
  %2266 = vmatpush.bf16.msra.mxu0 0
  %2267 = vmatpush.bf16.msra.mxu0 0
  %2268 = vmatpush.bf16.msra.mxu0 0
  %2269 = vmatpush.bf16.msra.mxu0 0
  %2270 = vmatpush.bf16.msra.mxu0 0
  %2271 = vmatpush.bf16.msra.mxu0 %v2232
  %2272 = vmatpush.bf16.msra.mxu0 %v2210
  %2273 = vmatmul.bf16.gmra.mxu0 %v2222
  %v2274 = vpop.f32.mrf.mxu0
  %v2275 = vadd.f32 %v2184, %v2274
  %v2276 = vpop.f32.mrf.mxu0
  %v2277 = vadd.f32 %v2184, %v2276
  %2278 = vdwg.mxu0
  %2279 = vmatpush.bf16.msra.mxu0 0
  %2280 = vmatpush.bf16.msra.mxu0 0
  %2281 = vmatpush.bf16.msra.mxu0 0
  %2282 = vmatpush.bf16.msra.mxu0 0
  %2283 = vmatpush.bf16.msra.mxu0 0
  %2284 = vmatpush.bf16.msra.mxu0 0
  %2285 = vmatpush.bf16.msra.mxu0 %v2235
  %2286 = vmatpush.bf16.msra.mxu0 %v2211
  %2287 = vmatmul.bf16.gmra.mxu0 %v2222
  %v2288 = vpop.f32.mrf.mxu0
  %v2289 = vadd.f32 %v2185, %v2288
  %v2290 = vpop.f32.mrf.mxu0
  %v2291 = vadd.f32 %v2185, %v2290
  %2292 = vdwg.mxu0
  %v2293 = vadd.f32 %v2247, %v199
  %v2294 = vadd.f32 %v2261, %v213
  %v2295 = vadd.f32 %v2275, %v227
  %v2296 = vadd.f32 %v2289, %v241
  %v2297 = vadd.f32 %v2249, %v201
  %v2298 = vadd.f32 %v2263, %v215
  %v2299 = vadd.f32 %v2277, %v229
  %v2300 = vadd.f32 %v2291, %v243
  %v2301 = vmax.f32 %v2293, 0.0
  %v2302 = vmax.f32 %v2294, 0.0
  %v2303 = vmax.f32 %v2295, 0.0
  %v2304 = vmax.f32 %v2296, 0.0
  %v2305 = vmax.f32 %v2297, 0.0
  %v2306 = vmax.f32 %v2298, 0.0
  %v2307 = vmax.f32 %v2299, 0.0
  %v2308 = vmax.f32 %v2300, 0.0
  %v2309 = vpack.c.bf16 %v2305, %v2301
  %v2310 = vpack.c.bf16 %v2306, %v2302
  %v2311 = vpack.c.bf16 %v2307, %v2303
  %v2312 = vpack.c.bf16 %v2308, %v2304
  %v2313 = vld [vmem:[%s11] sm:$0xff]
  %v2314 = vld [vmem:[%s11 + $0x8] sm:$0xff]
  %v2315 = vld [vmem:[%s11 + $0x10] sm:$0xff]
  %v2316 = vld [vmem:[%s11 + $0x18] sm:$0xf]
  %v2317 = vld [vmem:[%s11 + $0x1c] sm:$0xff]
  %v2318 = vld [vmem:[%s11 + $0x24] sm:$0xff]
  %v2319 = vld [vmem:[%s11 + $0x2c] sm:$0xff]
  %v2320 = vld [vmem:[%s11 + $0x34] sm:$0xf]
  %v2321 = vld [vmem:[%s11 + $0x38] sm:$0xff]
  %v2322 = vld [vmem:[%s11 + $0x40] sm:$0xff]
  %v2323 = vld [vmem:[%s11 + $0x48] sm:$0xff]
  %v2324 = vld [vmem:[%s11 + $0x50] sm:$0xf]
  %v2325 = vld [vmem:[%s11 + $0x54] sm:$0xff]
  %v2326 = vld [vmem:[%s11 + $0x5c] sm:$0xff]
  %v2327 = vld [vmem:[%s11 + $0x64] sm:$0xff]
  %v2328 = vld [vmem:[%s11 + $0x6c] sm:$0xf]
  %v2329 = vld [vmem:[%s11 + $0x70] sm:$0xff]
  %v2330 = vld [vmem:[%s11 + $0x78] sm:$0xff]
  %v2331 = vld [vmem:[%s11 + $0x80] sm:$0xff]
  %v2332 = vld [vmem:[%s11 + $0x88] sm:$0xf]
  %v2333 = vld [vmem:[%s11 + $0x8c] sm:$0xff]
  %v2334 = vld [vmem:[%s11 + $0x94] sm:$0xff]
  %v2335 = vld [vmem:[%s11 + $0x9c] sm:$0xff]
  %v2336 = vld [vmem:[%s11 + $0xa4] sm:$0xf]
  %v2337 = vld [vmem:[%s11 + $0xa8] sm:$0xff]
  %v2338 = vld [vmem:[%s11 + $0xb0] sm:$0xff]
  %v2339 = vld [vmem:[%s11 + $0xb8] sm:$0xff]
  %v2340 = vld [vmem:[%s11 + $0xc0] sm:$0xf]
  %v2341 = vld [vmem:[%s11 + $0xc4] sm:$0xff]
  %v2342 = vld [vmem:[%s11 + $0xcc] sm:$0xff]
  %v2343 = vld [vmem:[%s11 + $0xd4] sm:$0xff]
  %v2344 = vld [vmem:[%s11 + $0xdc] sm:$0xf]
  %v2345 = vld [vmem:[%s11 + $0xe0] sm:$0xff]
  %v2346 = vld [vmem:[%s11 + $0xe8] sm:$0xff]
  %v2347 = vld [vmem:[%s11 + $0xf0] sm:$0xff]
  %v2348 = vld [vmem:[%s11 + $0xf8] sm:$0xf]
  %v2349 = vld [vmem:[%s11 + $0xfc] sm:$0xff]
  %v2350 = vld [vmem:[%s11 + $0x104] sm:$0xff]
  %v2351 = vld [vmem:[%s11 + $0x10c] sm:$0xff]
  %v2352 = vld [vmem:[%s11 + $0x114] sm:$0xf]
  %v2353 = vld [vmem:[%s11 + $0x118] sm:$0xff]
  %v2354 = vld [vmem:[%s11 + $0x120] sm:$0xff]
  %v2355 = vld [vmem:[%s11 + $0x128] sm:$0xff]
  %v2356 = vld [vmem:[%s11 + $0x130] sm:$0xf]
  %v2357 = vld [vmem:[%s11 + $0x134] sm:$0xff]
  %v2358 = vld [vmem:[%s11 + $0x13c] sm:$0xff]
  %v2359 = vld [vmem:[%s11 + $0x144] sm:$0xff]
  %v2360 = vld [vmem:[%s11 + $0x14c] sm:$0xf]
  %v2361 = vld [vmem:[%s11 + $0x150] sm:$0xff]
  %v2362 = vld [vmem:[%s11 + $0x158] sm:$0xff]
  %v2363 = vld [vmem:[%s11 + $0x160] sm:$0xff]
  %v2364 = vld [vmem:[%s11 + $0x168] sm:$0xf]
  %v2365 = vld [vmem:[%s11 + $0x16c] sm:$0xff]
  %v2366 = vld [vmem:[%s11 + $0x174] sm:$0xff]
  %v2367 = vld [vmem:[%s11 + $0x17c] sm:$0xff]
  %v2368 = vld [vmem:[%s11 + $0x184] sm:$0xf]
  %v2369 = vld [vmem:[%s11 + $0x188] sm:$0xff]
  %v2370 = vld [vmem:[%s11 + $0x190] sm:$0xff]
  %v2371 = vld [vmem:[%s11 + $0x198] sm:$0xff]
  %v2372 = vld [vmem:[%s11 + $0x1a0] sm:$0xf]
  %v2373 = vld [vmem:[%s11 + $0x1a4] sm:$0xff]
  %v2374 = vld [vmem:[%s11 + $0x1ac] sm:$0xff]
  %v2375 = vld [vmem:[%s11 + $0x1b4] sm:$0xff]
  %v2376 = vld [vmem:[%s11 + $0x1bc] sm:$0xf]
  %v2377 = vld [vmem:[%s11 + $0x1c0] sm:$0xff]
  %v2378 = vld [vmem:[%s11 + $0x1c8] sm:$0xff]
  %v2379 = vld [vmem:[%s11 + $0x1d0] sm:$0xff]
  %v2380 = vld [vmem:[%s11 + $0x1d8] sm:$0xf]
  %v2381 = vld [vmem:[%s11 + $0x1dc] sm:$0xff]
  %v2382 = vld [vmem:[%s11 + $0x1e4] sm:$0xff]
  %v2383 = vld [vmem:[%s11 + $0x1ec] sm:$0xff]
  %v2384 = vld [vmem:[%s11 + $0x1f4] sm:$0xf]
  %v2385 = vld [vmem:[%s11 + $0x1f8] sm:$0xff]
  %v2386 = vld [vmem:[%s11 + $0x200] sm:$0xff]
  %v2387 = vld [vmem:[%s11 + $0x208] sm:$0xff]
  %v2388 = vld [vmem:[%s11 + $0x210] sm:$0xf]
  %v2389 = vld [vmem:[%s11 + $0x214] sm:$0xff]
  %v2390 = vld [vmem:[%s11 + $0x21c] sm:$0xff]
  %v2391 = vld [vmem:[%s11 + $0x224] sm:$0xff]
  %v2392 = vld [vmem:[%s11 + $0x22c] sm:$0xf]
  %v2393 = vld [vmem:[%s11 + $0x230] sm:$0xff]
  %v2394 = vld [vmem:[%s11 + $0x238] sm:$0xff]
  %v2395 = vld [vmem:[%s11 + $0x240] sm:$0xff]
  %v2396 = vld [vmem:[%s11 + $0x248] sm:$0xf]
  %v2397 = vld [vmem:[%s11 + $0x24c] sm:$0xff]
  %v2398 = vld [vmem:[%s11 + $0x254] sm:$0xff]
  %v2399 = vld [vmem:[%s11 + $0x25c] sm:$0xff]
  %v2400 = vld [vmem:[%s11 + $0x264] sm:$0xf]
  %v2401 = vld [vmem:[%s11 + $0x268] sm:$0xff]
  %v2402 = vld [vmem:[%s11 + $0x270] sm:$0xff]
  %v2403 = vld [vmem:[%s11 + $0x278] sm:$0xff]
  %v2404 = vld [vmem:[%s11 + $0x280] sm:$0xf]
  %v2405 = vld [vmem:[%s11 + $0x284] sm:$0xff]
  %v2406 = vld [vmem:[%s11 + $0x28c] sm:$0xff]
  %v2407 = vld [vmem:[%s11 + $0x294] sm:$0xff]
  %v2408 = vld [vmem:[%s11 + $0x29c] sm:$0xf]
  %v2409 = vld [vmem:[%s11 + $0x2a0] sm:$0xff]
  %v2410 = vld [vmem:[%s11 + $0x2a8] sm:$0xff]
  %v2411 = vld [vmem:[%s11 + $0x2b0] sm:$0xff]
  %v2412 = vld [vmem:[%s11 + $0x2b8] sm:$0xf]
  %v2413 = vld [vmem:[%s11 + $0x2bc] sm:$0xff]
  %v2414 = vld [vmem:[%s11 + $0x2c4] sm:$0xff]
  %v2415 = vld [vmem:[%s11 + $0x2cc] sm:$0xff]
  %v2416 = vld [vmem:[%s11 + $0x2d4] sm:$0xf]
  %v2417 = vld [vmem:[%s11 + $0x2d8] sm:$0xff]
  %v2418 = vld [vmem:[%s11 + $0x2e0] sm:$0xff]
  %v2419 = vld [vmem:[%s11 + $0x2e8] sm:$0xff]
  %v2420 = vld [vmem:[%s11 + $0x2f0] sm:$0xf]
  %v2421 = vld [vmem:[%s11 + $0x2f4] sm:$0xff]
  %v2422 = vld [vmem:[%s11 + $0x2fc] sm:$0xff]
  %v2423 = vld [vmem:[%s11 + $0x304] sm:$0xff]
  %v2424 = vld [vmem:[%s11 + $0x30c] sm:$0xf]
  %v2425 = vld [vmem:[%s11 + $0x310] sm:$0xff]
  %v2426 = vld [vmem:[%s11 + $0x318] sm:$0xff]
  %v2427 = vld [vmem:[%s11 + $0x320] sm:$0xff]
  %v2428 = vld [vmem:[%s11 + $0x328] sm:$0xf]
  %v2429 = vld [vmem:[%s11 + $0x32c] sm:$0xff]
  %v2430 = vld [vmem:[%s11 + $0x334] sm:$0xff]
  %v2431 = vld [vmem:[%s11 + $0x33c] sm:$0xff]
  %v2432 = vld [vmem:[%s11 + $0x344] sm:$0xf]
  %v2433 = vld [vmem:[%s11 + $0x348] sm:$0xff]
  %v2434 = vld [vmem:[%s11 + $0x350] sm:$0xff]
  %v2435 = vld [vmem:[%s11 + $0x358] sm:$0xff]
  %v2436 = vld [vmem:[%s11 + $0x360] sm:$0xf]
  %v2437 = vld [vmem:[%s11 + $0x364] sm:$0xff]
  %v2438 = vld [vmem:[%s11 + $0x36c] sm:$0xff]
  %v2439 = vld [vmem:[%s11 + $0x374] sm:$0xff]
  %v2440 = vld [vmem:[%s11 + $0x37c] sm:$0xf]
  %v2441 = vld [vmem:[%s11 + $0x380] sm:$0xff]
  %v2442 = vld [vmem:[%s11 + $0x388] sm:$0xff]
  %v2443 = vld [vmem:[%s11 + $0x390] sm:$0xff]
  %v2444 = vld [vmem:[%s11 + $0x398] sm:$0xf]
  %v2445 = vld [vmem:[%s11 + $0x39c] sm:$0xff]
  %v2446 = vld [vmem:[%s11 + $0x3a4] sm:$0xff]
  %v2447 = vld [vmem:[%s11 + $0x3ac] sm:$0xff]
  %v2448 = vld [vmem:[%s11 + $0x3b4] sm:$0xf]
  %v2449 = vld [vmem:[%s11 + $0x3b8] sm:$0xff]
  %v2450 = vld [vmem:[%s11 + $0x3c0] sm:$0xff]
  %v2451 = vld [vmem:[%s11 + $0x3c8] sm:$0xff]
  %v2452 = vld [vmem:[%s11 + $0x3d0] sm:$0xf]
  %v2453 = vld [vmem:[%s11 + $0x3d4] sm:$0xff]
  %v2454 = vld [vmem:[%s11 + $0x3dc] sm:$0xff]
  %v2455 = vld [vmem:[%s11 + $0x3e4] sm:$0xff]
  %v2456 = vld [vmem:[%s11 + $0x3ec] sm:$0xf]
  %v2457 = vld [vmem:[%s11 + $0x3f0] sm:$0xff]
  %v2458 = vld [vmem:[%s11 + $0x3f8] sm:$0xff]
  %v2459 = vld [vmem:[%s11 + $0x400] sm:$0xff]
  %v2460 = vld [vmem:[%s11 + $0x408] sm:$0xf]
  %v2461 = vld [vmem:[%s11 + $0x40c] sm:$0xff]
  %v2462 = vld [vmem:[%s11 + $0x414] sm:$0xff]
  %v2463 = vld [vmem:[%s11 + $0x41c] sm:$0xff]
  %v2464 = vld [vmem:[%s11 + $0x424] sm:$0xf]
  %v2465 = vld [vmem:[%s11 + $0x428] sm:$0xff]
  %v2466 = vld [vmem:[%s11 + $0x430] sm:$0xff]
  %v2467 = vld [vmem:[%s11 + $0x438] sm:$0xff]
  %v2468 = vld [vmem:[%s11 + $0x440] sm:$0xf]
  %v2469 = vld [vmem:[%s11 + $0x444] sm:$0xff]
  %v2470 = vld [vmem:[%s11 + $0x44c] sm:$0xff]
  %v2471 = vld [vmem:[%s11 + $0x454] sm:$0xff]
  %v2472 = vld [vmem:[%s11 + $0x45c] sm:$0xf]
  %v2473 = vld [vmem:[%s11 + $0x460] sm:$0xff]
  %v2474 = vld [vmem:[%s11 + $0x468] sm:$0xff]
  %v2475 = vld [vmem:[%s11 + $0x470] sm:$0xff]
  %v2476 = vld [vmem:[%s11 + $0x478] sm:$0xf]
  %v2477 = vld [vmem:[%s11 + $0x47c] sm:$0xff]
  %v2478 = vld [vmem:[%s11 + $0x484] sm:$0xff]
  %v2479 = vld [vmem:[%s11 + $0x48c] sm:$0xff]
  %v2480 = vld [vmem:[%s11 + $0x494] sm:$0xf]
  %v2481 = vld [vmem:[%s11 + $0x498] sm:$0xff]
  %v2482 = vld [vmem:[%s11 + $0x4a0] sm:$0xff]
  %v2483 = vld [vmem:[%s11 + $0x4a8] sm:$0xff]
  %v2484 = vld [vmem:[%s11 + $0x4b0] sm:$0xf]
  %v2485 = vld [vmem:[%s11 + $0x4b4] sm:$0xff]
  %v2486 = vld [vmem:[%s11 + $0x4bc] sm:$0xff]
  %v2487 = vld [vmem:[%s11 + $0x4c4] sm:$0xff]
  %v2488 = vld [vmem:[%s11 + $0x4cc] sm:$0xf]
  %v2489 = vld [vmem:[%s11 + $0x4d0] sm:$0xff]
  %v2490 = vld [vmem:[%s11 + $0x4d8] sm:$0xff]
  %v2491 = vld [vmem:[%s11 + $0x4e0] sm:$0xff]
  %v2492 = vld [vmem:[%s11 + $0x4e8] sm:$0xf]
  %v2493 = vld [vmem:[%s11 + $0x4ec] sm:$0xff]
  %v2494 = vld [vmem:[%s11 + $0x4f4] sm:$0xff]
  %v2495 = vld [vmem:[%s11 + $0x4fc] sm:$0xff]
  %v2496 = vld [vmem:[%s11 + $0x504] sm:$0xf]
  %v2497 = vld [vmem:[%s11 + $0x508] sm:$0xff]
  %v2498 = vld [vmem:[%s11 + $0x510] sm:$0xff]
  %v2499 = vld [vmem:[%s11 + $0x518] sm:$0xff]
  %v2500 = vld [vmem:[%s11 + $0x520] sm:$0xf]
  %v2501 = vld [vmem:[%s11 + $0x524] sm:$0xff]
  %v2502 = vld [vmem:[%s11 + $0x52c] sm:$0xff]
  %v2503 = vld [vmem:[%s11 + $0x534] sm:$0xff]
  %v2504 = vld [vmem:[%s11 + $0x53c] sm:$0xf]
  %v2505 = vld [vmem:[%s11 + $0x540] sm:$0xff]
  %v2506 = vld [vmem:[%s11 + $0x548] sm:$0xff]
  %v2507 = vld [vmem:[%s11 + $0x550] sm:$0xff]
  %v2508 = vld [vmem:[%s11 + $0x558] sm:$0xf]
  %v2509 = vld [vmem:[%s11 + $0x55c] sm:$0xff]
  %v2510 = vld [vmem:[%s11 + $0x564] sm:$0xff]
  %v2511 = vld [vmem:[%s11 + $0x56c] sm:$0xff]
  %v2512 = vld [vmem:[%s11 + $0x574] sm:$0xf]
  %v2513 = vld [vmem:[%s12] sm:$0x7f]
  %v2515 = vperm.slane %v2513, 0
  %v2516 = vperm.slane %v2513, 1
  %v2517 = vperm.slane %v2513, 2
  %v2518 = vperm.slane %v2513, 3
  %v2519 = vperm.slane %v2513, 4
  %v2520 = vperm.slane %v2513, 5
  %v2521 = vperm.slane %v2513, 6
  %v2729 = vunpack.c.l.b16 %v2313
  %v2730 = vunpack.c.h.b16 %v2313
  %v2731 = vunpack.c.l.b16 %v2314
  %v2732 = vunpack.c.h.b16 %v2314
  %v2733 = vunpack.c.l.b16 %v2315
  %v2734 = vunpack.c.h.b16 %v2315
  %v2735 = vunpack.c.l.b16 %v2316
  %v2736 = vunpack.c.l.b16 %v2317
  %v2737 = vunpack.c.h.b16 %v2317
  %v2738 = vunpack.c.l.b16 %v2318
  %v2739 = vunpack.c.h.b16 %v2318
  %v2740 = vunpack.c.l.b16 %v2319
  %v2741 = vunpack.c.h.b16 %v2319
  %v2742 = vunpack.c.l.b16 %v2320
  %v2743 = vunpack.c.l.b16 %v2321
  %v2744 = vunpack.c.h.b16 %v2321
  %v2745 = vunpack.c.l.b16 %v2322
  %v2746 = vunpack.c.h.b16 %v2322
  %v2747 = vunpack.c.l.b16 %v2323
  %v2748 = vunpack.c.h.b16 %v2323
  %v2749 = vunpack.c.l.b16 %v2324
  %v2750 = vunpack.c.l.b16 %v2325
  %v2751 = vunpack.c.h.b16 %v2325
  %v2752 = vunpack.c.l.b16 %v2326
  %v2753 = vunpack.c.h.b16 %v2326
  %v2754 = vunpack.c.l.b16 %v2327
  %v2755 = vunpack.c.h.b16 %v2327
  %v2756 = vunpack.c.l.b16 %v2328
  %v2757 = vunpack.c.l.b16 %v2329
  %v2758 = vunpack.c.h.b16 %v2329
  %v2759 = vunpack.c.l.b16 %v2330
  %v2760 = vunpack.c.h.b16 %v2330
  %v2761 = vunpack.c.l.b16 %v2331
  %v2762 = vunpack.c.h.b16 %v2331
  %v2763 = vunpack.c.l.b16 %v2332
  %v2764 = vunpack.c.l.b16 %v2333
  %v2765 = vunpack.c.h.b16 %v2333
  %v2766 = vunpack.c.l.b16 %v2334
  %v2767 = vunpack.c.h.b16 %v2334
  %v2768 = vunpack.c.l.b16 %v2335
  %v2769 = vunpack.c.h.b16 %v2335
  %v2770 = vunpack.c.l.b16 %v2336
  %v2771 = vunpack.c.l.b16 %v2337
  %v2772 = vunpack.c.h.b16 %v2337
  %v2773 = vunpack.c.l.b16 %v2338
  %v2774 = vunpack.c.h.b16 %v2338
  %v2775 = vunpack.c.l.b16 %v2339
  %v2776 = vunpack.c.h.b16 %v2339
  %v2777 = vunpack.c.l.b16 %v2340
  %v2778 = vunpack.c.l.b16 %v2341
  %v2779 = vunpack.c.h.b16 %v2341
  %v2780 = vunpack.c.l.b16 %v2342
  %v2781 = vunpack.c.h.b16 %v2342
  %v2782 = vunpack.c.l.b16 %v2343
  %v2783 = vunpack.c.h.b16 %v2343
  %v2784 = vunpack.c.l.b16 %v2344
  %v2785 = vunpack.c.l.b16 %v2345
  %v2786 = vunpack.c.h.b16 %v2345
  %v2787 = vunpack.c.l.b16 %v2346
  %v2788 = vunpack.c.h.b16 %v2346
  %v2789 = vunpack.c.l.b16 %v2347
  %v2790 = vunpack.c.h.b16 %v2347
  %v2791 = vunpack.c.l.b16 %v2348
  %v2792 = vunpack.c.l.b16 %v2349
  %v2793 = vunpack.c.h.b16 %v2349
  %v2794 = vunpack.c.l.b16 %v2350
  %v2795 = vunpack.c.h.b16 %v2350
  %v2796 = vunpack.c.l.b16 %v2351
  %v2797 = vunpack.c.h.b16 %v2351
  %v2798 = vunpack.c.l.b16 %v2352
  %v2799 = vunpack.c.l.b16 %v2353
  %v2800 = vunpack.c.h.b16 %v2353
  %v2801 = vunpack.c.l.b16 %v2354
  %v2802 = vunpack.c.h.b16 %v2354
  %v2803 = vunpack.c.l.b16 %v2355
  %v2804 = vunpack.c.h.b16 %v2355
  %v2805 = vunpack.c.l.b16 %v2356
  %v2806 = vunpack.c.l.b16 %v2357
  %v2807 = vunpack.c.h.b16 %v2357
  %v2808 = vunpack.c.l.b16 %v2358
  %v2809 = vunpack.c.h.b16 %v2358
  %v2810 = vunpack.c.l.b16 %v2359
  %v2811 = vunpack.c.h.b16 %v2359
  %v2812 = vunpack.c.l.b16 %v2360
  %v2813 = vunpack.c.l.b16 %v2361
  %v2814 = vunpack.c.h.b16 %v2361
  %v2815 = vunpack.c.l.b16 %v2362
  %v2816 = vunpack.c.h.b16 %v2362
  %v2817 = vunpack.c.l.b16 %v2363
  %v2818 = vunpack.c.h.b16 %v2363
  %v2819 = vunpack.c.l.b16 %v2364
  %v2820 = vunpack.c.l.b16 %v2365
  %v2821 = vunpack.c.h.b16 %v2365
  %v2822 = vunpack.c.l.b16 %v2366
  %v2823 = vunpack.c.h.b16 %v2366
  %v2824 = vunpack.c.l.b16 %v2367
  %v2825 = vunpack.c.h.b16 %v2367
  %v2826 = vunpack.c.l.b16 %v2368
  %v2827 = vunpack.c.l.b16 %v2369
  %v2828 = vunpack.c.h.b16 %v2369
  %v2829 = vunpack.c.l.b16 %v2370
  %v2830 = vunpack.c.h.b16 %v2370
  %v2831 = vunpack.c.l.b16 %v2371
  %v2832 = vunpack.c.h.b16 %v2371
  %v2833 = vunpack.c.l.b16 %v2372
  %v2834 = vunpack.c.l.b16 %v2373
  %v2835 = vunpack.c.h.b16 %v2373
  %v2836 = vunpack.c.l.b16 %v2374
  %v2837 = vunpack.c.h.b16 %v2374
  %v2838 = vunpack.c.l.b16 %v2375
  %v2839 = vunpack.c.h.b16 %v2375
  %v2840 = vunpack.c.l.b16 %v2376
  %v2841 = vunpack.c.l.b16 %v2377
  %v2842 = vunpack.c.h.b16 %v2377
  %v2843 = vunpack.c.l.b16 %v2378
  %v2844 = vunpack.c.h.b16 %v2378
  %v2845 = vunpack.c.l.b16 %v2379
  %v2846 = vunpack.c.h.b16 %v2379
  %v2847 = vunpack.c.l.b16 %v2380
  %v2848 = vunpack.c.l.b16 %v2381
  %v2849 = vunpack.c.h.b16 %v2381
  %v2850 = vunpack.c.l.b16 %v2382
  %v2851 = vunpack.c.h.b16 %v2382
  %v2852 = vunpack.c.l.b16 %v2383
  %v2853 = vunpack.c.h.b16 %v2383
  %v2854 = vunpack.c.l.b16 %v2384
  %v2855 = vunpack.c.l.b16 %v2385
  %v2856 = vunpack.c.h.b16 %v2385
  %v2857 = vunpack.c.l.b16 %v2386
  %v2858 = vunpack.c.h.b16 %v2386
  %v2859 = vunpack.c.l.b16 %v2387
  %v2860 = vunpack.c.h.b16 %v2387
  %v2861 = vunpack.c.l.b16 %v2388
  %v2862 = vunpack.c.l.b16 %v2389
  %v2863 = vunpack.c.h.b16 %v2389
  %v2864 = vunpack.c.l.b16 %v2390
  %v2865 = vunpack.c.h.b16 %v2390
  %v2866 = vunpack.c.l.b16 %v2391
  %v2867 = vunpack.c.h.b16 %v2391
  %v2868 = vunpack.c.l.b16 %v2392
  %v2869 = vunpack.c.l.b16 %v2393
  %v2870 = vunpack.c.h.b16 %v2393
  %v2871 = vunpack.c.l.b16 %v2394
  %v2872 = vunpack.c.h.b16 %v2394
  %v2873 = vunpack.c.l.b16 %v2395
  %v2874 = vunpack.c.h.b16 %v2395
  %v2875 = vunpack.c.l.b16 %v2396
  %v2876 = vunpack.c.l.b16 %v2397
  %v2877 = vunpack.c.h.b16 %v2397
  %v2878 = vunpack.c.l.b16 %v2398
  %v2879 = vunpack.c.h.b16 %v2398
  %v2880 = vunpack.c.l.b16 %v2399
  %v2881 = vunpack.c.h.b16 %v2399
  %v2882 = vunpack.c.l.b16 %v2400
  %v2883 = vunpack.c.l.b16 %v2401
  %v2884 = vunpack.c.h.b16 %v2401
  %v2885 = vunpack.c.l.b16 %v2402
  %v2886 = vunpack.c.h.b16 %v2402
  %v2887 = vunpack.c.l.b16 %v2403
  %v2888 = vunpack.c.h.b16 %v2403
  %v2889 = vunpack.c.l.b16 %v2404
  %v2890 = vunpack.c.l.b16 %v2405
  %v2891 = vunpack.c.h.b16 %v2405
  %v2892 = vunpack.c.l.b16 %v2406
  %v2893 = vunpack.c.h.b16 %v2406
  %v2894 = vunpack.c.l.b16 %v2407
  %v2895 = vunpack.c.h.b16 %v2407
  %v2896 = vunpack.c.l.b16 %v2408
  %v2897 = vunpack.c.l.b16 %v2409
  %v2898 = vunpack.c.h.b16 %v2409
  %v2899 = vunpack.c.l.b16 %v2410
  %v2900 = vunpack.c.h.b16 %v2410
  %v2901 = vunpack.c.l.b16 %v2411
  %v2902 = vunpack.c.h.b16 %v2411
  %v2903 = vunpack.c.l.b16 %v2412
  %v2904 = vunpack.c.l.b16 %v2413
  %v2905 = vunpack.c.h.b16 %v2413
  %v2906 = vunpack.c.l.b16 %v2414
  %v2907 = vunpack.c.h.b16 %v2414
  %v2908 = vunpack.c.l.b16 %v2415
  %v2909 = vunpack.c.h.b16 %v2415
  %v2910 = vunpack.c.l.b16 %v2416
  %v2911 = vunpack.c.l.b16 %v2417
  %v2912 = vunpack.c.h.b16 %v2417
  %v2913 = vunpack.c.l.b16 %v2418
  %v2914 = vunpack.c.h.b16 %v2418
  %v2915 = vunpack.c.l.b16 %v2419
  %v2916 = vunpack.c.h.b16 %v2419
  %v2917 = vunpack.c.l.b16 %v2420
  %v2918 = vunpack.c.l.b16 %v2421
  %v2919 = vunpack.c.h.b16 %v2421
  %v2920 = vunpack.c.l.b16 %v2422
  %v2921 = vunpack.c.h.b16 %v2422
  %v2922 = vunpack.c.l.b16 %v2423
  %v2923 = vunpack.c.h.b16 %v2423
  %v2924 = vunpack.c.l.b16 %v2424
  %v2925 = vunpack.c.l.b16 %v2425
  %v2926 = vunpack.c.h.b16 %v2425
  %v2927 = vunpack.c.l.b16 %v2426
  %v2928 = vunpack.c.h.b16 %v2426
  %v2929 = vunpack.c.l.b16 %v2427
  %v2930 = vunpack.c.h.b16 %v2427
  %v2931 = vunpack.c.l.b16 %v2428
  %v2932 = vunpack.c.l.b16 %v2429
  %v2933 = vunpack.c.h.b16 %v2429
  %v2934 = vunpack.c.l.b16 %v2430
  %v2935 = vunpack.c.h.b16 %v2430
  %v2936 = vunpack.c.l.b16 %v2431
  %v2937 = vunpack.c.h.b16 %v2431
  %v2938 = vunpack.c.l.b16 %v2432
  %v2939 = vunpack.c.l.b16 %v2433
  %v2940 = vunpack.c.h.b16 %v2433
  %v2941 = vunpack.c.l.b16 %v2434
  %v2942 = vunpack.c.h.b16 %v2434
  %v2943 = vunpack.c.l.b16 %v2435
  %v2944 = vunpack.c.h.b16 %v2435
  %v2945 = vunpack.c.l.b16 %v2436
  %v2946 = vunpack.c.l.b16 %v2437
  %v2947 = vunpack.c.h.b16 %v2437
  %v2948 = vunpack.c.l.b16 %v2438
  %v2949 = vunpack.c.h.b16 %v2438
  %v2950 = vunpack.c.l.b16 %v2439
  %v2951 = vunpack.c.h.b16 %v2439
  %v2952 = vunpack.c.l.b16 %v2440
  %v2953 = vunpack.c.l.b16 %v2441
  %v2954 = vunpack.c.h.b16 %v2441
  %v2955 = vunpack.c.l.b16 %v2442
  %v2956 = vunpack.c.h.b16 %v2442
  %v2957 = vunpack.c.l.b16 %v2443
  %v2958 = vunpack.c.h.b16 %v2443
  %v2959 = vunpack.c.l.b16 %v2444
  %v2960 = vunpack.c.l.b16 %v2445
  %v2961 = vunpack.c.h.b16 %v2445
  %v2962 = vunpack.c.l.b16 %v2446
  %v2963 = vunpack.c.h.b16 %v2446
  %v2964 = vunpack.c.l.b16 %v2447
  %v2965 = vunpack.c.h.b16 %v2447
  %v2966 = vunpack.c.l.b16 %v2448
  %v2967 = vunpack.c.l.b16 %v2449
  %v2968 = vunpack.c.h.b16 %v2449
  %v2969 = vunpack.c.l.b16 %v2450
  %v2970 = vunpack.c.h.b16 %v2450
  %v2971 = vunpack.c.l.b16 %v2451
  %v2972 = vunpack.c.h.b16 %v2451
  %v2973 = vunpack.c.l.b16 %v2452
  %v2974 = vunpack.c.l.b16 %v2453
  %v2975 = vunpack.c.h.b16 %v2453
  %v2976 = vunpack.c.l.b16 %v2454
  %v2977 = vunpack.c.h.b16 %v2454
  %v2978 = vunpack.c.l.b16 %v2455
  %v2979 = vunpack.c.h.b16 %v2455
  %v2980 = vunpack.c.l.b16 %v2456
  %v2981 = vunpack.c.l.b16 %v2457
  %v2982 = vunpack.c.h.b16 %v2457
  %v2983 = vunpack.c.l.b16 %v2458
  %v2984 = vunpack.c.h.b16 %v2458
  %v2985 = vunpack.c.l.b16 %v2459
  %v2986 = vunpack.c.h.b16 %v2459
  %v2987 = vunpack.c.l.b16 %v2460
  %v2988 = vunpack.c.l.b16 %v2461
  %v2989 = vunpack.c.h.b16 %v2461
  %v2990 = vunpack.c.l.b16 %v2462
  %v2991 = vunpack.c.h.b16 %v2462
  %v2992 = vunpack.c.l.b16 %v2463
  %v2993 = vunpack.c.h.b16 %v2463
  %v2994 = vunpack.c.l.b16 %v2464
  %v2995 = vunpack.c.l.b16 %v2465
  %v2996 = vunpack.c.h.b16 %v2465
  %v2997 = vunpack.c.l.b16 %v2466
  %v2998 = vunpack.c.h.b16 %v2466
  %v2999 = vunpack.c.l.b16 %v2467
  %v3000 = vunpack.c.h.b16 %v2467
  %v3001 = vunpack.c.l.b16 %v2468
  %v3002 = vunpack.c.l.b16 %v2469
  %v3003 = vunpack.c.h.b16 %v2469
  %v3004 = vunpack.c.l.b16 %v2470
  %v3005 = vunpack.c.h.b16 %v2470
  %v3006 = vunpack.c.l.b16 %v2471
  %v3007 = vunpack.c.h.b16 %v2471
  %v3008 = vunpack.c.l.b16 %v2472
  %v3009 = vunpack.c.l.b16 %v2473
  %v3010 = vunpack.c.h.b16 %v2473
  %v3011 = vunpack.c.l.b16 %v2474
  %v3012 = vunpack.c.h.b16 %v2474
  %v3013 = vunpack.c.l.b16 %v2475
  %v3014 = vunpack.c.h.b16 %v2475
  %v3015 = vunpack.c.l.b16 %v2476
  %v3016 = vunpack.c.l.b16 %v2477
  %v3017 = vunpack.c.h.b16 %v2477
  %v3018 = vunpack.c.l.b16 %v2478
  %v3019 = vunpack.c.h.b16 %v2478
  %v3020 = vunpack.c.l.b16 %v2479
  %v3021 = vunpack.c.h.b16 %v2479
  %v3022 = vunpack.c.l.b16 %v2480
  %v3023 = vunpack.c.l.b16 %v2481
  %v3024 = vunpack.c.h.b16 %v2481
  %v3025 = vunpack.c.l.b16 %v2482
  %v3026 = vunpack.c.h.b16 %v2482
  %v3027 = vunpack.c.l.b16 %v2483
  %v3028 = vunpack.c.h.b16 %v2483
  %v3029 = vunpack.c.l.b16 %v2484
  %v3030 = vunpack.c.l.b16 %v2485
  %v3031 = vunpack.c.h.b16 %v2485
  %v3032 = vunpack.c.l.b16 %v2486
  %v3033 = vunpack.c.h.b16 %v2486
  %v3034 = vunpack.c.l.b16 %v2487
  %v3035 = vunpack.c.h.b16 %v2487
  %v3036 = vunpack.c.l.b16 %v2488
  %v3037 = vunpack.c.l.b16 %v2489
  %v3038 = vunpack.c.h.b16 %v2489
  %v3039 = vunpack.c.l.b16 %v2490
  %v3040 = vunpack.c.h.b16 %v2490
  %v3041 = vunpack.c.l.b16 %v2491
  %v3042 = vunpack.c.h.b16 %v2491
  %v3043 = vunpack.c.l.b16 %v2492
  %v3044 = vunpack.c.l.b16 %v2493
  %v3045 = vunpack.c.h.b16 %v2493
  %v3046 = vunpack.c.l.b16 %v2494
  %v3047 = vunpack.c.h.b16 %v2494
  %v3048 = vunpack.c.l.b16 %v2495
  %v3049 = vunpack.c.h.b16 %v2495
  %v3050 = vunpack.c.l.b16 %v2496
  %v3051 = vunpack.c.l.b16 %v2497
  %v3052 = vunpack.c.h.b16 %v2497
  %v3053 = vunpack.c.l.b16 %v2498
  %v3054 = vunpack.c.h.b16 %v2498
  %v3055 = vunpack.c.l.b16 %v2499
  %v3056 = vunpack.c.h.b16 %v2499
  %v3057 = vunpack.c.l.b16 %v2500
  %v3058 = vunpack.c.l.b16 %v2501
  %v3059 = vunpack.c.h.b16 %v2501
  %v3060 = vunpack.c.l.b16 %v2502
  %v3061 = vunpack.c.h.b16 %v2502
  %v3062 = vunpack.c.l.b16 %v2503
  %v3063 = vunpack.c.h.b16 %v2503
  %v3064 = vunpack.c.l.b16 %v2504
  %v3065 = vunpack.c.l.b16 %v2505
  %v3066 = vunpack.c.h.b16 %v2505
  %v3067 = vunpack.c.l.b16 %v2506
  %v3068 = vunpack.c.h.b16 %v2506
  %v3069 = vunpack.c.l.b16 %v2507
  %v3070 = vunpack.c.h.b16 %v2507
  %v3071 = vunpack.c.l.b16 %v2508
  %v3072 = vunpack.c.l.b16 %v2509
  %v3073 = vunpack.c.h.b16 %v2509
  %v3074 = vunpack.c.l.b16 %v2510
  %v3075 = vunpack.c.h.b16 %v2510
  %v3076 = vunpack.c.l.b16 %v2511
  %v3077 = vunpack.c.h.b16 %v2511
  %v3078 = vunpack.c.l.b16 %v2512
  %v3079 = vpack.c.b16 %v2736, %v2729
  %v3080 = vpack.c.b16 %v2737, %v2730
  %v3081 = vpack.c.b16 %v2738, %v2731
  %v3082 = vpack.c.b16 %v2739, %v2732
  %v3083 = vpack.c.b16 %v2740, %v2733
  %v3084 = vpack.c.b16 %v2741, %v2734
  %v3085 = vpack.c.b16 %v2742, %v2735
  %v3086 = vpack.c.b16 %v2750, %v2743
  %v3087 = vpack.c.b16 %v2751, %v2744
  %v3088 = vpack.c.b16 %v2752, %v2745
  %v3089 = vpack.c.b16 %v2753, %v2746
  %v3090 = vpack.c.b16 %v2754, %v2747
  %v3091 = vpack.c.b16 %v2755, %v2748
  %v3092 = vpack.c.b16 %v2756, %v2749
  %v3093 = vpack.c.b16 %v2764, %v2757
  %v3094 = vpack.c.b16 %v2765, %v2758
  %v3095 = vpack.c.b16 %v2766, %v2759
  %v3096 = vpack.c.b16 %v2767, %v2760
  %v3097 = vpack.c.b16 %v2768, %v2761
  %v3098 = vpack.c.b16 %v2769, %v2762
  %v3099 = vpack.c.b16 %v2770, %v2763
  %v3100 = vpack.c.b16 %v2778, %v2771
  %v3101 = vpack.c.b16 %v2779, %v2772
  %v3102 = vpack.c.b16 %v2780, %v2773
  %v3103 = vpack.c.b16 %v2781, %v2774
  %v3104 = vpack.c.b16 %v2782, %v2775
  %v3105 = vpack.c.b16 %v2783, %v2776
  %v3106 = vpack.c.b16 %v2784, %v2777
  %v3107 = vpack.c.b16 %v2792, %v2785
  %v3108 = vpack.c.b16 %v2793, %v2786
  %v3109 = vpack.c.b16 %v2794, %v2787
  %v3110 = vpack.c.b16 %v2795, %v2788
  %v3111 = vpack.c.b16 %v2796, %v2789
  %v3112 = vpack.c.b16 %v2797, %v2790
  %v3113 = vpack.c.b16 %v2798, %v2791
  %v3114 = vpack.c.b16 %v2806, %v2799
  %v3115 = vpack.c.b16 %v2807, %v2800
  %v3116 = vpack.c.b16 %v2808, %v2801
  %v3117 = vpack.c.b16 %v2809, %v2802
  %v3118 = vpack.c.b16 %v2810, %v2803
  %v3119 = vpack.c.b16 %v2811, %v2804
  %v3120 = vpack.c.b16 %v2812, %v2805
  %v3121 = vpack.c.b16 %v2820, %v2813
  %v3122 = vpack.c.b16 %v2821, %v2814
  %v3123 = vpack.c.b16 %v2822, %v2815
  %v3124 = vpack.c.b16 %v2823, %v2816
  %v3125 = vpack.c.b16 %v2824, %v2817
  %v3126 = vpack.c.b16 %v2825, %v2818
  %v3127 = vpack.c.b16 %v2826, %v2819
  %v3128 = vpack.c.b16 %v2834, %v2827
  %v3129 = vpack.c.b16 %v2835, %v2828
  %v3130 = vpack.c.b16 %v2836, %v2829
  %v3131 = vpack.c.b16 %v2837, %v2830
  %v3132 = vpack.c.b16 %v2838, %v2831
  %v3133 = vpack.c.b16 %v2839, %v2832
  %v3134 = vpack.c.b16 %v2840, %v2833
  %v3135 = vpack.c.b16 %v2848, %v2841
  %v3136 = vpack.c.b16 %v2849, %v2842
  %v3137 = vpack.c.b16 %v2850, %v2843
  %v3138 = vpack.c.b16 %v2851, %v2844
  %v3139 = vpack.c.b16 %v2852, %v2845
  %v3140 = vpack.c.b16 %v2853, %v2846
  %v3141 = vpack.c.b16 %v2854, %v2847
  %v3142 = vpack.c.b16 %v2862, %v2855
  %v3143 = vpack.c.b16 %v2863, %v2856
  %v3144 = vpack.c.b16 %v2864, %v2857
  %v3145 = vpack.c.b16 %v2865, %v2858
  %v3146 = vpack.c.b16 %v2866, %v2859
  %v3147 = vpack.c.b16 %v2867, %v2860
  %v3148 = vpack.c.b16 %v2868, %v2861
  %v3149 = vpack.c.b16 %v2876, %v2869
  %v3150 = vpack.c.b16 %v2877, %v2870
  %v3151 = vpack.c.b16 %v2878, %v2871
  %v3152 = vpack.c.b16 %v2879, %v2872
  %v3153 = vpack.c.b16 %v2880, %v2873
  %v3154 = vpack.c.b16 %v2881, %v2874
  %v3155 = vpack.c.b16 %v2882, %v2875
  %v3156 = vpack.c.b16 %v2890, %v2883
  %v3157 = vpack.c.b16 %v2891, %v2884
  %v3158 = vpack.c.b16 %v2892, %v2885
  %v3159 = vpack.c.b16 %v2893, %v2886
  %v3160 = vpack.c.b16 %v2894, %v2887
  %v3161 = vpack.c.b16 %v2895, %v2888
  %v3162 = vpack.c.b16 %v2896, %v2889
  %v3163 = vpack.c.b16 %v2904, %v2897
  %v3164 = vpack.c.b16 %v2905, %v2898
  %v3165 = vpack.c.b16 %v2906, %v2899
  %v3166 = vpack.c.b16 %v2907, %v2900
  %v3167 = vpack.c.b16 %v2908, %v2901
  %v3168 = vpack.c.b16 %v2909, %v2902
  %v3169 = vpack.c.b16 %v2910, %v2903
  %v3170 = vpack.c.b16 %v2918, %v2911
  %v3171 = vpack.c.b16 %v2919, %v2912
  %v3172 = vpack.c.b16 %v2920, %v2913
  %v3173 = vpack.c.b16 %v2921, %v2914
  %v3174 = vpack.c.b16 %v2922, %v2915
  %v3175 = vpack.c.b16 %v2923, %v2916
  %v3176 = vpack.c.b16 %v2924, %v2917
  %v3177 = vpack.c.b16 %v2932, %v2925
  %v3178 = vpack.c.b16 %v2933, %v2926
  %v3179 = vpack.c.b16 %v2934, %v2927
  %v3180 = vpack.c.b16 %v2935, %v2928
  %v3181 = vpack.c.b16 %v2936, %v2929
  %v3182 = vpack.c.b16 %v2937, %v2930
  %v3183 = vpack.c.b16 %v2938, %v2931
  %v3184 = vpack.c.b16 %v2946, %v2939
  %v3185 = vpack.c.b16 %v2947, %v2940
  %v3186 = vpack.c.b16 %v2948, %v2941
  %v3187 = vpack.c.b16 %v2949, %v2942
  %v3188 = vpack.c.b16 %v2950, %v2943
  %v3189 = vpack.c.b16 %v2951, %v2944
  %v3190 = vpack.c.b16 %v2952, %v2945
  %v3191 = vpack.c.b16 %v2960, %v2953
  %v3192 = vpack.c.b16 %v2961, %v2954
  %v3193 = vpack.c.b16 %v2962, %v2955
  %v3194 = vpack.c.b16 %v2963, %v2956
  %v3195 = vpack.c.b16 %v2964, %v2957
  %v3196 = vpack.c.b16 %v2965, %v2958
  %v3197 = vpack.c.b16 %v2966, %v2959
  %v3198 = vpack.c.b16 %v2974, %v2967
  %v3199 = vpack.c.b16 %v2975, %v2968
  %v3200 = vpack.c.b16 %v2976, %v2969
  %v3201 = vpack.c.b16 %v2977, %v2970
  %v3202 = vpack.c.b16 %v2978, %v2971
  %v3203 = vpack.c.b16 %v2979, %v2972
  %v3204 = vpack.c.b16 %v2980, %v2973
  %v3205 = vpack.c.b16 %v2988, %v2981
  %v3206 = vpack.c.b16 %v2989, %v2982
  %v3207 = vpack.c.b16 %v2990, %v2983
  %v3208 = vpack.c.b16 %v2991, %v2984
  %v3209 = vpack.c.b16 %v2992, %v2985
  %v3210 = vpack.c.b16 %v2993, %v2986
  %v3211 = vpack.c.b16 %v2994, %v2987
  %v3212 = vpack.c.b16 %v3002, %v2995
  %v3213 = vpack.c.b16 %v3003, %v2996
  %v3214 = vpack.c.b16 %v3004, %v2997
  %v3215 = vpack.c.b16 %v3005, %v2998
  %v3216 = vpack.c.b16 %v3006, %v2999
  %v3217 = vpack.c.b16 %v3007, %v3000
  %v3218 = vpack.c.b16 %v3008, %v3001
  %v3219 = vpack.c.b16 %v3016, %v3009
  %v3220 = vpack.c.b16 %v3017, %v3010
  %v3221 = vpack.c.b16 %v3018, %v3011
  %v3222 = vpack.c.b16 %v3019, %v3012
  %v3223 = vpack.c.b16 %v3020, %v3013
  %v3224 = vpack.c.b16 %v3021, %v3014
  %v3225 = vpack.c.b16 %v3022, %v3015
  %v3226 = vpack.c.b16 %v3030, %v3023
  %v3227 = vpack.c.b16 %v3031, %v3024
  %v3228 = vpack.c.b16 %v3032, %v3025
  %v3229 = vpack.c.b16 %v3033, %v3026
  %v3230 = vpack.c.b16 %v3034, %v3027
  %v3231 = vpack.c.b16 %v3035, %v3028
  %v3232 = vpack.c.b16 %v3036, %v3029
  %v3233 = vpack.c.b16 %v3044, %v3037
  %v3234 = vpack.c.b16 %v3045, %v3038
  %v3235 = vpack.c.b16 %v3046, %v3039
  %v3236 = vpack.c.b16 %v3047, %v3040
  %v3237 = vpack.c.b16 %v3048, %v3041
  %v3238 = vpack.c.b16 %v3049, %v3042
  %v3239 = vpack.c.b16 %v3050, %v3043
  %v3240 = vpack.c.b16 %v3058, %v3051
  %v3241 = vpack.c.b16 %v3059, %v3052
  %v3242 = vpack.c.b16 %v3060, %v3053
  %v3243 = vpack.c.b16 %v3061, %v3054
  %v3244 = vpack.c.b16 %v3062, %v3055
  %v3245 = vpack.c.b16 %v3063, %v3056
  %v3246 = vpack.c.b16 %v3064, %v3057
  %v3247 = vpack.c.b16 %v3072, %v3065
  %v3248 = vpack.c.b16 %v3073, %v3066
  %v3249 = vpack.c.b16 %v3074, %v3067
  %v3250 = vpack.c.b16 %v3075, %v3068
  %v3251 = vpack.c.b16 %v3076, %v3069
  %v3252 = vpack.c.b16 %v3077, %v3070
  %v3253 = vpack.c.b16 %v3078, %v3071
  %v3430 = vsel %vm1474, %v2312, 0
  %3432 = vmatpush.bf16.msra.mxu0 %v3128
  %3433 = vmatpush.bf16.msra.mxu0 %v3121
  %3434 = vmatpush.bf16.msra.mxu0 %v3114
  %3435 = vmatpush.bf16.msra.mxu0 %v3107
  %3436 = vmatpush.bf16.msra.mxu0 %v3100
  %3437 = vmatpush.bf16.msra.mxu0 %v3093
  %3438 = vmatpush.bf16.msra.mxu0 %v3086
  %3439 = vmatpush.bf16.msra.mxu0 %v3079
  %3440 = vmatmul.bf16.gmra.mxu0 %v2309
  %v3441 = vpop.f32.mrf.mxu0
  %v3442 = vadd.f32 %v2515, %v3441
  %v3443 = vpop.f32.mrf.mxu0
  %v3444 = vadd.f32 %v2515, %v3443
  %3445 = vdwg.mxu0
  %3446 = vmatpush.bf16.msra.mxu0 %v3184
  %3447 = vmatpush.bf16.msra.mxu0 %v3177
  %3448 = vmatpush.bf16.msra.mxu0 %v3170
  %3449 = vmatpush.bf16.msra.mxu0 %v3163
  %3450 = vmatpush.bf16.msra.mxu0 %v3156
  %3451 = vmatpush.bf16.msra.mxu0 %v3149
  %3452 = vmatpush.bf16.msra.mxu0 %v3142
  %3453 = vmatpush.bf16.msra.mxu0 %v3135
  %3454 = vmatmul.bf16.gmra.mxu0 %v2310
  %v3455 = vpop.f32.mrf.mxu0
  %v3456 = vadd.f32 %v3442, %v3455
  %v3457 = vpop.f32.mrf.mxu0
  %v3458 = vadd.f32 %v3444, %v3457
  %3459 = vdwg.mxu0
  %3460 = vmatpush.bf16.msra.mxu0 %v3240
  %3461 = vmatpush.bf16.msra.mxu0 %v3233
  %3462 = vmatpush.bf16.msra.mxu0 %v3226
  %3463 = vmatpush.bf16.msra.mxu0 %v3219
  %3464 = vmatpush.bf16.msra.mxu0 %v3212
  %3465 = vmatpush.bf16.msra.mxu0 %v3205
  %3466 = vmatpush.bf16.msra.mxu0 %v3198
  %3467 = vmatpush.bf16.msra.mxu0 %v3191
  %3468 = vmatmul.bf16.gmra.mxu0 %v2311
  %v3469 = vpop.f32.mrf.mxu0
  %v3470 = vadd.f32 %v3456, %v3469
  %v3471 = vpop.f32.mrf.mxu0
  %v3472 = vadd.f32 %v3458, %v3471
  %3473 = vdwg.mxu0
  %3474 = vmatpush.bf16.msra.mxu0 0
  %3475 = vmatpush.bf16.msra.mxu0 0
  %3476 = vmatpush.bf16.msra.mxu0 0
  %3477 = vmatpush.bf16.msra.mxu0 0
  %3478 = vmatpush.bf16.msra.mxu0 0
  %3479 = vmatpush.bf16.msra.mxu0 0
  %3480 = vmatpush.bf16.msra.mxu0 0
  %3481 = vmatpush.bf16.msra.mxu0 %v3247
  %3482 = vmatmul.bf16.gmra.mxu0 %v3430
  %v3483 = vpop.f32.mrf.mxu0
  %v3484 = vadd.f32 %v3470, %v3483
  %v3485 = vpop.f32.mrf.mxu0
  %v3486 = vadd.f32 %v3472, %v3485
  %3487 = vdwg.mxu0
  %3488 = vmatpush.bf16.msra.mxu0 %v3129
  %3489 = vmatpush.bf16.msra.mxu0 %v3122
  %3490 = vmatpush.bf16.msra.mxu0 %v3115
  %3491 = vmatpush.bf16.msra.mxu0 %v3108
  %3492 = vmatpush.bf16.msra.mxu0 %v3101
  %3493 = vmatpush.bf16.msra.mxu0 %v3094
  %3494 = vmatpush.bf16.msra.mxu0 %v3087
  %3495 = vmatpush.bf16.msra.mxu0 %v3080
  %3496 = vmatmul.bf16.gmra.mxu0 %v2309
  %v3497 = vpop.f32.mrf.mxu0
  %v3498 = vadd.f32 %v2516, %v3497
  %v3499 = vpop.f32.mrf.mxu0
  %v3500 = vadd.f32 %v2516, %v3499
  %3501 = vdwg.mxu0
  %3502 = vmatpush.bf16.msra.mxu0 %v3185
  %3503 = vmatpush.bf16.msra.mxu0 %v3178
  %3504 = vmatpush.bf16.msra.mxu0 %v3171
  %3505 = vmatpush.bf16.msra.mxu0 %v3164
  %3506 = vmatpush.bf16.msra.mxu0 %v3157
  %3507 = vmatpush.bf16.msra.mxu0 %v3150
  %3508 = vmatpush.bf16.msra.mxu0 %v3143
  %3509 = vmatpush.bf16.msra.mxu0 %v3136
  %3510 = vmatmul.bf16.gmra.mxu0 %v2310
  %v3511 = vpop.f32.mrf.mxu0
  %v3512 = vadd.f32 %v3498, %v3511
  %v3513 = vpop.f32.mrf.mxu0
  %v3514 = vadd.f32 %v3500, %v3513
  %3515 = vdwg.mxu0
  %3516 = vmatpush.bf16.msra.mxu0 %v3241
  %3517 = vmatpush.bf16.msra.mxu0 %v3234
  %3518 = vmatpush.bf16.msra.mxu0 %v3227
  %3519 = vmatpush.bf16.msra.mxu0 %v3220
  %3520 = vmatpush.bf16.msra.mxu0 %v3213
  %3521 = vmatpush.bf16.msra.mxu0 %v3206
  %3522 = vmatpush.bf16.msra.mxu0 %v3199
  %3523 = vmatpush.bf16.msra.mxu0 %v3192
  %3524 = vmatmul.bf16.gmra.mxu0 %v2311
  %v3525 = vpop.f32.mrf.mxu0
  %v3526 = vadd.f32 %v3512, %v3525
  %v3527 = vpop.f32.mrf.mxu0
  %v3528 = vadd.f32 %v3514, %v3527
  %3529 = vdwg.mxu0
  %3530 = vmatpush.bf16.msra.mxu0 0
  %3531 = vmatpush.bf16.msra.mxu0 0
  %3532 = vmatpush.bf16.msra.mxu0 0
  %3533 = vmatpush.bf16.msra.mxu0 0
  %3534 = vmatpush.bf16.msra.mxu0 0
  %3535 = vmatpush.bf16.msra.mxu0 0
  %3536 = vmatpush.bf16.msra.mxu0 0
  %3537 = vmatpush.bf16.msra.mxu0 %v3248
  %3538 = vmatmul.bf16.gmra.mxu0 %v3430
  %v3539 = vpop.f32.mrf.mxu0
  %v3540 = vadd.f32 %v3526, %v3539
  %v3541 = vpop.f32.mrf.mxu0
  %v3542 = vadd.f32 %v3528, %v3541
  %3543 = vdwg.mxu0
  %3544 = vmatpush.bf16.msra.mxu0 %v3130
  %3545 = vmatpush.bf16.msra.mxu0 %v3123
  %3546 = vmatpush.bf16.msra.mxu0 %v3116
  %3547 = vmatpush.bf16.msra.mxu0 %v3109
  %3548 = vmatpush.bf16.msra.mxu0 %v3102
  %3549 = vmatpush.bf16.msra.mxu0 %v3095
  %3550 = vmatpush.bf16.msra.mxu0 %v3088
  %3551 = vmatpush.bf16.msra.mxu0 %v3081
  %3552 = vmatmul.bf16.gmra.mxu0 %v2309
  %v3553 = vpop.f32.mrf.mxu0
  %v3554 = vadd.f32 %v2517, %v3553
  %v3555 = vpop.f32.mrf.mxu0
  %v3556 = vadd.f32 %v2517, %v3555
  %3557 = vdwg.mxu0
  %3558 = vmatpush.bf16.msra.mxu0 %v3186
  %3559 = vmatpush.bf16.msra.mxu0 %v3179
  %3560 = vmatpush.bf16.msra.mxu0 %v3172
  %3561 = vmatpush.bf16.msra.mxu0 %v3165
  %3562 = vmatpush.bf16.msra.mxu0 %v3158
  %3563 = vmatpush.bf16.msra.mxu0 %v3151
  %3564 = vmatpush.bf16.msra.mxu0 %v3144
  %3565 = vmatpush.bf16.msra.mxu0 %v3137
  %3566 = vmatmul.bf16.gmra.mxu0 %v2310
  %v3567 = vpop.f32.mrf.mxu0
  %v3568 = vadd.f32 %v3554, %v3567
  %v3569 = vpop.f32.mrf.mxu0
  %v3570 = vadd.f32 %v3556, %v3569
  %3571 = vdwg.mxu0
  %3572 = vmatpush.bf16.msra.mxu0 %v3242
  %3573 = vmatpush.bf16.msra.mxu0 %v3235
  %3574 = vmatpush.bf16.msra.mxu0 %v3228
  %3575 = vmatpush.bf16.msra.mxu0 %v3221
  %3576 = vmatpush.bf16.msra.mxu0 %v3214
  %3577 = vmatpush.bf16.msra.mxu0 %v3207
  %3578 = vmatpush.bf16.msra.mxu0 %v3200
  %3579 = vmatpush.bf16.msra.mxu0 %v3193
  %3580 = vmatmul.bf16.gmra.mxu0 %v2311
  %v3581 = vpop.f32.mrf.mxu0
  %v3582 = vadd.f32 %v3568, %v3581
  %v3583 = vpop.f32.mrf.mxu0
  %v3584 = vadd.f32 %v3570, %v3583
  %3585 = vdwg.mxu0
  %3586 = vmatpush.bf16.msra.mxu0 0
  %3587 = vmatpush.bf16.msra.mxu0 0
  %3588 = vmatpush.bf16.msra.mxu0 0
  %3589 = vmatpush.bf16.msra.mxu0 0
  %3590 = vmatpush.bf16.msra.mxu0 0
  %3591 = vmatpush.bf16.msra.mxu0 0
  %3592 = vmatpush.bf16.msra.mxu0 0
  %3593 = vmatpush.bf16.msra.mxu0 %v3249
  %3594 = vmatmul.bf16.gmra.mxu0 %v3430
  %v3595 = vpop.f32.mrf.mxu0
  %v3596 = vadd.f32 %v3582, %v3595
  %v3597 = vpop.f32.mrf.mxu0
  %v3598 = vadd.f32 %v3584, %v3597
  %3599 = vdwg.mxu0
  %3600 = vmatpush.bf16.msra.mxu0 %v3131
  %3601 = vmatpush.bf16.msra.mxu0 %v3124
  %3602 = vmatpush.bf16.msra.mxu0 %v3117
  %3603 = vmatpush.bf16.msra.mxu0 %v3110
  %3604 = vmatpush.bf16.msra.mxu0 %v3103
  %3605 = vmatpush.bf16.msra.mxu0 %v3096
  %3606 = vmatpush.bf16.msra.mxu0 %v3089
  %3607 = vmatpush.bf16.msra.mxu0 %v3082
  %3608 = vmatmul.bf16.gmra.mxu0 %v2309
  %v3609 = vpop.f32.mrf.mxu0
  %v3610 = vadd.f32 %v2518, %v3609
  %v3611 = vpop.f32.mrf.mxu0
  %v3612 = vadd.f32 %v2518, %v3611
  %3613 = vdwg.mxu0
  %3614 = vmatpush.bf16.msra.mxu0 %v3187
  %3615 = vmatpush.bf16.msra.mxu0 %v3180
  %3616 = vmatpush.bf16.msra.mxu0 %v3173
  %3617 = vmatpush.bf16.msra.mxu0 %v3166
  %3618 = vmatpush.bf16.msra.mxu0 %v3159
  %3619 = vmatpush.bf16.msra.mxu0 %v3152
  %3620 = vmatpush.bf16.msra.mxu0 %v3145
  %3621 = vmatpush.bf16.msra.mxu0 %v3138
  %3622 = vmatmul.bf16.gmra.mxu0 %v2310
  %v3623 = vpop.f32.mrf.mxu0
  %v3624 = vadd.f32 %v3610, %v3623
  %v3625 = vpop.f32.mrf.mxu0
  %v3626 = vadd.f32 %v3612, %v3625
  %3627 = vdwg.mxu0
  %3628 = vmatpush.bf16.msra.mxu0 %v3243
  %3629 = vmatpush.bf16.msra.mxu0 %v3236
  %3630 = vmatpush.bf16.msra.mxu0 %v3229
  %3631 = vmatpush.bf16.msra.mxu0 %v3222
  %3632 = vmatpush.bf16.msra.mxu0 %v3215
  %3633 = vmatpush.bf16.msra.mxu0 %v3208
  %3634 = vmatpush.bf16.msra.mxu0 %v3201
  %3635 = vmatpush.bf16.msra.mxu0 %v3194
  %3636 = vmatmul.bf16.gmra.mxu0 %v2311
  %v3637 = vpop.f32.mrf.mxu0
  %v3638 = vadd.f32 %v3624, %v3637
  %v3639 = vpop.f32.mrf.mxu0
  %v3640 = vadd.f32 %v3626, %v3639
  %3641 = vdwg.mxu0
  %3642 = vmatpush.bf16.msra.mxu0 0
  %3643 = vmatpush.bf16.msra.mxu0 0
  %3644 = vmatpush.bf16.msra.mxu0 0
  %3645 = vmatpush.bf16.msra.mxu0 0
  %3646 = vmatpush.bf16.msra.mxu0 0
  %3647 = vmatpush.bf16.msra.mxu0 0
  %3648 = vmatpush.bf16.msra.mxu0 0
  %3649 = vmatpush.bf16.msra.mxu0 %v3250
  %3650 = vmatmul.bf16.gmra.mxu0 %v3430
  %v3651 = vpop.f32.mrf.mxu0
  %v3652 = vadd.f32 %v3638, %v3651
  %v3653 = vpop.f32.mrf.mxu0
  %v3654 = vadd.f32 %v3640, %v3653
  %3655 = vdwg.mxu0
  %3656 = vmatpush.bf16.msra.mxu0 %v3132
  %3657 = vmatpush.bf16.msra.mxu0 %v3125
  %3658 = vmatpush.bf16.msra.mxu0 %v3118
  %3659 = vmatpush.bf16.msra.mxu0 %v3111
  %3660 = vmatpush.bf16.msra.mxu0 %v3104
  %3661 = vmatpush.bf16.msra.mxu0 %v3097
  %3662 = vmatpush.bf16.msra.mxu0 %v3090
  %3663 = vmatpush.bf16.msra.mxu0 %v3083
  %3664 = vmatmul.bf16.gmra.mxu0 %v2309
  %v3665 = vpop.f32.mrf.mxu0
  %v3666 = vadd.f32 %v2519, %v3665
  %v3667 = vpop.f32.mrf.mxu0
  %v3668 = vadd.f32 %v2519, %v3667
  %3669 = vdwg.mxu0
  %3670 = vmatpush.bf16.msra.mxu0 %v3188
  %3671 = vmatpush.bf16.msra.mxu0 %v3181
  %3672 = vmatpush.bf16.msra.mxu0 %v3174
  %3673 = vmatpush.bf16.msra.mxu0 %v3167
  %3674 = vmatpush.bf16.msra.mxu0 %v3160
  %3675 = vmatpush.bf16.msra.mxu0 %v3153
  %3676 = vmatpush.bf16.msra.mxu0 %v3146
  %3677 = vmatpush.bf16.msra.mxu0 %v3139
  %3678 = vmatmul.bf16.gmra.mxu0 %v2310
  %v3679 = vpop.f32.mrf.mxu0
  %v3680 = vadd.f32 %v3666, %v3679
  %v3681 = vpop.f32.mrf.mxu0
  %v3682 = vadd.f32 %v3668, %v3681
  %3683 = vdwg.mxu0
  %3684 = vmatpush.bf16.msra.mxu0 %v3244
  %3685 = vmatpush.bf16.msra.mxu0 %v3237
  %3686 = vmatpush.bf16.msra.mxu0 %v3230
  %3687 = vmatpush.bf16.msra.mxu0 %v3223
  %3688 = vmatpush.bf16.msra.mxu0 %v3216
  %3689 = vmatpush.bf16.msra.mxu0 %v3209
  %3690 = vmatpush.bf16.msra.mxu0 %v3202
  %3691 = vmatpush.bf16.msra.mxu0 %v3195
  %3692 = vmatmul.bf16.gmra.mxu0 %v2311
  %v3693 = vpop.f32.mrf.mxu0
  %v3694 = vadd.f32 %v3680, %v3693
  %v3695 = vpop.f32.mrf.mxu0
  %v3696 = vadd.f32 %v3682, %v3695
  %3697 = vdwg.mxu0
  %3698 = vmatpush.bf16.msra.mxu0 0
  %3699 = vmatpush.bf16.msra.mxu0 0
  %3700 = vmatpush.bf16.msra.mxu0 0
  %3701 = vmatpush.bf16.msra.mxu0 0
  %3702 = vmatpush.bf16.msra.mxu0 0
  %3703 = vmatpush.bf16.msra.mxu0 0
  %3704 = vmatpush.bf16.msra.mxu0 0
  %3705 = vmatpush.bf16.msra.mxu0 %v3251
  %3706 = vmatmul.bf16.gmra.mxu0 %v3430
  %v3707 = vpop.f32.mrf.mxu0
  %v3708 = vadd.f32 %v3694, %v3707
  %v3709 = vpop.f32.mrf.mxu0
  %v3710 = vadd.f32 %v3696, %v3709
  %3711 = vdwg.mxu0
  %3712 = vmatpush.bf16.msra.mxu0 %v3133
  %3713 = vmatpush.bf16.msra.mxu0 %v3126
  %3714 = vmatpush.bf16.msra.mxu0 %v3119
  %3715 = vmatpush.bf16.msra.mxu0 %v3112
  %3716 = vmatpush.bf16.msra.mxu0 %v3105
  %3717 = vmatpush.bf16.msra.mxu0 %v3098
  %3718 = vmatpush.bf16.msra.mxu0 %v3091
  %3719 = vmatpush.bf16.msra.mxu0 %v3084
  %3720 = vmatmul.bf16.gmra.mxu0 %v2309
  %v3721 = vpop.f32.mrf.mxu0
  %v3722 = vadd.f32 %v2520, %v3721
  %v3723 = vpop.f32.mrf.mxu0
  %v3724 = vadd.f32 %v2520, %v3723
  %3725 = vdwg.mxu0
  %3726 = vmatpush.bf16.msra.mxu0 %v3189
  %3727 = vmatpush.bf16.msra.mxu0 %v3182
  %3728 = vmatpush.bf16.msra.mxu0 %v3175
  %3729 = vmatpush.bf16.msra.mxu0 %v3168
  %3730 = vmatpush.bf16.msra.mxu0 %v3161
  %3731 = vmatpush.bf16.msra.mxu0 %v3154
  %3732 = vmatpush.bf16.msra.mxu0 %v3147
  %3733 = vmatpush.bf16.msra.mxu0 %v3140
  %3734 = vmatmul.bf16.gmra.mxu0 %v2310
  %v3735 = vpop.f32.mrf.mxu0
  %v3736 = vadd.f32 %v3722, %v3735
  %v3737 = vpop.f32.mrf.mxu0
  %v3738 = vadd.f32 %v3724, %v3737
  %3739 = vdwg.mxu0
  %3740 = vmatpush.bf16.msra.mxu0 %v3245
  %3741 = vmatpush.bf16.msra.mxu0 %v3238
  %3742 = vmatpush.bf16.msra.mxu0 %v3231
  %3743 = vmatpush.bf16.msra.mxu0 %v3224
  %3744 = vmatpush.bf16.msra.mxu0 %v3217
  %3745 = vmatpush.bf16.msra.mxu0 %v3210
  %3746 = vmatpush.bf16.msra.mxu0 %v3203
  %3747 = vmatpush.bf16.msra.mxu0 %v3196
  %3748 = vmatmul.bf16.gmra.mxu0 %v2311
  %v3749 = vpop.f32.mrf.mxu0
  %v3750 = vadd.f32 %v3736, %v3749
  %v3751 = vpop.f32.mrf.mxu0
  %v3752 = vadd.f32 %v3738, %v3751
  %3753 = vdwg.mxu0
  %3754 = vmatpush.bf16.msra.mxu0 0
  %3755 = vmatpush.bf16.msra.mxu0 0
  %3756 = vmatpush.bf16.msra.mxu0 0
  %3757 = vmatpush.bf16.msra.mxu0 0
  %3758 = vmatpush.bf16.msra.mxu0 0
  %3759 = vmatpush.bf16.msra.mxu0 0
  %3760 = vmatpush.bf16.msra.mxu0 0
  %3761 = vmatpush.bf16.msra.mxu0 %v3252
  %3762 = vmatmul.bf16.gmra.mxu0 %v3430
  %v3763 = vpop.f32.mrf.mxu0
  %v3764 = vadd.f32 %v3750, %v3763
  %v3765 = vpop.f32.mrf.mxu0
  %v3766 = vadd.f32 %v3752, %v3765
  %3767 = vdwg.mxu0
  %3768 = vmatpush.bf16.msra.mxu0 %v3134
  %3769 = vmatpush.bf16.msra.mxu0 %v3127
  %3770 = vmatpush.bf16.msra.mxu0 %v3120
  %3771 = vmatpush.bf16.msra.mxu0 %v3113
  %3772 = vmatpush.bf16.msra.mxu0 %v3106
  %3773 = vmatpush.bf16.msra.mxu0 %v3099
  %3774 = vmatpush.bf16.msra.mxu0 %v3092
  %3775 = vmatpush.bf16.msra.mxu0 %v3085
  %3776 = vmatmul.bf16.gmra.mxu0 %v2309
  %v3777 = vpop.f32.mrf.mxu0
  %v3778 = vadd.f32 %v2521, %v3777
  %v3779 = vpop.f32.mrf.mxu0
  %v3780 = vadd.f32 %v2521, %v3779
  %3781 = vdwg.mxu0
  %3782 = vmatpush.bf16.msra.mxu0 %v3190
  %3783 = vmatpush.bf16.msra.mxu0 %v3183
  %3784 = vmatpush.bf16.msra.mxu0 %v3176
  %3785 = vmatpush.bf16.msra.mxu0 %v3169
  %3786 = vmatpush.bf16.msra.mxu0 %v3162
  %3787 = vmatpush.bf16.msra.mxu0 %v3155
  %3788 = vmatpush.bf16.msra.mxu0 %v3148
  %3789 = vmatpush.bf16.msra.mxu0 %v3141
  %3790 = vmatmul.bf16.gmra.mxu0 %v2310
  %v3791 = vpop.f32.mrf.mxu0
  %v3792 = vadd.f32 %v3778, %v3791
  %v3793 = vpop.f32.mrf.mxu0
  %v3794 = vadd.f32 %v3780, %v3793
  %3795 = vdwg.mxu0
  %3796 = vmatpush.bf16.msra.mxu0 %v3246
  %3797 = vmatpush.bf16.msra.mxu0 %v3239
  %3798 = vmatpush.bf16.msra.mxu0 %v3232
  %3799 = vmatpush.bf16.msra.mxu0 %v3225
  %3800 = vmatpush.bf16.msra.mxu0 %v3218
  %3801 = vmatpush.bf16.msra.mxu0 %v3211
  %3802 = vmatpush.bf16.msra.mxu0 %v3204
  %3803 = vmatpush.bf16.msra.mxu0 %v3197
  %3804 = vmatmul.bf16.gmra.mxu0 %v2311
  %v3805 = vpop.f32.mrf.mxu0
  %v3806 = vadd.f32 %v3792, %v3805
  %v3807 = vpop.f32.mrf.mxu0
  %v3808 = vadd.f32 %v3794, %v3807
  %3809 = vdwg.mxu0
  %3810 = vmatpush.bf16.msra.mxu0 0
  %3811 = vmatpush.bf16.msra.mxu0 0
  %3812 = vmatpush.bf16.msra.mxu0 0
  %3813 = vmatpush.bf16.msra.mxu0 0
  %3814 = vmatpush.bf16.msra.mxu0 0
  %3815 = vmatpush.bf16.msra.mxu0 0
  %3816 = vmatpush.bf16.msra.mxu0 0
  %3817 = vmatpush.bf16.msra.mxu0 %v3253
  %3818 = vmatmul.bf16.gmra.mxu0 %v3430
  %v3819 = vpop.f32.mrf.mxu0
  %v3820 = vadd.f32 %v3806, %v3819
  %v3821 = vpop.f32.mrf.mxu0
  %v3822 = vadd.f32 %v3808, %v3821
  %3823 = vdwg.mxu0
  %v3824 = vsub.f32 0.0, %v3484
  %v3825 = vsub.f32 0.0, %v3540
  %v3826 = vsub.f32 0.0, %v3596
  %v3827 = vsub.f32 0.0, %v3652
  %v3828 = vsub.f32 0.0, %v3708
  %v3829 = vsub.f32 0.0, %v3764
  %v3830 = vsub.f32 0.0, %v3820
  %v3831 = vsub.f32 0.0, %v3486
  %v3832 = vsub.f32 0.0, %v3542
  %v3833 = vsub.f32 0.0, %v3598
  %v3834 = vsub.f32 0.0, %v3654
  %v3835 = vsub.f32 0.0, %v3710
  %v3836 = vsub.f32 0.0, %v3766
  %v3837 = vsub.f32 0.0, %v3822
  %v3838 = vmul.f32 %v3824, 1.442695
  %v3839 = vpow.pop %v3838
  %v3840 = vmul.f32 %v3825, 1.442695
  %v3841 = vpow.pop %v3840
  %v3842 = vmul.f32 %v3826, 1.442695
  %v3843 = vpow.pop %v3842
  %v3844 = vmul.f32 %v3827, 1.442695
  %v3845 = vpow.pop %v3844
  %v3846 = vmul.f32 %v3828, 1.442695
  %v3847 = vpow.pop %v3846
  %v3848 = vmul.f32 %v3829, 1.442695
  %v3849 = vpow.pop %v3848
  %v3850 = vmul.f32 %v3830, 1.442695
  %v3851 = vpow.pop %v3850
  %v3852 = vmul.f32 %v3831, 1.442695
  %v3853 = vpow.pop %v3852
  %v3854 = vmul.f32 %v3832, 1.442695
  %v3855 = vpow.pop %v3854
  %v3856 = vmul.f32 %v3833, 1.442695
  %v3857 = vpow.pop %v3856
  %v3858 = vmul.f32 %v3834, 1.442695
  %v3859 = vpow.pop %v3858
  %v3860 = vmul.f32 %v3835, 1.442695
  %v3861 = vpow.pop %v3860
  %v3862 = vmul.f32 %v3836, 1.442695
  %v3863 = vpow.pop %v3862
  %v3864 = vmul.f32 %v3837, 1.442695
  %v3865 = vpow.pop %v3864
  %v3866 = vadd.f32 %v3839, 1.0
  %v3867 = vadd.f32 %v3841, 1.0
  %v3868 = vadd.f32 %v3843, 1.0
  %v3869 = vadd.f32 %v3845, 1.0
  %v3870 = vadd.f32 %v3847, 1.0
  %v3871 = vadd.f32 %v3849, 1.0
  %v3872 = vadd.f32 %v3851, 1.0
  %v3873 = vadd.f32 %v3853, 1.0
  %v3874 = vadd.f32 %v3855, 1.0
  %v3875 = vadd.f32 %v3857, 1.0
  %v3876 = vadd.f32 %v3859, 1.0
  %v3877 = vadd.f32 %v3861, 1.0
  %v3878 = vadd.f32 %v3863, 1.0
  %v3879 = vadd.f32 %v3865, 1.0
  %v3880 = vrcp.pop %v3866
  %v3881 = vrcp.pop %v3867
  %v3882 = vrcp.pop %v3868
  %v3883 = vrcp.pop %v3869
  %v3884 = vrcp.pop %v3870
  %v3885 = vrcp.pop %v3871
  %v3886 = vrcp.pop %v3872
  %v3887 = vrcp.pop %v3873
  %v3888 = vrcp.pop %v3874
  %v3889 = vrcp.pop %v3875
  %v3890 = vrcp.pop %v3876
  %v3891 = vrcp.pop %v3877
  %v3892 = vrcp.pop %v3878
  %v3893 = vrcp.pop %v3879
  %v3894 = vpack.c.bf16 %v3881, %v3880
  %v3895 = vpack.c.bf16 %v3883, %v3882
  %v3896 = vpack.c.bf16 %v3885, %v3884
  %v3897 = vpack.c.bf16 %v3886, %v3886
  %v3898 = vpack.c.bf16 %v3888, %v3887
  %v3899 = vpack.c.bf16 %v3890, %v3889
  %v3900 = vpack.c.bf16 %v3892, %v3891
  %v3901 = vpack.c.bf16 %v3893, %v3893
  %3902 = vst [vmem:[%s13] sm:$0xff] %v3894
  %3903 = vst [vmem:[%s13 + $0x8] sm:$0xff] %v3895
  %3904 = vst [vmem:[%s13 + $0x10] sm:$0xff] %v3896
  %vm3905 = vcmask 125952
  %3906 = vst.msk [vmem:[%s13 + $0x18] sm:$0xf] %vm3905, %v3897
  %3907 = vst [vmem:[%s13 + $0x1c] sm:$0xff] %v3898
  %3908 = vst [vmem:[%s13 + $0x24] sm:$0xff] %v3899
  %3909 = vst [vmem:[%s13 + $0x2c] sm:$0xff] %v3900
  %3910 = vst.msk [vmem:[%s13 + $0x34] sm:$0xf] %vm3905, %v3901
  %3911 = vst [vmem:[%s14] sm:$0xff] %v2149
  %3912 = vst [vmem:[%s14 + $0x8] sm:$0xff] %v2151
  // Predicated region
  $region54: #{cvae_forward.1} parent=0 // pred_check
    _
  $region55: #{cvae_forward.1} parent=0 // pred_check_branch
    %3914 = sbr.rel (0) target = $region57
  $region56: #{cvae_forward.1} parent=0 // pred_region
    _
  $region57: #{cvae_forward.1} parent=0 // pred_fallthru
    _
  // Predicated region
  $region58: #{cvae_forward.1} parent=0 // pred_check
    _
  $region59: #{cvae_forward.1} parent=0 // pred_check_branch
    %3916 = sbr.rel (0) target = $region61
  $region60: #{cvae_forward.1} parent=0 // pred_region
    _
  $region61: #{cvae_forward.1} parent=0 // pred_fallthru
    _
  // Predicated region
  $region62: #{cvae_forward.1} parent=0 // pred_check
    _
  $region63: #{cvae_forward.1} parent=0 // pred_check_branch
    %3918 = sbr.rel (0) target = $region65
  $region64: #{cvae_forward.1} parent=0 // pred_region
    _
  $region65: #{cvae_forward.1} parent=0 // pred_fallthru
    _
  // Predicated region
  $region66: #{cvae_forward.1} parent=0 // pred_check
    _
  $region67: #{cvae_forward.1} parent=0 // pred_check_branch
    %3920 = sbr.rel (0) target = $region69
  $region68: #{cvae_forward.1} parent=0 // pred_region
    _
  $region69: #{cvae_forward.1} parent=0 // pred_fallthru
    _

</llo_original>
